<compile_context>
chip_gen: v7x
topology: tpu7x:2x2x1
jax: 0.10.0
libtpu: 0.0.40
codegen_flags: <defaults>
</compile_context>

<pallas_src>
import functools

import jax
import jax.numpy as jnp
import numpy as np
from jax import lax
from jax.experimental import pallas as pl
from jax.experimental.pallas import tpu as pltpu

NUM_NOTES = 12
NOTE_PAD = 16          # num_notes padded to 16 for the one-hot embedding matmul
EMBED_DIM = 16
HIDDEN = 32
NUM_LAYERS = 3
OUT_PAD = 128          # output projection lane-padded from 4*NUM_NOTES=48
MAX_BT = 256           # max batch rows per grid tile (fills MXU M on v6e/v7x)
MAX_ROWS = 1024        # cap on T*bt so per-tile VMEM stays small (v7x: 64 MiB)


# ----------------------------------------------------------------------------
# Fused Pallas kernel: embeddings + 3 BiLSTM layers + output proj, all in VMEM.
# ----------------------------------------------------------------------------
def _fused_kernel(idx_ref, tab0_ref, b0_ref,
                  ws1_ref, wr1_ref, b1_ref,
                  ws2_ref, wr2_ref, b2_ref,
                  whh0_ref, whh1_ref, whh2_ref,
                  woutf_ref, woutb_ref, bout_ref,
                  out_ref, h_buf, xw_buf, *, seq_len, bt, hidden):
    H = hidden
    G2 = 2 * H               # 64  : one gate group [fwd | bwd]
    GS = 6 * H               # 192 : sigmoid lanes (i, f, o groups)
    R = seq_len * bt         # rows per tile (row = step*bt + batch)

    # ---------- layer-0 x-gates: in-kernel embedding lookup -----------------
    # idx_ref[r, 0:4] = note ids at time s, idx_ref[r, 4:8] = at time T-1-s.
    # Build a (R, 128) one-hot and hit the stacked folded-embedding table with
    # ONE MXU matmul -> no xg0 HBM round trip, no XLA gather glue.
    lane = lax.broadcasted_iota(jnp.int32, (R, 8 * NOTE_PAD), 1)
    pos = (lane & (NOTE_PAD - 1)).astype(jnp.float32)            # lane % 16
    grp = lax.broadcasted_iota(jnp.int32, (8, 8 * NOTE_PAD), 1) >> 4
    row = lax.broadcasted_iota(jnp.int32, (8, 8 * NOTE_PAD), 0)
    repmat = (grp == row).astype(jnp.float32)                    # (8, 128)
    rep = jnp.dot(idx_ref[...], repmat,
                  preferred_element_type=jnp.float32)            # idx -> lanes
    onehot = (rep == pos).astype(jnp.float32)                    # (R, 128)
    xw_buf[...] = (jnp.dot(onehot, tab0_ref[...],
                           preferred_element_type=jnp.float32) + b0_ref[...])

    # ---------- fused bidirectional recurrence -------------------------------
    # Step-aligned layout: row block s carries fwd data of time s and bwd data
    # of time T-1-s.  Gate columns are gate-major [i|f|o|g] x [fwd|bwd]; i/f/o
    # columns pre-scaled by 0.5 so sigmoid == 0.5*(tanh+1) -> single tanh/step.
    def run_layer(whh_ref):
        w_hh = whh_ref[...]                                       # (2H, 8H)
        h_cat = jnp.zeros((bt, G2), jnp.float32)                  # [h_fwd|h_bwd]
        c_cat = jnp.zeros((bt, G2), jnp.float32)
        # TODO(synk): for long sequences switch to lax.fori_loop(unroll=2..4)
        #             instead of a full static unroll.
        for s in range(seq_len):
            xg = xw_buf[s * bt:(s + 1) * bt, :]                   # one 256-lane load
            gates = xg + jnp.dot(h_cat, w_hh,
                                 preferred_element_type=jnp.float32)
            t = jnp.tanh(gates)                                   # single EUP slab
            sfo = t[:, 0:GS] * 0.5 + 0.5                          # sigmoid(i,f,o)
            i_cat = sfo[:, 0:G2]
            f_cat = sfo[:, G2:2 * G2]
            o_cat = sfo[:, 2 * G2:3 * G2]
            g_cat = t[:, 3 * G2:4 * G2]
            c_cat = f_cat * c_cat + i_cat * g_cat
            h_cat = o_cat * jnp.tanh(c_cat)
            h_buf[s * bt:(s + 1) * bt, :] = h_cat                 # one 64-lane store

    run_layer(whh0_ref)

    # Layers 1..2: hoisted input projection.  h_buf is step-aligned, so the
    # projection splits into a "same-block" and a "reversed-block" matmul
    # (W_ih row halves routed into fwd/bwd gate columns), done once per layer
    # over all T*bt rows, off the serial critical path.
    for ws_ref, wr_ref, b_ref, whh_ref in (
            (ws1_ref, wr1_ref, b1_ref, whh1_ref),
            (ws2_ref, wr2_ref, b2_ref, whh2_ref)):
        hb = h_buf[...]
        same = jnp.dot(hb, ws_ref[...],
                       preferred_element_type=jnp.float32) + b_ref[...]
        rev = jnp.dot(hb, wr_ref[...], preferred_element_type=jnp.float32)
        for s in range(seq_len):
            sr = seq_len - 1 - s
            xw_buf[s * bt:(s + 1) * bt, :] = (
                same[s * bt:(s + 1) * bt, :] + rev[sr * bt:(sr + 1) * bt, :])
        run_layer(whh_ref)

    # ---------- output projection (lane-dense 128-wide stores) ---------------
    hb = h_buf[...]
    of = jnp.dot(hb[:, 0:H], woutf_ref[...],
                 preferred_element_type=jnp.float32) + bout_ref[...]
    ob = jnp.dot(hb[:, H:2 * H], woutb_ref[...],
                 preferred_element_type=jnp.float32)
    for s in range(seq_len):
        sr = seq_len - 1 - s
        out_ref[s * bt:(s + 1) * bt, :] = (
            of[s * bt:(s + 1) * bt, :] + ob[sr * bt:(sr + 1) * bt, :])


def _vmem_limit_bytes(rows):
    f32 = 4
    scratch = rows * (8 * HIDDEN + 2 * HIDDEN) * f32
    io = 2 * rows * (8 + OUT_PAD) * f32 * 2                   # double-buffered
    weights = 2 * f32 * ((8 * NOTE_PAD + 7 * 2 * HIDDEN + 3) * 8 * HIDDEN
                         + (2 * HIDDEN + 1) * OUT_PAD)
    spills = rows * (128 + 2 * 8 * HIDDEN + 2 * OUT_PAD + 2 * HIDDEN) * f32
    need = scratch + io + weights + spills + (4 << 20)
    return int(min(max(need, 16 << 20), 48 << 20))


def fused_net(idx2, kp, *, seq_len, bt, nt):
    R = seq_len * bt
    kernel = functools.partial(_fused_kernel, seq_len=seq_len, bt=bt,
                               hidden=HIDDEN)

    def full(shape):
        return pl.BlockSpec(shape, lambda i: (0,) * len(shape))

    in_specs = [
        pl.BlockSpec((None, R, 8), lambda i: (i, 0, 0)),          # idx (per tile)
        full((8 * NOTE_PAD, 8 * HIDDEN)),                         # tab0
        full((1, 8 * HIDDEN)),                                    # b0
        full((2 * HIDDEN, 8 * HIDDEN)),                           # w_same layer1
        full((2 * HIDDEN, 8 * HIDDEN)),                           # w_rev  layer1
        full((1, 8 * HIDDEN)),                                    # b1
        full((2 * HIDDEN, 8 * HIDDEN)),                           # w_same layer2
        full((2 * HIDDEN, 8 * HIDDEN)),                           # w_rev  layer2
        full((1, 8 * HIDDEN)),                                    # b2
        full((2 * HIDDEN, 8 * HIDDEN)),                           # whh0
        full((2 * HIDDEN, 8 * HIDDEN)),                           # whh1
        full((2 * HIDDEN, 8 * HIDDEN)),                           # whh2
        full((HIDDEN, OUT_PAD)),                                  # w_out_f
        full((HIDDEN, OUT_PAD)),                                  # w_out_b
        full((1, OUT_PAD)),                                       # b_out
    ]
    return pl.pallas_call(
        kernel,
        out_shape=jax.ShapeDtypeStruct((nt, R, OUT_PAD), jnp.float32),
        grid=(nt,),
        in_specs=in_specs,
        out_specs=pl.BlockSpec((None, R, OUT_PAD), lambda i: (i, 0, 0)),
        scratch_shapes=[pltpu.VMEM((R, 2 * HIDDEN), jnp.float32),   # h_buf
                        pltpu.VMEM((R, 8 * HIDDEN), jnp.float32)],  # xw_buf
        compiler_params=pltpu.CompilerParams(
            dimension_semantics=("parallel",),
            vmem_limit_bytes=_vmem_limit_bytes(R)),
    )(idx2, kp["tab0"], kp["bias"][0],
      kp["w_same"][0], kp["w_rev"][0], kp["bias"][1],
      kp["w_same"][1], kp["w_rev"][1], kp["bias"][2],
      kp["whh"][0], kp["whh"][1], kp["whh"][2],
      kp["w_out_f"], kp["w_out_b"], kp["b_out"])


# ----------------------------------------------------------------------------
# Parameters (deterministic init, PyTorch-like shapes) + kernel-ready transform
# ----------------------------------------------------------------------------
def init_params(key):
    params = {}
    keys = jax.random.split(key, 4 + NUM_LAYERS * 2 * 3 + 2)
    k = iter(keys)

    params["emb"] = [jax.random.normal(next(k), (NUM_NOTES, EMBED_DIM),
                                       dtype=jnp.float32) for _ in range(4)]

    scale = 1.0 / np.sqrt(HIDDEN)
    params["lstm"] = []
    for layer in range(NUM_LAYERS):
        in_size = 4 * EMBED_DIM if layer == 0 else 2 * HIDDEN
        layer_p = {}
        for direction in ("fwd", "bwd"):
            w_ih = jax.random.uniform(next(k), (in_size, 4 * HIDDEN),
                                      minval=-scale, maxval=scale,
                                      dtype=jnp.float32)
            w_hh = jax.random.uniform(next(k), (HIDDEN, 4 * HIDDEN),
                                      minval=-scale, maxval=scale,
                                      dtype=jnp.float32)
            b = jax.random.uniform(next(k), (1, 4 * HIDDEN),
                                   minval=-2 * scale, maxval=2 * scale,
                                   dtype=jnp.float32)  # b_ih + b_hh combined
            layer_p[direction] = (w_ih, w_hh, b)
        params["lstm"].append(layer_p)

    params["out_w"] = jax.random.uniform(next(k), (2 * HIDDEN, 4 * NUM_NOTES),
                                         minval=-scale, maxval=scale,
                                         dtype=jnp.float32)
    params["out_b"] = jax.random.uniform(next(k), (1, 4 * NUM_NOTES),
                                         minval=-scale, maxval=scale,
                                         dtype=jnp.float32)
    return params


def _place_dir(m, direction):
    """m: (rows, 4H) columns [i|f|g|o] of one direction -> (rows, 8H) in the
    gate-major kernel layout [i_f i_b | f_f f_b | o_f o_b | g_f g_b], with the
    sigmoid-gate (i,f,o) columns pre-scaled by 0.5 (single-tanh activation)."""
    rows = m.shape[0]
    out = jnp.zeros((rows, 8 * HIDDEN), jnp.float32)
    off = 0 if direction == "fwd" else HIDDEN
    src_col = {"i": 0, "f": 1, "g": 2, "o": 3}
    dst_grp = {"i": 0, "f": 1, "o": 2, "g": 3}
    for gate in ("i", "f", "g", "o"):
        blk = m[:, src_col[gate] * HIDDEN:(src_col[gate] + 1) * HIDDEN]
        if gate != "g":
            blk = blk * 0.5
        c0 = dst_grp[gate] * 2 * HIDDEN + off
        out = out.at[:, c0:c0 + HIDDEN].set(blk)
    return out


def prepare_params(params):
    """One-time transform of PyTorch-shaped params into kernel layout."""
    H = HIDDEN
    kp = {"whh": [], "bias": [], "w_same": [], "w_rev": []}

    for layer in range(NUM_LAYERS):
        _, whh_f, b_f = params["lstm"][layer]["fwd"]
        _, whh_b, b_b = params["lstm"][layer]["bwd"]
        kp["whh"].append(jnp.concatenate(
            [_place_dir(whh_f, "fwd"), _place_dir(whh_b, "bwd")], axis=0))
        kp["bias"].append(_place_dir(b_f, "fwd") + _place_dir(b_b, "bwd"))

    # Layers 1..2: split W_ih into same-block / reversed-block halves
    # (step-aligned inter-layer storage handles the bwd time reversal here).
    for layer in (1, 2):
        wf = params["lstm"][layer]["fwd"][0]       # (2H, 4H)
        wb = params["lstm"][layer]["bwd"][0]
        kp["w_same"].append(jnp.concatenate(
            [_place_dir(wf[0:H], "fwd"), _place_dir(wb[H:2 * H], "bwd")], axis=0))
        kp["w_rev"].append(jnp.concatenate(
            [_place_dir(wb[0:H], "bwd"), _place_dir(wf[H:2 * H], "fwd")], axis=0))

    # Layer 0: fold the 4 embedding tables into W_ih0 -> stacked one-hot table.
    wf0 = params["lstm"][0]["fwd"][0]              # (4*EMB, 4H)
    wb0 = params["lstm"][0]["bwd"][0]
    tabs = []
    for j in range(4):     # direct rows (time s)  -> fwd-direction gate columns
        t = params["emb"][j] @ _place_dir(
            wf0[j * EMBED_DIM:(j + 1) * EMBED_DIM], "fwd")
        tabs.append(jnp.pad(t, ((0, NOTE_PAD - NUM_NOTES), (0, 0))))
    for j in range(4):     # reversed rows (T-1-s) -> bwd-direction gate columns
        t = params["emb"][j] @ _place_dir(
            wb0[j * EMBED_DIM:(j + 1) * EMBED_DIM], "bwd")
        tabs.append(jnp.pad(t, ((0, NOTE_PAD - NUM_NOTES), (0, 0))))
    kp["tab0"] = jnp.concatenate(tabs, axis=0)     # (128, 8H)

    kp["w_out_f"] = jnp.pad(params["out_w"][0:H],
                            ((0, 0), (0, OUT_PAD - 4 * NUM_NOTES)))
    kp["w_out_b"] = jnp.pad(params["out_w"][H:2 * H],
                            ((0, 0), (0, OUT_PAD - 4 * NUM_NOTES)))
    kp["b_out"] = jnp.pad(params["out_b"],
                          ((0, 0), (0, OUT_PAD - 4 * NUM_NOTES)))
    return kp


# ----------------------------------------------------------------------------
# Forward pass (index packing in JAX, everything else in one Pallas kernel)
# ----------------------------------------------------------------------------
def forward(kp, x):
    """x: (B, T, 4) int32 note indices -> logits (B, T, 4, num_notes)."""
    B, T, _ = x.shape
    # Batch tile: multiple of 8 sublanes, as large as possible (fills MXU M and
    # feeds both v7x TensorCores via the parallel grid), capped for VMEM.
    bt = min(((B + 7) // 8) * 8, MAX_BT, max(8, (MAX_ROWS // T) // 8 * 8))
    nt = -(-B // bt)
    bp = nt * bt

    xt = jnp.transpose(x, (1, 0, 2))                       # (T, B, 4)
    xt = jnp.pad(xt, ((0, 0), (0, bp - B), (0, 0)))        # (T, bp, 4)
    idx2 = jnp.concatenate([xt, xt[::-1]], axis=-1).astype(jnp.float32)
    idx2 = idx2.reshape(T, nt, bt, 8).transpose(1, 0, 2, 3).reshape(nt, T * bt, 8)

    out = fused_net(idx2, kp, seq_len=T, bt=bt, nt=nt)     # (nt, T*bt, 128)
    out = out.reshape(nt, T, bt, OUT_PAD).transpose(1, 0, 2, 3)
    out = out.reshape(T, bp, OUT_PAD)[:, :B, :4 * NUM_NOTES]
    return jnp.transpose(out, (1, 0, 2)).reshape(B, T, 4, NUM_NOTES)


# ----------------------------------------------------------------------------
# Pure-JAX reference (for correctness check), uses the raw PyTorch-style params
# ----------------------------------------------------------------------------
def _ref_lstm_dir(x, w_ih, w_hh, b, reverse):
    xs = x[::-1] if reverse else x

    def step(carry, x_t):
        h, c = carry
        gates = x_t @ w_ih + h @ w_hh + b
        i = jax.nn.sigmoid(gates[:, 0 * HIDDEN:1 * HIDDEN])
        f = jax.nn.sigmoid(gates[:, 1 * HIDDEN:2 * HIDDEN])
        g = jnp.tanh(gates[:, 2 * HIDDEN:3 * HIDDEN])
        o = jax.nn.sigmoid(gates[:, 3 * HIDDEN:4 * HIDDEN])
        c_new = f * c + i * g
        h_new = o * jnp.tanh(c_new)
        return (h_new, c_new), h_new

    B = x.shape[1]
    init = (jnp.zeros((B, HIDDEN), jnp.float32),
            jnp.zeros((B, HIDDEN), jnp.float32))
    _, outs = lax.scan(step, init, xs)
    return outs[::-1] if reverse else outs


def forward_ref(params, x):
    B, T, _ = x.shape
    embeds = [jnp.take(params["emb"][j], x[..., j], axis=0) for j in range(4)]
    h = jnp.transpose(jnp.concatenate(embeds, axis=-1), (1, 0, 2))
    for layer in range(NUM_LAYERS):
        fwd = _ref_lstm_dir(h, *params["lstm"][layer]["fwd"], False)
        bwd = _ref_lstm_dir(h, *params["lstm"][layer]["bwd"], True)
        h = jnp.concatenate([fwd, bwd], axis=-1)
    h = jnp.transpose(h, (1, 0, 2)).reshape(B * T, 2 * HIDDEN)
    logits = h @ params["out_w"] + params["out_b"]
    return logits.reshape(B, T, 4, NUM_NOTES)


# ----------------------------------------------------------------------------
if __name__ == "__main__":
    key = jax.random.PRNGKey(0)
    pkey, xkey = jax.random.split(key)
    params = init_params(pkey)
    kp = prepare_params(params)

    B, T = 2, 8
    x = jax.random.randint(xkey, (B, T, 4), 0, NUM_NOTES, dtype=jnp.int32)

    logits = jax.block_until_ready(jax.jit(forward)(kp, x))
    assert logits.shape == (B, T, 4, NUM_NOTES), logits.shape

    ref = jax.block_until_ready(jax.jit(forward_ref)(params, x))
    np.testing.assert_allclose(np.asarray(logits), np.asarray(ref),
                               atol=2e-3, rtol=2e-3)

    print("KERNEL_OK")
</pallas_src>

<mosaic_0001>
module attributes {stable_mosaic.version = 11 : i64} {
  func.func @_fused_kernel(%arg0: i32, %arg1: memref<1x64x8xf32, #tpu.memory_space<vmem>>, %arg2: memref<128x256xf32, #tpu.memory_space<vmem>>, %arg3: memref<1x256xf32, #tpu.memory_space<vmem>>, %arg4: memref<64x256xf32, #tpu.memory_space<vmem>>, %arg5: memref<64x256xf32, #tpu.memory_space<vmem>>, %arg6: memref<1x256xf32, #tpu.memory_space<vmem>>, %arg7: memref<64x256xf32, #tpu.memory_space<vmem>>, %arg8: memref<64x256xf32, #tpu.memory_space<vmem>>, %arg9: memref<1x256xf32, #tpu.memory_space<vmem>>, %arg10: memref<64x256xf32, #tpu.memory_space<vmem>>, %arg11: memref<64x256xf32, #tpu.memory_space<vmem>>, %arg12: memref<64x256xf32, #tpu.memory_space<vmem>>, %arg13: memref<32x128xf32, #tpu.memory_space<vmem>>, %arg14: memref<32x128xf32, #tpu.memory_space<vmem>>, %arg15: memref<1x128xf32, #tpu.memory_space<vmem>>, %arg16: memref<1x64x128xf32, #tpu.memory_space<vmem>>, %arg17: memref<64x64xf32, #tpu.memory_space<vmem>>, %arg18: memref<64x256xf32, #tpu.memory_space<vmem>>) attributes {dimension_semantics = [#tpu.dimension_semantics<parallel>], iteration_bounds = array<i64: 1>, scalar_prefetch = 0 : i64, scratch_operands = 2 : i64, tpu.core_type = #tpu.core_type<tc>, window_params = [{transform_indices = @transform_0, window_bounds = array<i64: 1, 64, 8>}, {pipeline_mode = #tpu.pipeline_mode<synchronous>, transform_indices = @transform_1, window_bounds = array<i64: 128, 256>}, {pipeline_mode = #tpu.pipeline_mode<synchronous>, transform_indices = @transform_2, window_bounds = array<i64: 1, 256>}, {pipeline_mode = #tpu.pipeline_mode<synchronous>, transform_indices = @transform_3, window_bounds = array<i64: 64, 256>}, {pipeline_mode = #tpu.pipeline_mode<synchronous>, transform_indices = @transform_4, window_bounds = array<i64: 64, 256>}, {pipeline_mode = #tpu.pipeline_mode<synchronous>, transform_indices = @transform_5, window_bounds = array<i64: 1, 256>}, {pipeline_mode = #tpu.pipeline_mode<synchronous>, transform_indices = @transform_6, window_bounds = array<i64: 64, 256>}, {pipeline_mode = #tpu.pipeline_mode<synchronous>, transform_indices = @transform_7, window_bounds = array<i64: 64, 256>}, {pipeline_mode = #tpu.pipeline_mode<synchronous>, transform_indices = @transform_8, window_bounds = array<i64: 1, 256>}, {pipeline_mode = #tpu.pipeline_mode<synchronous>, transform_indices = @transform_9, window_bounds = array<i64: 64, 256>}, {pipeline_mode = #tpu.pipeline_mode<synchronous>, transform_indices = @transform_10, window_bounds = array<i64: 64, 256>}, {pipeline_mode = #tpu.pipeline_mode<synchronous>, transform_indices = @transform_11, window_bounds = array<i64: 64, 256>}, {pipeline_mode = #tpu.pipeline_mode<synchronous>, transform_indices = @transform_12, window_bounds = array<i64: 32, 128>}, {pipeline_mode = #tpu.pipeline_mode<synchronous>, transform_indices = @transform_13, window_bounds = array<i64: 32, 128>}, {pipeline_mode = #tpu.pipeline_mode<synchronous>, transform_indices = @transform_14, window_bounds = array<i64: 1, 128>}, {transform_indices = @transform_15, window_bounds = array<i64: 1, 64, 128>}]} {
    %0 = tpu.iota {dimensions = array<i32: 1>} : vector<64x128xi32>
    %c15_i32 = arith.constant 15 : i32
    %1 = vector.broadcast %c15_i32 : i32 to vector<64x128xi32>
    %2 = arith.andi %0, %1 : vector<64x128xi32>
    %3 = arith.sitofp %2 : vector<64x128xi32> to vector<64x128xf32>
    %4 = tpu.iota {dimensions = array<i32: 1>} : vector<8x128xi32>
    %c4_i32 = arith.constant 4 : i32
    %5 = vector.broadcast %c4_i32 : i32 to vector<8x128xi32>
    %6 = arith.shrsi %4, %5 : vector<8x128xi32>
    %7 = tpu.iota {dimensions = array<i32: 0>} : vector<8x128xi32>
    %8 = arith.cmpi eq, %6, %7 : vector<8x128xi32>
    %9 = arith.extui %8 : vector<8x128xi1> to vector<8x128xi32>
    %10 = arith.sitofp %9 : vector<8x128xi32> to vector<8x128xf32>
    %c0 = arith.constant 0 : index
    %c0_0 = arith.constant 0 : index
    %c0_1 = arith.constant 0 : index
    %11 = vector.load %arg1[%c0, %c0_0, %c0_1] : memref<1x64x8xf32, #tpu.memory_space<vmem>>, vector<1x64x8xf32>
    %12 = vector.shape_cast %11 : vector<1x64x8xf32> to vector<64x8xf32>
    %cst = arith.constant dense<0.000000e+00> : vector<64x128xf32>
    %13 = tpu.matmul %12, %10, %cst {dimension_numbers = #tpu.dot_dimension_numbers<[1], [0], [0], [1], [0, 0, 1, 1], [], []>} : vector<64x8xf32>, vector<8x128xf32>, vector<64x128xf32> -> vector<64x128xf32>
    %14 = arith.cmpf oeq, %13, %3 : vector<64x128xf32>
    %15 = arith.extui %14 : vector<64x128xi1> to vector<64x128xi32>
    %16 = arith.sitofp %15 : vector<64x128xi32> to vector<64x128xf32>
    %c0_2 = arith.constant 0 : index
    %c0_3 = arith.constant 0 : index
    %17 = vector.load %arg2[%c0_2, %c0_3] : memref<128x256xf32, #tpu.memory_space<vmem>>, vector<128x256xf32>
    %cst_4 = arith.constant dense<0.000000e+00> : vector<64x256xf32>
    %18 = tpu.matmul %16, %17, %cst_4 {dimension_numbers = #tpu.dot_dimension_numbers<[1], [0], [0], [1], [0, 0, 1, 1], [], []>} : vector<64x128xf32>, vector<128x256xf32>, vector<64x256xf32> -> vector<64x256xf32>
    %c0_5 = arith.constant 0 : index
    %c0_6 = arith.constant 0 : index
    %19 = vector.load %arg3[%c0_5, %c0_6] : memref<1x256xf32, #tpu.memory_space<vmem>>, vector<1x256xf32>
    %20 = vector.broadcast %19 : vector<1x256xf32> to vector<64x256xf32>
    %21 = arith.addf %18, %20 : vector<64x256xf32>
    %c0_7 = arith.constant 0 : index
    %c0_8 = arith.constant 0 : index
    %22 = vector.load %arg18[%c0_7, %c0_8] : memref<64x256xf32, #tpu.memory_space<vmem>>, vector<64x256xf32>
    tpu.vector_store %arg18[%c0_7, %c0_8], %21 {strides = array<i32>} : memref<64x256xf32, #tpu.memory_space<vmem>>, vector<64x256xf32>,
    %c0_9 = arith.constant 0 : index
    %c0_10 = arith.constant 0 : index
    %23 = vector.load %arg10[%c0_9, %c0_10] : memref<64x256xf32, #tpu.memory_space<vmem>>, vector<64x256xf32>
    %cst_11 = arith.constant 0.000000e+00 : f32
    %24 = vector.broadcast %cst_11 : f32 to vector<8x64xf32>
    %cst_12 = arith.constant 0.000000e+00 : f32
    %25 = vector.broadcast %cst_12 : f32 to vector<8x64xf32>
    %c0_13 = arith.constant 0 : index
    %c0_14 = arith.constant 0 : index
    %26 = vector.load %arg18[%c0_13, %c0_14] : memref<64x256xf32, #tpu.memory_space<vmem>>, vector<8x256xf32>
    %cst_15 = arith.constant dense<0.000000e+00> : vector<8x256xf32>
    %27 = tpu.matmul %24, %23, %cst_15 {dimension_numbers = #tpu.dot_dimension_numbers<[1], [0], [0], [1], [0, 0, 1, 1], [], []>} : vector<8x64xf32>, vector<64x256xf32>, vector<8x256xf32> -> vector<8x256xf32>
    %28 = arith.addf %26, %27 : vector<8x256xf32>
    %29 = math.tanh %28 : vector<8x256xf32>
    %30 = vector.extract_strided_slice %29 {offsets = [0, 0], sizes = [8, 192], strides = [1, 1]} : vector<8x256xf32> to vector<8x192xf32>
    %cst_16 = arith.constant 5.000000e-01 : f32
    %31 = vector.broadcast %cst_16 : f32 to vector<8x192xf32>
    %32 = arith.mulf %30, %31 : vector<8x192xf32>
    %cst_17 = arith.constant 5.000000e-01 : f32
    %33 = vector.broadcast %cst_17 : f32 to vector<8x192xf32>
    %34 = arith.addf %32, %33 : vector<8x192xf32>
    %35 = vector.extract_strided_slice %34 {offsets = [0, 0], sizes = [8, 64], strides = [1, 1]} : vector<8x192xf32> to vector<8x64xf32>
    %36 = vector.extract_strided_slice %34 {offsets = [0, 64], sizes = [8, 64], strides = [1, 1]} : vector<8x192xf32> to vector<8x64xf32>
    %37 = vector.extract_strided_slice %34 {offsets = [0, 128], sizes = [8, 64], strides = [1, 1]} : vector<8x192xf32> to vector<8x64xf32>
    %38 = vector.extract_strided_slice %29 {offsets = [0, 192], sizes = [8, 64], strides = [1, 1]} : vector<8x256xf32> to vector<8x64xf32>
    %39 = arith.mulf %36, %25 : vector<8x64xf32>
    %40 = arith.mulf %35, %38 : vector<8x64xf32>
    %41 = arith.addf %39, %40 : vector<8x64xf32>
    %42 = math.tanh %41 : vector<8x64xf32>
    %43 = arith.mulf %37, %42 : vector<8x64xf32>
    %c0_18 = arith.constant 0 : index
    %c0_19 = arith.constant 0 : index
    %44 = vector.load %arg17[%c0_18, %c0_19] : memref<64x64xf32, #tpu.memory_space<vmem>>, vector<8x64xf32>
    tpu.vector_store %arg17[%c0_18, %c0_19], %43 {strides = array<i32>} : memref<64x64xf32, #tpu.memory_space<vmem>>, vector<8x64xf32>,
    %c8 = arith.constant 8 : index
    %c0_20 = arith.constant 0 : index
    %45 = vector.load %arg18[%c8, %c0_20] : memref<64x256xf32, #tpu.memory_space<vmem>>, vector<8x256xf32>
    %cst_21 = arith.constant dense<0.000000e+00> : vector<8x256xf32>
    %46 = tpu.matmul %43, %23, %cst_21 {dimension_numbers = #tpu.dot_dimension_numbers<[1], [0], [0], [1], [0, 0, 1, 1], [], []>} : vector<8x64xf32>, vector<64x256xf32>, vector<8x256xf32> -> vector<8x256xf32>
    %47 = arith.addf %45, %46 : vector<8x256xf32>
    %48 = math.tanh %47 : vector<8x256xf32>
    %49 = vector.extract_strided_slice %48 {offsets = [0, 0], sizes = [8, 192], strides = [1, 1]} : vector<8x256xf32> to vector<8x192xf32>
    %cst_22 = arith.constant 5.000000e-01 : f32
    %50 = vector.broadcast %cst_22 : f32 to vector<8x192xf32>
    %51 = arith.mulf %49, %50 : vector<8x192xf32>
    %cst_23 = arith.constant 5.000000e-01 : f32
    %52 = vector.broadcast %cst_23 : f32 to vector<8x192xf32>
    %53 = arith.addf %51, %52 : vector<8x192xf32>
    %54 = vector.extract_strided_slice %53 {offsets = [0, 0], sizes = [8, 64], strides = [1, 1]} : vector<8x192xf32> to vector<8x64xf32>
    %55 = vector.extract_strided_slice %53 {offsets = [0, 64], sizes = [8, 64], strides = [1, 1]} : vector<8x192xf32> to vector<8x64xf32>
    %56 = vector.extract_strided_slice %53 {offsets = [0, 128], sizes = [8, 64], strides = [1, 1]} : vector<8x192xf32> to vector<8x64xf32>
    %57 = vector.extract_strided_slice %48 {offsets = [0, 192], sizes = [8, 64], strides = [1, 1]} : vector<8x256xf32> to vector<8x64xf32>
    %58 = arith.mulf %55, %41 : vector<8x64xf32>
    %59 = arith.mulf %54, %57 : vector<8x64xf32>
    %60 = arith.addf %58, %59 : vector<8x64xf32>
    %61 = math.tanh %60 : vector<8x64xf32>
    %62 = arith.mulf %56, %61 : vector<8x64xf32>
    %c8_24 = arith.constant 8 : index
    %c0_25 = arith.constant 0 : index
    %63 = vector.load %arg17[%c8_24, %c0_25] : memref<64x64xf32, #tpu.memory_space<vmem>>, vector<8x64xf32>
    tpu.vector_store %arg17[%c8_24, %c0_25], %62 {strides = array<i32>} : memref<64x64xf32, #tpu.memory_space<vmem>>, vector<8x64xf32>,
    %c16 = arith.constant 16 : index
    %c0_26 = arith.constant 0 : index
    %64 = vector.load %arg18[%c16, %c0_26] : memref<64x256xf32, #tpu.memory_space<vmem>>, vector<8x256xf32>
    %cst_27 = arith.constant dense<0.000000e+00> : vector<8x256xf32>
    %65 = tpu.matmul %62, %23, %cst_27 {dimension_numbers = #tpu.dot_dimension_numbers<[1], [0], [0], [1], [0, 0, 1, 1], [], []>} : vector<8x64xf32>, vector<64x256xf32>, vector<8x256xf32> -> vector<8x256xf32>
    %66 = arith.addf %64, %65 : vector<8x256xf32>
    %67 = math.tanh %66 : vector<8x256xf32>
    %68 = vector.extract_strided_slice %67 {offsets = [0, 0], sizes = [8, 192], strides = [1, 1]} : vector<8x256xf32> to vector<8x192xf32>
    %cst_28 = arith.constant 5.000000e-01 : f32
    %69 = vector.broadcast %cst_28 : f32 to vector<8x192xf32>
    %70 = arith.mulf %68, %69 : vector<8x192xf32>
    %cst_29 = arith.constant 5.000000e-01 : f32
    %71 = vector.broadcast %cst_29 : f32 to vector<8x192xf32>
    %72 = arith.addf %70, %71 : vector<8x192xf32>
    %73 = vector.extract_strided_slice %72 {offsets = [0, 0], sizes = [8, 64], strides = [1, 1]} : vector<8x192xf32> to vector<8x64xf32>
    %74 = vector.extract_strided_slice %72 {offsets = [0, 64], sizes = [8, 64], strides = [1, 1]} : vector<8x192xf32> to vector<8x64xf32>
    %75 = vector.extract_strided_slice %72 {offsets = [0, 128], sizes = [8, 64], strides = [1, 1]} : vector<8x192xf32> to vector<8x64xf32>
    %76 = vector.extract_strided_slice %67 {offsets = [0, 192], sizes = [8, 64], strides = [1, 1]} : vector<8x256xf32> to vector<8x64xf32>
    %77 = arith.mulf %74, %60 : vector<8x64xf32>
    %78 = arith.mulf %73, %76 : vector<8x64xf32>
    %79 = arith.addf %77, %78 : vector<8x64xf32>
    %80 = math.tanh %79 : vector<8x64xf32>
    %81 = arith.mulf %75, %80 : vector<8x64xf32>
    %c16_30 = arith.constant 16 : index
    %c0_31 = arith.constant 0 : index
    %82 = vector.load %arg17[%c16_30, %c0_31] : memref<64x64xf32, #tpu.memory_space<vmem>>, vector<8x64xf32>
    tpu.vector_store %arg17[%c16_30, %c0_31], %81 {strides = array<i32>} : memref<64x64xf32, #tpu.memory_space<vmem>>, vector<8x64xf32>,
    %c24 = arith.constant 24 : index
    %c0_32 = arith.constant 0 : index
    %83 = vector.load %arg18[%c24, %c0_32] : memref<64x256xf32, #tpu.memory_space<vmem>>, vector<8x256xf32>
    %cst_33 = arith.constant dense<0.000000e+00> : vector<8x256xf32>
    %84 = tpu.matmul %81, %23, %cst_33 {dimension_numbers = #tpu.dot_dimension_numbers<[1], [0], [0], [1], [0, 0, 1, 1], [], []>} : vector<8x64xf32>, vector<64x256xf32>, vector<8x256xf32> -> vector<8x256xf32>
    %85 = arith.addf %83, %84 : vector<8x256xf32>
    %86 = math.tanh %85 : vector<8x256xf32>
    %87 = vector.extract_strided_slice %86 {offsets = [0, 0], sizes = [8, 192], strides = [1, 1]} : vector<8x256xf32> to vector<8x192xf32>
    %cst_34 = arith.constant 5.000000e-01 : f32
    %88 = vector.broadcast %cst_34 : f32 to vector<8x192xf32>
    %89 = arith.mulf %87, %88 : vector<8x192xf32>
    %cst_35 = arith.constant 5.000000e-01 : f32
    %90 = vector.broadcast %cst_35 : f32 to vector<8x192xf32>
    %91 = arith.addf %89, %90 : vector<8x192xf32>
    %92 = vector.extract_strided_slice %91 {offsets = [0, 0], sizes = [8, 64], strides = [1, 1]} : vector<8x192xf32> to vector<8x64xf32>
    %93 = vector.extract_strided_slice %91 {offsets = [0, 64], sizes = [8, 64], strides = [1, 1]} : vector<8x192xf32> to vector<8x64xf32>
    %94 = vector.extract_strided_slice %91 {offsets = [0, 128], sizes = [8, 64], strides = [1, 1]} : vector<8x192xf32> to vector<8x64xf32>
    %95 = vector.extract_strided_slice %86 {offsets = [0, 192], sizes = [8, 64], strides = [1, 1]} : vector<8x256xf32> to vector<8x64xf32>
    %96 = arith.mulf %93, %79 : vector<8x64xf32>
    %97 = arith.mulf %92, %95 : vector<8x64xf32>
    %98 = arith.addf %96, %97 : vector<8x64xf32>
    %99 = math.tanh %98 : vector<8x64xf32>
    %100 = arith.mulf %94, %99 : vector<8x64xf32>
    %c24_36 = arith.constant 24 : index
    %c0_37 = arith.constant 0 : index
    %101 = vector.load %arg17[%c24_36, %c0_37] : memref<64x64xf32, #tpu.memory_space<vmem>>, vector<8x64xf32>
    tpu.vector_store %arg17[%c24_36, %c0_37], %100 {strides = array<i32>} : memref<64x64xf32, #tpu.memory_space<vmem>>, vector<8x64xf32>,
    %c32 = arith.constant 32 : index
    %c0_38 = arith.constant 0 : index
    %102 = vector.load %arg18[%c32, %c0_38] : memref<64x256xf32, #tpu.memory_space<vmem>>, vector<8x256xf32>
    %cst_39 = arith.constant dense<0.000000e+00> : vector<8x256xf32>
    %103 = tpu.matmul %100, %23, %cst_39 {dimension_numbers = #tpu.dot_dimension_numbers<[1], [0], [0], [1], [0, 0, 1, 1], [], []>} : vector<8x64xf32>, vector<64x256xf32>, vector<8x256xf32> -> vector<8x256xf32>
    %104 = arith.addf %102, %103 : vector<8x256xf32>
    %105 = math.tanh %104 : vector<8x256xf32>
    %106 = vector.extract_strided_slice %105 {offsets = [0, 0], sizes = [8, 192], strides = [1, 1]} : vector<8x256xf32> to vector<8x192xf32>
    %cst_40 = arith.constant 5.000000e-01 : f32
    %107 = vector.broadcast %cst_40 : f32 to vector<8x192xf32>
    %108 = arith.mulf %106, %107 : vector<8x192xf32>
    %cst_41 = arith.constant 5.000000e-01 : f32
    %109 = vector.broadcast %cst_41 : f32 to vector<8x192xf32>
    %110 = arith.addf %108, %109 : vector<8x192xf32>
    %111 = vector.extract_strided_slice %110 {offsets = [0, 0], sizes = [8, 64], strides = [1, 1]} : vector<8x192xf32> to vector<8x64xf32>
    %112 = vector.extract_strided_slice %110 {offsets = [0, 64], sizes = [8, 64], strides = [1, 1]} : vector<8x192xf32> to vector<8x64xf32>
    %113 = vector.extract_strided_slice %110 {offsets = [0, 128], sizes = [8, 64], strides = [1, 1]} : vector<8x192xf32> to vector<8x64xf32>
    %114 = vector.extract_strided_slice %105 {offsets = [0, 192], sizes = [8, 64], strides = [1, 1]} : vector<8x256xf32> to vector<8x64xf32>
    %115 = arith.mulf %112, %98 : vector<8x64xf32>
    %116 = arith.mulf %111, %114 : vector<8x64xf32>
    %117 = arith.addf %115, %116 : vector<8x64xf32>
    %118 = math.tanh %117 : vector<8x64xf32>
    %119 = arith.mulf %113, %118 : vector<8x64xf32>
    %c32_42 = arith.constant 32 : index
    %c0_43 = arith.constant 0 : index
    %120 = vector.load %arg17[%c32_42, %c0_43] : memref<64x64xf32, #tpu.memory_space<vmem>>, vector<8x64xf32>
    tpu.vector_store %arg17[%c32_42, %c0_43], %119 {strides = array<i32>} : memref<64x64xf32, #tpu.memory_space<vmem>>, vector<8x64xf32>,
    %c40 = arith.constant 40 : index
    %c0_44 = arith.constant 0 : index
    %121 = vector.load %arg18[%c40, %c0_44] : memref<64x256xf32, #tpu.memory_space<vmem>>, vector<8x256xf32>
    %cst_45 = arith.constant dense<0.000000e+00> : vector<8x256xf32>
    %122 = tpu.matmul %119, %23, %cst_45 {dimension_numbers = #tpu.dot_dimension_numbers<[1], [0], [0], [1], [0, 0, 1, 1], [], []>} : vector<8x64xf32>, vector<64x256xf32>, vector<8x256xf32> -> vector<8x256xf32>
    %123 = arith.addf %121, %122 : vector<8x256xf32>
    %124 = math.tanh %123 : vector<8x256xf32>
    %125 = vector.extract_strided_slice %124 {offsets = [0, 0], sizes = [8, 192], strides = [1, 1]} : vector<8x256xf32> to vector<8x192xf32>
    %cst_46 = arith.constant 5.000000e-01 : f32
    %126 = vector.broadcast %cst_46 : f32 to vector<8x192xf32>
    %127 = arith.mulf %125, %126 : vector<8x192xf32>
    %cst_47 = arith.constant 5.000000e-01 : f32
    %128 = vector.broadcast %cst_47 : f32 to vector<8x192xf32>
    %129 = arith.addf %127, %128 : vector<8x192xf32>
    %130 = vector.extract_strided_slice %129 {offsets = [0, 0], sizes = [8, 64], strides = [1, 1]} : vector<8x192xf32> to vector<8x64xf32>
    %131 = vector.extract_strided_slice %129 {offsets = [0, 64], sizes = [8, 64], strides = [1, 1]} : vector<8x192xf32> to vector<8x64xf32>
    %132 = vector.extract_strided_slice %129 {offsets = [0, 128], sizes = [8, 64], strides = [1, 1]} : vector<8x192xf32> to vector<8x64xf32>
    %133 = vector.extract_strided_slice %124 {offsets = [0, 192], sizes = [8, 64], strides = [1, 1]} : vector<8x256xf32> to vector<8x64xf32>
    %134 = arith.mulf %131, %117 : vector<8x64xf32>
    %135 = arith.mulf %130, %133 : vector<8x64xf32>
    %136 = arith.addf %134, %135 : vector<8x64xf32>
    %137 = math.tanh %136 : vector<8x64xf32>
    %138 = arith.mulf %132, %137 : vector<8x64xf32>
    %c40_48 = arith.constant 40 : index
    %c0_49 = arith.constant 0 : index
    %139 = vector.load %arg17[%c40_48, %c0_49] : memref<64x64xf32, #tpu.memory_space<vmem>>, vector<8x64xf32>
    tpu.vector_store %arg17[%c40_48, %c0_49], %138 {strides = array<i32>} : memref<64x64xf32, #tpu.memory_space<vmem>>, vector<8x64xf32>,
    %c48 = arith.constant 48 : index
    %c0_50 = arith.constant 0 : index
    %140 = vector.load %arg18[%c48, %c0_50] : memref<64x256xf32, #tpu.memory_space<vmem>>, vector<8x256xf32>
    %cst_51 = arith.constant dense<0.000000e+00> : vector<8x256xf32>
    %141 = tpu.matmul %138, %23, %cst_51 {dimension_numbers = #tpu.dot_dimension_numbers<[1], [0], [0], [1], [0, 0, 1, 1], [], []>} : vector<8x64xf32>, vector<64x256xf32>, vector<8x256xf32> -> vector<8x256xf32>
    %142 = arith.addf %140, %141 : vector<8x256xf32>
    %143 = math.tanh %142 : vector<8x256xf32>
    %144 = vector.extract_strided_slice %143 {offsets = [0, 0], sizes = [8, 192], strides = [1, 1]} : vector<8x256xf32> to vector<8x192xf32>
    %cst_52 = arith.constant 5.000000e-01 : f32
    %145 = vector.broadcast %cst_52 : f32 to vector<8x192xf32>
    %146 = arith.mulf %144, %145 : vector<8x192xf32>
    %cst_53 = arith.constant 5.000000e-01 : f32
    %147 = vector.broadcast %cst_53 : f32 to vector<8x192xf32>
    %148 = arith.addf %146, %147 : vector<8x192xf32>
    %149 = vector.extract_strided_slice %148 {offsets = [0, 0], sizes = [8, 64], strides = [1, 1]} : vector<8x192xf32> to vector<8x64xf32>
    %150 = vector.extract_strided_slice %148 {offsets = [0, 64], sizes = [8, 64], strides = [1, 1]} : vector<8x192xf32> to vector<8x64xf32>
    %151 = vector.extract_strided_slice %148 {offsets = [0, 128], sizes = [8, 64], strides = [1, 1]} : vector<8x192xf32> to vector<8x64xf32>
    %152 = vector.extract_strided_slice %143 {offsets = [0, 192], sizes = [8, 64], strides = [1, 1]} : vector<8x256xf32> to vector<8x64xf32>
    %153 = arith.mulf %150, %136 : vector<8x64xf32>
    %154 = arith.mulf %149, %152 : vector<8x64xf32>
    %155 = arith.addf %153, %154 : vector<8x64xf32>
    %156 = math.tanh %155 : vector<8x64xf32>
    %157 = arith.mulf %151, %156 : vector<8x64xf32>
    %c48_54 = arith.constant 48 : index
    %c0_55 = arith.constant 0 : index
    %158 = vector.load %arg17[%c48_54, %c0_55] : memref<64x64xf32, #tpu.memory_space<vmem>>, vector<8x64xf32>
    tpu.vector_store %arg17[%c48_54, %c0_55], %157 {strides = array<i32>} : memref<64x64xf32, #tpu.memory_space<vmem>>, vector<8x64xf32>,
    %c56 = arith.constant 56 : index
    %c0_56 = arith.constant 0 : index
    %159 = vector.load %arg18[%c56, %c0_56] : memref<64x256xf32, #tpu.memory_space<vmem>>, vector<8x256xf32>
    %cst_57 = arith.constant dense<0.000000e+00> : vector<8x256xf32>
    %160 = tpu.matmul %157, %23, %cst_57 {dimension_numbers = #tpu.dot_dimension_numbers<[1], [0], [0], [1], [0, 0, 1, 1], [], []>} : vector<8x64xf32>, vector<64x256xf32>, vector<8x256xf32> -> vector<8x256xf32>
    %161 = arith.addf %159, %160 : vector<8x256xf32>
    %162 = math.tanh %161 : vector<8x256xf32>
    %163 = vector.extract_strided_slice %162 {offsets = [0, 0], sizes = [8, 192], strides = [1, 1]} : vector<8x256xf32> to vector<8x192xf32>
    %cst_58 = arith.constant 5.000000e-01 : f32
    %164 = vector.broadcast %cst_58 : f32 to vector<8x192xf32>
    %165 = arith.mulf %163, %164 : vector<8x192xf32>
    %cst_59 = arith.constant 5.000000e-01 : f32
    %166 = vector.broadcast %cst_59 : f32 to vector<8x192xf32>
    %167 = arith.addf %165, %166 : vector<8x192xf32>
    %168 = vector.extract_strided_slice %167 {offsets = [0, 0], sizes = [8, 64], strides = [1, 1]} : vector<8x192xf32> to vector<8x64xf32>
    %169 = vector.extract_strided_slice %167 {offsets = [0, 64], sizes = [8, 64], strides = [1, 1]} : vector<8x192xf32> to vector<8x64xf32>
    %170 = vector.extract_strided_slice %167 {offsets = [0, 128], sizes = [8, 64], strides = [1, 1]} : vector<8x192xf32> to vector<8x64xf32>
    %171 = vector.extract_strided_slice %162 {offsets = [0, 192], sizes = [8, 64], strides = [1, 1]} : vector<8x256xf32> to vector<8x64xf32>
    %172 = arith.mulf %169, %155 : vector<8x64xf32>
    %173 = arith.mulf %168, %171 : vector<8x64xf32>
    %174 = arith.addf %172, %173 : vector<8x64xf32>
    %175 = math.tanh %174 : vector<8x64xf32>
    %176 = arith.mulf %170, %175 : vector<8x64xf32>
    %c56_60 = arith.constant 56 : index
    %c0_61 = arith.constant 0 : index
    %177 = vector.load %arg17[%c56_60, %c0_61] : memref<64x64xf32, #tpu.memory_space<vmem>>, vector<8x64xf32>
    tpu.vector_store %arg17[%c56_60, %c0_61], %176 {strides = array<i32>} : memref<64x64xf32, #tpu.memory_space<vmem>>, vector<8x64xf32>,
    %c0_62 = arith.constant 0 : index
    %c0_63 = arith.constant 0 : index
    %178 = vector.load %arg17[%c0_62, %c0_63] : memref<64x64xf32, #tpu.memory_space<vmem>>, vector<64x64xf32>
    %c0_64 = arith.constant 0 : index
    %c0_65 = arith.constant 0 : index
    %179 = vector.load %arg4[%c0_64, %c0_65] : memref<64x256xf32, #tpu.memory_space<vmem>>, vector<64x256xf32>
    %cst_66 = arith.constant dense<0.000000e+00> : vector<64x256xf32>
    %180 = tpu.matmul %178, %179, %cst_66 {dimension_numbers = #tpu.dot_dimension_numbers<[1], [0], [0], [1], [0, 0, 1, 1], [], []>} : vector<64x64xf32>, vector<64x256xf32>, vector<64x256xf32> -> vector<64x256xf32>
    %c0_67 = arith.constant 0 : index
    %c0_68 = arith.constant 0 : index
    %181 = vector.load %arg6[%c0_67, %c0_68] : memref<1x256xf32, #tpu.memory_space<vmem>>, vector<1x256xf32>
    %182 = vector.broadcast %181 : vector<1x256xf32> to vector<64x256xf32>
    %183 = arith.addf %180, %182 : vector<64x256xf32>
    %c0_69 = arith.constant 0 : index
    %c0_70 = arith.constant 0 : index
    %184 = vector.load %arg5[%c0_69, %c0_70] : memref<64x256xf32, #tpu.memory_space<vmem>>, vector<64x256xf32>
    %cst_71 = arith.constant dense<0.000000e+00> : vector<64x256xf32>
    %185 = tpu.matmul %178, %184, %cst_71 {dimension_numbers = #tpu.dot_dimension_numbers<[1], [0], [0], [1], [0, 0, 1, 1], [], []>} : vector<64x64xf32>, vector<64x256xf32>, vector<64x256xf32> -> vector<64x256xf32>
    %186 = vector.extract_strided_slice %183 {offsets = [0, 0], sizes = [8, 256], strides = [1, 1]} : vector<64x256xf32> to vector<8x256xf32>
    %187 = vector.extract_strided_slice %185 {offsets = [56, 0], sizes = [8, 256], strides = [1, 1]} : vector<64x256xf32> to vector<8x256xf32>
    %188 = arith.addf %186, %187 : vector<8x256xf32>
    %c0_72 = arith.constant 0 : index
    %c0_73 = arith.constant 0 : index
    %189 = vector.load %arg18[%c0_72, %c0_73] : memref<64x256xf32, #tpu.memory_space<vmem>>, vector<8x256xf32>
    tpu.vector_store %arg18[%c0_72, %c0_73], %188 {strides = array<i32>} : memref<64x256xf32, #tpu.memory_space<vmem>>, vector<8x256xf32>,
    %190 = vector.extract_strided_slice %183 {offsets = [8, 0], sizes = [8, 256], strides = [1, 1]} : vector<64x256xf32> to vector<8x256xf32>
    %191 = vector.extract_strided_slice %185 {offsets = [48, 0], sizes = [8, 256], strides = [1, 1]} : vector<64x256xf32> to vector<8x256xf32>
    %192 = arith.addf %190, %191 : vector<8x256xf32>
    %c8_74 = arith.constant 8 : index
    %c0_75 = arith.constant 0 : index
    %193 = vector.load %arg18[%c8_74, %c0_75] : memref<64x256xf32, #tpu.memory_space<vmem>>, vector<8x256xf32>
    tpu.vector_store %arg18[%c8_74, %c0_75], %192 {strides = array<i32>} : memref<64x256xf32, #tpu.memory_space<vmem>>, vector<8x256xf32>,
    %194 = vector.extract_strided_slice %183 {offsets = [16, 0], sizes = [8, 256], strides = [1, 1]} : vector<64x256xf32> to vector<8x256xf32>
    %195 = vector.extract_strided_slice %185 {offsets = [40, 0], sizes = [8, 256], strides = [1, 1]} : vector<64x256xf32> to vector<8x256xf32>
    %196 = arith.addf %194, %195 : vector<8x256xf32>
    %c16_76 = arith.constant 16 : index
    %c0_77 = arith.constant 0 : index
    %197 = vector.load %arg18[%c16_76, %c0_77] : memref<64x256xf32, #tpu.memory_space<vmem>>, vector<8x256xf32>
    tpu.vector_store %arg18[%c16_76, %c0_77], %196 {strides = array<i32>} : memref<64x256xf32, #tpu.memory_space<vmem>>, vector<8x256xf32>,
    %198 = vector.extract_strided_slice %183 {offsets = [24, 0], sizes = [8, 256], strides = [1, 1]} : vector<64x256xf32> to vector<8x256xf32>
    %199 = vector.extract_strided_slice %185 {offsets = [32, 0], sizes = [8, 256], strides = [1, 1]} : vector<64x256xf32> to vector<8x256xf32>
    %200 = arith.addf %198, %199 : vector<8x256xf32>
    %c24_78 = arith.constant 24 : index
    %c0_79 = arith.constant 0 : index
    %201 = vector.load %arg18[%c24_78, %c0_79] : memref<64x256xf32, #tpu.memory_space<vmem>>, vector<8x256xf32>
    tpu.vector_store %arg18[%c24_78, %c0_79], %200 {strides = array<i32>} : memref<64x256xf32, #tpu.memory_space<vmem>>, vector<8x256xf32>,
    %202 = vector.extract_strided_slice %183 {offsets = [32, 0], sizes = [8, 256], strides = [1, 1]} : vector<64x256xf32> to vector<8x256xf32>
    %203 = vector.extract_strided_slice %185 {offsets = [24, 0], sizes = [8, 256], strides = [1, 1]} : vector<64x256xf32> to vector<8x256xf32>
    %204 = arith.addf %202, %203 : vector<8x256xf32>
    %c32_80 = arith.constant 32 : index
    %c0_81 = arith.constant 0 : index
    %205 = vector.load %arg18[%c32_80, %c0_81] : memref<64x256xf32, #tpu.memory_space<vmem>>, vector<8x256xf32>
    tpu.vector_store %arg18[%c32_80, %c0_81], %204 {strides = array<i32>} : memref<64x256xf32, #tpu.memory_space<vmem>>, vector<8x256xf32>,
    %206 = vector.extract_strided_slice %183 {offsets = [40, 0], sizes = [8, 256], strides = [1, 1]} : vector<64x256xf32> to vector<8x256xf32>
    %207 = vector.extract_strided_slice %185 {offsets = [16, 0], sizes = [8, 256], strides = [1, 1]} : vector<64x256xf32> to vector<8x256xf32>
    %208 = arith.addf %206, %207 : vector<8x256xf32>
    %c40_82 = arith.constant 40 : index
    %c0_83 = arith.constant 0 : index
    %209 = vector.load %arg18[%c40_82, %c0_83] : memref<64x256xf32, #tpu.memory_space<vmem>>, vector<8x256xf32>
    tpu.vector_store %arg18[%c40_82, %c0_83], %208 {strides = array<i32>} : memref<64x256xf32, #tpu.memory_space<vmem>>, vector<8x256xf32>,
    %210 = vector.extract_strided_slice %183 {offsets = [48, 0], sizes = [8, 256], strides = [1, 1]} : vector<64x256xf32> to vector<8x256xf32>
    %211 = vector.extract_strided_slice %185 {offsets = [8, 0], sizes = [8, 256], strides = [1, 1]} : vector<64x256xf32> to vector<8x256xf32>
    %212 = arith.addf %210, %211 : vector<8x256xf32>
    %c48_84 = arith.constant 48 : index
    %c0_85 = arith.constant 0 : index
    %213 = vector.load %arg18[%c48_84, %c0_85] : memref<64x256xf32, #tpu.memory_space<vmem>>, vector<8x256xf32>
    tpu.vector_store %arg18[%c48_84, %c0_85], %212 {strides = array<i32>} : memref<64x256xf32, #tpu.memory_space<vmem>>, vector<8x256xf32>,
    %214 = vector.extract_strided_slice %183 {offsets = [56, 0], sizes = [8, 256], strides = [1, 1]} : vector<64x256xf32> to vector<8x256xf32>
    %215 = vector.extract_strided_slice %185 {offsets = [0, 0], sizes = [8, 256], strides = [1, 1]} : vector<64x256xf32> to vector<8x256xf32>
    %216 = arith.addf %214, %215 : vector<8x256xf32>
    %c56_86 = arith.constant 56 : index
    %c0_87 = arith.constant 0 : index
    %217 = vector.load %arg18[%c56_86, %c0_87] : memref<64x256xf32, #tpu.memory_space<vmem>>, vector<8x256xf32>
    tpu.vector_store %arg18[%c56_86, %c0_87], %216 {strides = array<i32>} : memref<64x256xf32, #tpu.memory_space<vmem>>, vector<8x256xf32>,
    %c0_88 = arith.constant 0 : index
    %c0_89 = arith.constant 0 : index
    %218 = vector.load %arg11[%c0_88, %c0_89] : memref<64x256xf32, #tpu.memory_space<vmem>>, vector<64x256xf32>
    %cst_90 = arith.constant 0.000000e+00 : f32
    %219 = vector.broadcast %cst_90 : f32 to vector<8x64xf32>
    %cst_91 = arith.constant 0.000000e+00 : f32
    %220 = vector.broadcast %cst_91 : f32 to vector<8x64xf32>
    %c0_92 = arith.constant 0 : index
    %c0_93 = arith.constant 0 : index
    %221 = vector.load %arg18[%c0_92, %c0_93] : memref<64x256xf32, #tpu.memory_space<vmem>>, vector<8x256xf32>
    %cst_94 = arith.constant dense<0.000000e+00> : vector<8x256xf32>
    %222 = tpu.matmul %219, %218, %cst_94 {dimension_numbers = #tpu.dot_dimension_numbers<[1], [0], [0], [1], [0, 0, 1, 1], [], []>} : vector<8x64xf32>, vector<64x256xf32>, vector<8x256xf32> -> vector<8x256xf32>
    %223 = arith.addf %221, %222 : vector<8x256xf32>
    %224 = math.tanh %223 : vector<8x256xf32>
    %225 = vector.extract_strided_slice %224 {offsets = [0, 0], sizes = [8, 192], strides = [1, 1]} : vector<8x256xf32> to vector<8x192xf32>
    %cst_95 = arith.constant 5.000000e-01 : f32
    %226 = vector.broadcast %cst_95 : f32 to vector<8x192xf32>
    %227 = arith.mulf %225, %226 : vector<8x192xf32>
    %cst_96 = arith.constant 5.000000e-01 : f32
    %228 = vector.broadcast %cst_96 : f32 to vector<8x192xf32>
    %229 = arith.addf %227, %228 : vector<8x192xf32>
    %230 = vector.extract_strided_slice %229 {offsets = [0, 0], sizes = [8, 64], strides = [1, 1]} : vector<8x192xf32> to vector<8x64xf32>
    %231 = vector.extract_strided_slice %229 {offsets = [0, 64], sizes = [8, 64], strides = [1, 1]} : vector<8x192xf32> to vector<8x64xf32>
    %232 = vector.extract_strided_slice %229 {offsets = [0, 128], sizes = [8, 64], strides = [1, 1]} : vector<8x192xf32> to vector<8x64xf32>
    %233 = vector.extract_strided_slice %224 {offsets = [0, 192], sizes = [8, 64], strides = [1, 1]} : vector<8x256xf32> to vector<8x64xf32>
    %234 = arith.mulf %231, %220 : vector<8x64xf32>
    %235 = arith.mulf %230, %233 : vector<8x64xf32>
    %236 = arith.addf %234, %235 : vector<8x64xf32>
    %237 = math.tanh %236 : vector<8x64xf32>
    %238 = arith.mulf %232, %237 : vector<8x64xf32>
    %c0_97 = arith.constant 0 : index
    %c0_98 = arith.constant 0 : index
    %239 = vector.load %arg17[%c0_97, %c0_98] : memref<64x64xf32, #tpu.memory_space<vmem>>, vector<8x64xf32>
    tpu.vector_store %arg17[%c0_97, %c0_98], %238 {strides = array<i32>} : memref<64x64xf32, #tpu.memory_space<vmem>>, vector<8x64xf32>,
    %c8_99 = arith.constant 8 : index
    %c0_100 = arith.constant 0 : index
    %240 = vector.load %arg18[%c8_99, %c0_100] : memref<64x256xf32, #tpu.memory_space<vmem>>, vector<8x256xf32>
    %cst_101 = arith.constant dense<0.000000e+00> : vector<8x256xf32>
    %241 = tpu.matmul %238, %218, %cst_101 {dimension_numbers = #tpu.dot_dimension_numbers<[1], [0], [0], [1], [0, 0, 1, 1], [], []>} : vector<8x64xf32>, vector<64x256xf32>, vector<8x256xf32> -> vector<8x256xf32>
    %242 = arith.addf %240, %241 : vector<8x256xf32>
    %243 = math.tanh %242 : vector<8x256xf32>
    %244 = vector.extract_strided_slice %243 {offsets = [0, 0], sizes = [8, 192], strides = [1, 1]} : vector<8x256xf32> to vector<8x192xf32>
    %cst_102 = arith.constant 5.000000e-01 : f32
    %245 = vector.broadcast %cst_102 : f32 to vector<8x192xf32>
    %246 = arith.mulf %244, %245 : vector<8x192xf32>
    %cst_103 = arith.constant 5.000000e-01 : f32
    %247 = vector.broadcast %cst_103 : f32 to vector<8x192xf32>
    %248 = arith.addf %246, %247 : vector<8x192xf32>
    %249 = vector.extract_strided_slice %248 {offsets = [0, 0], sizes = [8, 64], strides = [1, 1]} : vector<8x192xf32> to vector<8x64xf32>
    %250 = vector.extract_strided_slice %248 {offsets = [0, 64], sizes = [8, 64], strides = [1, 1]} : vector<8x192xf32> to vector<8x64xf32>
    %251 = vector.extract_strided_slice %248 {offsets = [0, 128], sizes = [8, 64], strides = [1, 1]} : vector<8x192xf32> to vector<8x64xf32>
    %252 = vector.extract_strided_slice %243 {offsets = [0, 192], sizes = [8, 64], strides = [1, 1]} : vector<8x256xf32> to vector<8x64xf32>
    %253 = arith.mulf %250, %236 : vector<8x64xf32>
    %254 = arith.mulf %249, %252 : vector<8x64xf32>
    %255 = arith.addf %253, %254 : vector<8x64xf32>
    %256 = math.tanh %255 : vector<8x64xf32>
    %257 = arith.mulf %251, %256 : vector<8x64xf32>
    %c8_104 = arith.constant 8 : index
    %c0_105 = arith.constant 0 : index
    %258 = vector.load %arg17[%c8_104, %c0_105] : memref<64x64xf32, #tpu.memory_space<vmem>>, vector<8x64xf32>
    tpu.vector_store %arg17[%c8_104, %c0_105], %257 {strides = array<i32>} : memref<64x64xf32, #tpu.memory_space<vmem>>, vector<8x64xf32>,
    %c16_106 = arith.constant 16 : index
    %c0_107 = arith.constant 0 : index
    %259 = vector.load %arg18[%c16_106, %c0_107] : memref<64x256xf32, #tpu.memory_space<vmem>>, vector<8x256xf32>
    %cst_108 = arith.constant dense<0.000000e+00> : vector<8x256xf32>
    %260 = tpu.matmul %257, %218, %cst_108 {dimension_numbers = #tpu.dot_dimension_numbers<[1], [0], [0], [1], [0, 0, 1, 1], [], []>} : vector<8x64xf32>, vector<64x256xf32>, vector<8x256xf32> -> vector<8x256xf32>
    %261 = arith.addf %259, %260 : vector<8x256xf32>
    %262 = math.tanh %261 : vector<8x256xf32>
    %263 = vector.extract_strided_slice %262 {offsets = [0, 0], sizes = [8, 192], strides = [1, 1]} : vector<8x256xf32> to vector<8x192xf32>
    %cst_109 = arith.constant 5.000000e-01 : f32
    %264 = vector.broadcast %cst_109 : f32 to vector<8x192xf32>
    %265 = arith.mulf %263, %264 : vector<8x192xf32>
    %cst_110 = arith.constant 5.000000e-01 : f32
    %266 = vector.broadcast %cst_110 : f32 to vector<8x192xf32>
    %267 = arith.addf %265, %266 : vector<8x192xf32>
    %268 = vector.extract_strided_slice %267 {offsets = [0, 0], sizes = [8, 64], strides = [1, 1]} : vector<8x192xf32> to vector<8x64xf32>
    %269 = vector.extract_strided_slice %267 {offsets = [0, 64], sizes = [8, 64], strides = [1, 1]} : vector<8x192xf32> to vector<8x64xf32>
    %270 = vector.extract_strided_slice %267 {offsets = [0, 128], sizes = [8, 64], strides = [1, 1]} : vector<8x192xf32> to vector<8x64xf32>
    %271 = vector.extract_strided_slice %262 {offsets = [0, 192], sizes = [8, 64], strides = [1, 1]} : vector<8x256xf32> to vector<8x64xf32>
    %272 = arith.mulf %269, %255 : vector<8x64xf32>
    %273 = arith.mulf %268, %271 : vector<8x64xf32>
    %274 = arith.addf %272, %273 : vector<8x64xf32>
    %275 = math.tanh %274 : vector<8x64xf32>
    %276 = arith.mulf %270, %275 : vector<8x64xf32>
    %c16_111 = arith.constant 16 : index
    %c0_112 = arith.constant 0 : index
    %277 = vector.load %arg17[%c16_111, %c0_112] : memref<64x64xf32, #tpu.memory_space<vmem>>, vector<8x64xf32>
    tpu.vector_store %arg17[%c16_111, %c0_112], %276 {strides = array<i32>} : memref<64x64xf32, #tpu.memory_space<vmem>>, vector<8x64xf32>,
    %c24_113 = arith.constant 24 : index
    %c0_114 = arith.constant 0 : index
    %278 = vector.load %arg18[%c24_113, %c0_114] : memref<64x256xf32, #tpu.memory_space<vmem>>, vector<8x256xf32>
    %cst_115 = arith.constant dense<0.000000e+00> : vector<8x256xf32>
    %279 = tpu.matmul %276, %218, %cst_115 {dimension_numbers = #tpu.dot_dimension_numbers<[1], [0], [0], [1], [0, 0, 1, 1], [], []>} : vector<8x64xf32>, vector<64x256xf32>, vector<8x256xf32> -> vector<8x256xf32>
    %280 = arith.addf %278, %279 : vector<8x256xf32>
    %281 = math.tanh %280 : vector<8x256xf32>
    %282 = vector.extract_strided_slice %281 {offsets = [0, 0], sizes = [8, 192], strides = [1, 1]} : vector<8x256xf32> to vector<8x192xf32>
    %cst_116 = arith.constant 5.000000e-01 : f32
    %283 = vector.broadcast %cst_116 : f32 to vector<8x192xf32>
    %284 = arith.mulf %282, %283 : vector<8x192xf32>
    %cst_117 = arith.constant 5.000000e-01 : f32
    %285 = vector.broadcast %cst_117 : f32 to vector<8x192xf32>
    %286 = arith.addf %284, %285 : vector<8x192xf32>
    %287 = vector.extract_strided_slice %286 {offsets = [0, 0], sizes = [8, 64], strides = [1, 1]} : vector<8x192xf32> to vector<8x64xf32>
    %288 = vector.extract_strided_slice %286 {offsets = [0, 64], sizes = [8, 64], strides = [1, 1]} : vector<8x192xf32> to vector<8x64xf32>
    %289 = vector.extract_strided_slice %286 {offsets = [0, 128], sizes = [8, 64], strides = [1, 1]} : vector<8x192xf32> to vector<8x64xf32>
    %290 = vector.extract_strided_slice %281 {offsets = [0, 192], sizes = [8, 64], strides = [1, 1]} : vector<8x256xf32> to vector<8x64xf32>
    %291 = arith.mulf %288, %274 : vector<8x64xf32>
    %292 = arith.mulf %287, %290 : vector<8x64xf32>
    %293 = arith.addf %291, %292 : vector<8x64xf32>
    %294 = math.tanh %293 : vector<8x64xf32>
    %295 = arith.mulf %289, %294 : vector<8x64xf32>
    %c24_118 = arith.constant 24 : index
    %c0_119 = arith.constant 0 : index
    %296 = vector.load %arg17[%c24_118, %c0_119] : memref<64x64xf32, #tpu.memory_space<vmem>>, vector<8x64xf32>
    tpu.vector_store %arg17[%c24_118, %c0_119], %295 {strides = array<i32>} : memref<64x64xf32, #tpu.memory_space<vmem>>, vector<8x64xf32>,
    %c32_120 = arith.constant 32 : index
    %c0_121 = arith.constant 0 : index
    %297 = vector.load %arg18[%c32_120, %c0_121] : memref<64x256xf32, #tpu.memory_space<vmem>>, vector<8x256xf32>
    %cst_122 = arith.constant dense<0.000000e+00> : vector<8x256xf32>
    %298 = tpu.matmul %295, %218, %cst_122 {dimension_numbers = #tpu.dot_dimension_numbers<[1], [0], [0], [1], [0, 0, 1, 1], [], []>} : vector<8x64xf32>, vector<64x256xf32>, vector<8x256xf32> -> vector<8x256xf32>
    %299 = arith.addf %297, %298 : vector<8x256xf32>
    %300 = math.tanh %299 : vector<8x256xf32>
    %301 = vector.extract_strided_slice %300 {offsets = [0, 0], sizes = [8, 192], strides = [1, 1]} : vector<8x256xf32> to vector<8x192xf32>
    %cst_123 = arith.constant 5.000000e-01 : f32
    %302 = vector.broadcast %cst_123 : f32 to vector<8x192xf32>
    %303 = arith.mulf %301, %302 : vector<8x192xf32>
    %cst_124 = arith.constant 5.000000e-01 : f32
    %304 = vector.broadcast %cst_124 : f32 to vector<8x192xf32>
    %305 = arith.addf %303, %304 : vector<8x192xf32>
    %306 = vector.extract_strided_slice %305 {offsets = [0, 0], sizes = [8, 64], strides = [1, 1]} : vector<8x192xf32> to vector<8x64xf32>
    %307 = vector.extract_strided_slice %305 {offsets = [0, 64], sizes = [8, 64], strides = [1, 1]} : vector<8x192xf32> to vector<8x64xf32>
    %308 = vector.extract_strided_slice %305 {offsets = [0, 128], sizes = [8, 64], strides = [1, 1]} : vector<8x192xf32> to vector<8x64xf32>
    %309 = vector.extract_strided_slice %300 {offsets = [0, 192], sizes = [8, 64], strides = [1, 1]} : vector<8x256xf32> to vector<8x64xf32>
    %310 = arith.mulf %307, %293 : vector<8x64xf32>
    %311 = arith.mulf %306, %309 : vector<8x64xf32>
    %312 = arith.addf %310, %311 : vector<8x64xf32>
    %313 = math.tanh %312 : vector<8x64xf32>
    %314 = arith.mulf %308, %313 : vector<8x64xf32>
    %c32_125 = arith.constant 32 : index
    %c0_126 = arith.constant 0 : index
    %315 = vector.load %arg17[%c32_125, %c0_126] : memref<64x64xf32, #tpu.memory_space<vmem>>, vector<8x64xf32>
    tpu.vector_store %arg17[%c32_125, %c0_126], %314 {strides = array<i32>} : memref<64x64xf32, #tpu.memory_space<vmem>>, vector<8x64xf32>,
    %c40_127 = arith.constant 40 : index
    %c0_128 = arith.constant 0 : index
    %316 = vector.load %arg18[%c40_127, %c0_128] : memref<64x256xf32, #tpu.memory_space<vmem>>, vector<8x256xf32>
    %cst_129 = arith.constant dense<0.000000e+00> : vector<8x256xf32>
    %317 = tpu.matmul %314, %218, %cst_129 {dimension_numbers = #tpu.dot_dimension_numbers<[1], [0], [0], [1], [0, 0, 1, 1], [], []>} : vector<8x64xf32>, vector<64x256xf32>, vector<8x256xf32> -> vector<8x256xf32>
    %318 = arith.addf %316, %317 : vector<8x256xf32>
    %319 = math.tanh %318 : vector<8x256xf32>
    %320 = vector.extract_strided_slice %319 {offsets = [0, 0], sizes = [8, 192], strides = [1, 1]} : vector<8x256xf32> to vector<8x192xf32>
    %cst_130 = arith.constant 5.000000e-01 : f32
    %321 = vector.broadcast %cst_130 : f32 to vector<8x192xf32>
    %322 = arith.mulf %320, %321 : vector<8x192xf32>
    %cst_131 = arith.constant 5.000000e-01 : f32
    %323 = vector.broadcast %cst_131 : f32 to vector<8x192xf32>
    %324 = arith.addf %322, %323 : vector<8x192xf32>
    %325 = vector.extract_strided_slice %324 {offsets = [0, 0], sizes = [8, 64], strides = [1, 1]} : vector<8x192xf32> to vector<8x64xf32>
    %326 = vector.extract_strided_slice %324 {offsets = [0, 64], sizes = [8, 64], strides = [1, 1]} : vector<8x192xf32> to vector<8x64xf32>
    %327 = vector.extract_strided_slice %324 {offsets = [0, 128], sizes = [8, 64], strides = [1, 1]} : vector<8x192xf32> to vector<8x64xf32>
    %328 = vector.extract_strided_slice %319 {offsets = [0, 192], sizes = [8, 64], strides = [1, 1]} : vector<8x256xf32> to vector<8x64xf32>
    %329 = arith.mulf %326, %312 : vector<8x64xf32>
    %330 = arith.mulf %325, %328 : vector<8x64xf32>
    %331 = arith.addf %329, %330 : vector<8x64xf32>
    %332 = math.tanh %331 : vector<8x64xf32>
    %333 = arith.mulf %327, %332 : vector<8x64xf32>
    %c40_132 = arith.constant 40 : index
    %c0_133 = arith.constant 0 : index
    %334 = vector.load %arg17[%c40_132, %c0_133] : memref<64x64xf32, #tpu.memory_space<vmem>>, vector<8x64xf32>
    tpu.vector_store %arg17[%c40_132, %c0_133], %333 {strides = array<i32>} : memref<64x64xf32, #tpu.memory_space<vmem>>, vector<8x64xf32>,
    %c48_134 = arith.constant 48 : index
    %c0_135 = arith.constant 0 : index
    %335 = vector.load %arg18[%c48_134, %c0_135] : memref<64x256xf32, #tpu.memory_space<vmem>>, vector<8x256xf32>
    %cst_136 = arith.constant dense<0.000000e+00> : vector<8x256xf32>
    %336 = tpu.matmul %333, %218, %cst_136 {dimension_numbers = #tpu.dot_dimension_numbers<[1], [0], [0], [1], [0, 0, 1, 1], [], []>} : vector<8x64xf32>, vector<64x256xf32>, vector<8x256xf32> -> vector<8x256xf32>
    %337 = arith.addf %335, %336 : vector<8x256xf32>
    %338 = math.tanh %337 : vector<8x256xf32>
    %339 = vector.extract_strided_slice %338 {offsets = [0, 0], sizes = [8, 192], strides = [1, 1]} : vector<8x256xf32> to vector<8x192xf32>
    %cst_137 = arith.constant 5.000000e-01 : f32
    %340 = vector.broadcast %cst_137 : f32 to vector<8x192xf32>
    %341 = arith.mulf %339, %340 : vector<8x192xf32>
    %cst_138 = arith.constant 5.000000e-01 : f32
    %342 = vector.broadcast %cst_138 : f32 to vector<8x192xf32>
    %343 = arith.addf %341, %342 : vector<8x192xf32>
    %344 = vector.extract_strided_slice %343 {offsets = [0, 0], sizes = [8, 64], strides = [1, 1]} : vector<8x192xf32> to vector<8x64xf32>
    %345 = vector.extract_strided_slice %343 {offsets = [0, 64], sizes = [8, 64], strides = [1, 1]} : vector<8x192xf32> to vector<8x64xf32>
    %346 = vector.extract_strided_slice %343 {offsets = [0, 128], sizes = [8, 64], strides = [1, 1]} : vector<8x192xf32> to vector<8x64xf32>
    %347 = vector.extract_strided_slice %338 {offsets = [0, 192], sizes = [8, 64], strides = [1, 1]} : vector<8x256xf32> to vector<8x64xf32>
    %348 = arith.mulf %345, %331 : vector<8x64xf32>
    %349 = arith.mulf %344, %347 : vector<8x64xf32>
    %350 = arith.addf %348, %349 : vector<8x64xf32>
    %351 = math.tanh %350 : vector<8x64xf32>
    %352 = arith.mulf %346, %351 : vector<8x64xf32>
    %c48_139 = arith.constant 48 : index
    %c0_140 = arith.constant 0 : index
    %353 = vector.load %arg17[%c48_139, %c0_140] : memref<64x64xf32, #tpu.memory_space<vmem>>, vector<8x64xf32>
    tpu.vector_store %arg17[%c48_139, %c0_140], %352 {strides = array<i32>} : memref<64x64xf32, #tpu.memory_space<vmem>>, vector<8x64xf32>,
    %c56_141 = arith.constant 56 : index
    %c0_142 = arith.constant 0 : index
    %354 = vector.load %arg18[%c56_141, %c0_142] : memref<64x256xf32, #tpu.memory_space<vmem>>, vector<8x256xf32>
    %cst_143 = arith.constant dense<0.000000e+00> : vector<8x256xf32>
    %355 = tpu.matmul %352, %218, %cst_143 {dimension_numbers = #tpu.dot_dimension_numbers<[1], [0], [0], [1], [0, 0, 1, 1], [], []>} : vector<8x64xf32>, vector<64x256xf32>, vector<8x256xf32> -> vector<8x256xf32>
    %356 = arith.addf %354, %355 : vector<8x256xf32>
    %357 = math.tanh %356 : vector<8x256xf32>
    %358 = vector.extract_strided_slice %357 {offsets = [0, 0], sizes = [8, 192], strides = [1, 1]} : vector<8x256xf32> to vector<8x192xf32>
    %cst_144 = arith.constant 5.000000e-01 : f32
    %359 = vector.broadcast %cst_144 : f32 to vector<8x192xf32>
    %360 = arith.mulf %358, %359 : vector<8x192xf32>
    %cst_145 = arith.constant 5.000000e-01 : f32
    %361 = vector.broadcast %cst_145 : f32 to vector<8x192xf32>
    %362 = arith.addf %360, %361 : vector<8x192xf32>
    %363 = vector.extract_strided_slice %362 {offsets = [0, 0], sizes = [8, 64], strides = [1, 1]} : vector<8x192xf32> to vector<8x64xf32>
    %364 = vector.extract_strided_slice %362 {offsets = [0, 64], sizes = [8, 64], strides = [1, 1]} : vector<8x192xf32> to vector<8x64xf32>
    %365 = vector.extract_strided_slice %362 {offsets = [0, 128], sizes = [8, 64], strides = [1, 1]} : vector<8x192xf32> to vector<8x64xf32>
    %366 = vector.extract_strided_slice %357 {offsets = [0, 192], sizes = [8, 64], strides = [1, 1]} : vector<8x256xf32> to vector<8x64xf32>
    %367 = arith.mulf %364, %350 : vector<8x64xf32>
    %368 = arith.mulf %363, %366 : vector<8x64xf32>
    %369 = arith.addf %367, %368 : vector<8x64xf32>
    %370 = math.tanh %369 : vector<8x64xf32>
    %371 = arith.mulf %365, %370 : vector<8x64xf32>
    %c56_146 = arith.constant 56 : index
    %c0_147 = arith.constant 0 : index
    %372 = vector.load %arg17[%c56_146, %c0_147] : memref<64x64xf32, #tpu.memory_space<vmem>>, vector<8x64xf32>
    tpu.vector_store %arg17[%c56_146, %c0_147], %371 {strides = array<i32>} : memref<64x64xf32, #tpu.memory_space<vmem>>, vector<8x64xf32>,
    %c0_148 = arith.constant 0 : index
    %c0_149 = arith.constant 0 : index
    %373 = vector.load %arg17[%c0_148, %c0_149] : memref<64x64xf32, #tpu.memory_space<vmem>>, vector<64x64xf32>
    %c0_150 = arith.constant 0 : index
    %c0_151 = arith.constant 0 : index
    %374 = vector.load %arg7[%c0_150, %c0_151] : memref<64x256xf32, #tpu.memory_space<vmem>>, vector<64x256xf32>
    %cst_152 = arith.constant dense<0.000000e+00> : vector<64x256xf32>
    %375 = tpu.matmul %373, %374, %cst_152 {dimension_numbers = #tpu.dot_dimension_numbers<[1], [0], [0], [1], [0, 0, 1, 1], [], []>} : vector<64x64xf32>, vector<64x256xf32>, vector<64x256xf32> -> vector<64x256xf32>
    %c0_153 = arith.constant 0 : index
    %c0_154 = arith.constant 0 : index
    %376 = vector.load %arg9[%c0_153, %c0_154] : memref<1x256xf32, #tpu.memory_space<vmem>>, vector<1x256xf32>
    %377 = vector.broadcast %376 : vector<1x256xf32> to vector<64x256xf32>
    %378 = arith.addf %375, %377 : vector<64x256xf32>
    %c0_155 = arith.constant 0 : index
    %c0_156 = arith.constant 0 : index
    %379 = vector.load %arg8[%c0_155, %c0_156] : memref<64x256xf32, #tpu.memory_space<vmem>>, vector<64x256xf32>
    %cst_157 = arith.constant dense<0.000000e+00> : vector<64x256xf32>
    %380 = tpu.matmul %373, %379, %cst_157 {dimension_numbers = #tpu.dot_dimension_numbers<[1], [0], [0], [1], [0, 0, 1, 1], [], []>} : vector<64x64xf32>, vector<64x256xf32>, vector<64x256xf32> -> vector<64x256xf32>
    %381 = vector.extract_strided_slice %378 {offsets = [0, 0], sizes = [8, 256], strides = [1, 1]} : vector<64x256xf32> to vector<8x256xf32>
    %382 = vector.extract_strided_slice %380 {offsets = [56, 0], sizes = [8, 256], strides = [1, 1]} : vector<64x256xf32> to vector<8x256xf32>
    %383 = arith.addf %381, %382 : vector<8x256xf32>
    %c0_158 = arith.constant 0 : index
    %c0_159 = arith.constant 0 : index
    %384 = vector.load %arg18[%c0_158, %c0_159] : memref<64x256xf32, #tpu.memory_space<vmem>>, vector<8x256xf32>
    tpu.vector_store %arg18[%c0_158, %c0_159], %383 {strides = array<i32>} : memref<64x256xf32, #tpu.memory_space<vmem>>, vector<8x256xf32>,
    %385 = vector.extract_strided_slice %378 {offsets = [8, 0], sizes = [8, 256], strides = [1, 1]} : vector<64x256xf32> to vector<8x256xf32>
    %386 = vector.extract_strided_slice %380 {offsets = [48, 0], sizes = [8, 256], strides = [1, 1]} : vector<64x256xf32> to vector<8x256xf32>
    %387 = arith.addf %385, %386 : vector<8x256xf32>
    %c8_160 = arith.constant 8 : index
    %c0_161 = arith.constant 0 : index
    %388 = vector.load %arg18[%c8_160, %c0_161] : memref<64x256xf32, #tpu.memory_space<vmem>>, vector<8x256xf32>
    tpu.vector_store %arg18[%c8_160, %c0_161], %387 {strides = array<i32>} : memref<64x256xf32, #tpu.memory_space<vmem>>, vector<8x256xf32>,
    %389 = vector.extract_strided_slice %378 {offsets = [16, 0], sizes = [8, 256], strides = [1, 1]} : vector<64x256xf32> to vector<8x256xf32>
    %390 = vector.extract_strided_slice %380 {offsets = [40, 0], sizes = [8, 256], strides = [1, 1]} : vector<64x256xf32> to vector<8x256xf32>
    %391 = arith.addf %389, %390 : vector<8x256xf32>
    %c16_162 = arith.constant 16 : index
    %c0_163 = arith.constant 0 : index
    %392 = vector.load %arg18[%c16_162, %c0_163] : memref<64x256xf32, #tpu.memory_space<vmem>>, vector<8x256xf32>
    tpu.vector_store %arg18[%c16_162, %c0_163], %391 {strides = array<i32>} : memref<64x256xf32, #tpu.memory_space<vmem>>, vector<8x256xf32>,
    %393 = vector.extract_strided_slice %378 {offsets = [24, 0], sizes = [8, 256], strides = [1, 1]} : vector<64x256xf32> to vector<8x256xf32>
    %394 = vector.extract_strided_slice %380 {offsets = [32, 0], sizes = [8, 256], strides = [1, 1]} : vector<64x256xf32> to vector<8x256xf32>
    %395 = arith.addf %393, %394 : vector<8x256xf32>
    %c24_164 = arith.constant 24 : index
    %c0_165 = arith.constant 0 : index
    %396 = vector.load %arg18[%c24_164, %c0_165] : memref<64x256xf32, #tpu.memory_space<vmem>>, vector<8x256xf32>
    tpu.vector_store %arg18[%c24_164, %c0_165], %395 {strides = array<i32>} : memref<64x256xf32, #tpu.memory_space<vmem>>, vector<8x256xf32>,
    %397 = vector.extract_strided_slice %378 {offsets = [32, 0], sizes = [8, 256], strides = [1, 1]} : vector<64x256xf32> to vector<8x256xf32>
    %398 = vector.extract_strided_slice %380 {offsets = [24, 0], sizes = [8, 256], strides = [1, 1]} : vector<64x256xf32> to vector<8x256xf32>
    %399 = arith.addf %397, %398 : vector<8x256xf32>
    %c32_166 = arith.constant 32 : index
    %c0_167 = arith.constant 0 : index
    %400 = vector.load %arg18[%c32_166, %c0_167] : memref<64x256xf32, #tpu.memory_space<vmem>>, vector<8x256xf32>
    tpu.vector_store %arg18[%c32_166, %c0_167], %399 {strides = array<i32>} : memref<64x256xf32, #tpu.memory_space<vmem>>, vector<8x256xf32>,
    %401 = vector.extract_strided_slice %378 {offsets = [40, 0], sizes = [8, 256], strides = [1, 1]} : vector<64x256xf32> to vector<8x256xf32>
    %402 = vector.extract_strided_slice %380 {offsets = [16, 0], sizes = [8, 256], strides = [1, 1]} : vector<64x256xf32> to vector<8x256xf32>
    %403 = arith.addf %401, %402 : vector<8x256xf32>
    %c40_168 = arith.constant 40 : index
    %c0_169 = arith.constant 0 : index
    %404 = vector.load %arg18[%c40_168, %c0_169] : memref<64x256xf32, #tpu.memory_space<vmem>>, vector<8x256xf32>
    tpu.vector_store %arg18[%c40_168, %c0_169], %403 {strides = array<i32>} : memref<64x256xf32, #tpu.memory_space<vmem>>, vector<8x256xf32>,
    %405 = vector.extract_strided_slice %378 {offsets = [48, 0], sizes = [8, 256], strides = [1, 1]} : vector<64x256xf32> to vector<8x256xf32>
    %406 = vector.extract_strided_slice %380 {offsets = [8, 0], sizes = [8, 256], strides = [1, 1]} : vector<64x256xf32> to vector<8x256xf32>
    %407 = arith.addf %405, %406 : vector<8x256xf32>
    %c48_170 = arith.constant 48 : index
    %c0_171 = arith.constant 0 : index
    %408 = vector.load %arg18[%c48_170, %c0_171] : memref<64x256xf32, #tpu.memory_space<vmem>>, vector<8x256xf32>
    tpu.vector_store %arg18[%c48_170, %c0_171], %407 {strides = array<i32>} : memref<64x256xf32, #tpu.memory_space<vmem>>, vector<8x256xf32>,
    %409 = vector.extract_strided_slice %378 {offsets = [56, 0], sizes = [8, 256], strides = [1, 1]} : vector<64x256xf32> to vector<8x256xf32>
    %410 = vector.extract_strided_slice %380 {offsets = [0, 0], sizes = [8, 256], strides = [1, 1]} : vector<64x256xf32> to vector<8x256xf32>
    %411 = arith.addf %409, %410 : vector<8x256xf32>
    %c56_172 = arith.constant 56 : index
    %c0_173 = arith.constant 0 : index
    %412 = vector.load %arg18[%c56_172, %c0_173] : memref<64x256xf32, #tpu.memory_space<vmem>>, vector<8x256xf32>
    tpu.vector_store %arg18[%c56_172, %c0_173], %411 {strides = array<i32>} : memref<64x256xf32, #tpu.memory_space<vmem>>, vector<8x256xf32>,
    %c0_174 = arith.constant 0 : index
    %c0_175 = arith.constant 0 : index
    %413 = vector.load %arg12[%c0_174, %c0_175] : memref<64x256xf32, #tpu.memory_space<vmem>>, vector<64x256xf32>
    %cst_176 = arith.constant 0.000000e+00 : f32
    %414 = vector.broadcast %cst_176 : f32 to vector<8x64xf32>
    %cst_177 = arith.constant 0.000000e+00 : f32
    %415 = vector.broadcast %cst_177 : f32 to vector<8x64xf32>
    %c0_178 = arith.constant 0 : index
    %c0_179 = arith.constant 0 : index
    %416 = vector.load %arg18[%c0_178, %c0_179] : memref<64x256xf32, #tpu.memory_space<vmem>>, vector<8x256xf32>
    %cst_180 = arith.constant dense<0.000000e+00> : vector<8x256xf32>
    %417 = tpu.matmul %414, %413, %cst_180 {dimension_numbers = #tpu.dot_dimension_numbers<[1], [0], [0], [1], [0, 0, 1, 1], [], []>} : vector<8x64xf32>, vector<64x256xf32>, vector<8x256xf32> -> vector<8x256xf32>
    %418 = arith.addf %416, %417 : vector<8x256xf32>
    %419 = math.tanh %418 : vector<8x256xf32>
    %420 = vector.extract_strided_slice %419 {offsets = [0, 0], sizes = [8, 192], strides = [1, 1]} : vector<8x256xf32> to vector<8x192xf32>
    %cst_181 = arith.constant 5.000000e-01 : f32
    %421 = vector.broadcast %cst_181 : f32 to vector<8x192xf32>
    %422 = arith.mulf %420, %421 : vector<8x192xf32>
    %cst_182 = arith.constant 5.000000e-01 : f32
    %423 = vector.broadcast %cst_182 : f32 to vector<8x192xf32>
    %424 = arith.addf %422, %423 : vector<8x192xf32>
    %425 = vector.extract_strided_slice %424 {offsets = [0, 0], sizes = [8, 64], strides = [1, 1]} : vector<8x192xf32> to vector<8x64xf32>
    %426 = vector.extract_strided_slice %424 {offsets = [0, 64], sizes = [8, 64], strides = [1, 1]} : vector<8x192xf32> to vector<8x64xf32>
    %427 = vector.extract_strided_slice %424 {offsets = [0, 128], sizes = [8, 64], strides = [1, 1]} : vector<8x192xf32> to vector<8x64xf32>
    %428 = vector.extract_strided_slice %419 {offsets = [0, 192], sizes = [8, 64], strides = [1, 1]} : vector<8x256xf32> to vector<8x64xf32>
    %429 = arith.mulf %426, %415 : vector<8x64xf32>
    %430 = arith.mulf %425, %428 : vector<8x64xf32>
    %431 = arith.addf %429, %430 : vector<8x64xf32>
    %432 = math.tanh %431 : vector<8x64xf32>
    %433 = arith.mulf %427, %432 : vector<8x64xf32>
    %c0_183 = arith.constant 0 : index
    %c0_184 = arith.constant 0 : index
    %434 = vector.load %arg17[%c0_183, %c0_184] : memref<64x64xf32, #tpu.memory_space<vmem>>, vector<8x64xf32>
    tpu.vector_store %arg17[%c0_183, %c0_184], %433 {strides = array<i32>} : memref<64x64xf32, #tpu.memory_space<vmem>>, vector<8x64xf32>,
    %c8_185 = arith.constant 8 : index
    %c0_186 = arith.constant 0 : index
    %435 = vector.load %arg18[%c8_185, %c0_186] : memref<64x256xf32, #tpu.memory_space<vmem>>, vector<8x256xf32>
    %cst_187 = arith.constant dense<0.000000e+00> : vector<8x256xf32>
    %436 = tpu.matmul %433, %413, %cst_187 {dimension_numbers = #tpu.dot_dimension_numbers<[1], [0], [0], [1], [0, 0, 1, 1], [], []>} : vector<8x64xf32>, vector<64x256xf32>, vector<8x256xf32> -> vector<8x256xf32>
    %437 = arith.addf %435, %436 : vector<8x256xf32>
    %438 = math.tanh %437 : vector<8x256xf32>
    %439 = vector.extract_strided_slice %438 {offsets = [0, 0], sizes = [8, 192], strides = [1, 1]} : vector<8x256xf32> to vector<8x192xf32>
    %cst_188 = arith.constant 5.000000e-01 : f32
    %440 = vector.broadcast %cst_188 : f32 to vector<8x192xf32>
    %441 = arith.mulf %439, %440 : vector<8x192xf32>
    %cst_189 = arith.constant 5.000000e-01 : f32
    %442 = vector.broadcast %cst_189 : f32 to vector<8x192xf32>
    %443 = arith.addf %441, %442 : vector<8x192xf32>
    %444 = vector.extract_strided_slice %443 {offsets = [0, 0], sizes = [8, 64], strides = [1, 1]} : vector<8x192xf32> to vector<8x64xf32>
    %445 = vector.extract_strided_slice %443 {offsets = [0, 64], sizes = [8, 64], strides = [1, 1]} : vector<8x192xf32> to vector<8x64xf32>
    %446 = vector.extract_strided_slice %443 {offsets = [0, 128], sizes = [8, 64], strides = [1, 1]} : vector<8x192xf32> to vector<8x64xf32>
    %447 = vector.extract_strided_slice %438 {offsets = [0, 192], sizes = [8, 64], strides = [1, 1]} : vector<8x256xf32> to vector<8x64xf32>
    %448 = arith.mulf %445, %431 : vector<8x64xf32>
    %449 = arith.mulf %444, %447 : vector<8x64xf32>
    %450 = arith.addf %448, %449 : vector<8x64xf32>
    %451 = math.tanh %450 : vector<8x64xf32>
    %452 = arith.mulf %446, %451 : vector<8x64xf32>
    %c8_190 = arith.constant 8 : index
    %c0_191 = arith.constant 0 : index
    %453 = vector.load %arg17[%c8_190, %c0_191] : memref<64x64xf32, #tpu.memory_space<vmem>>, vector<8x64xf32>
    tpu.vector_store %arg17[%c8_190, %c0_191], %452 {strides = array<i32>} : memref<64x64xf32, #tpu.memory_space<vmem>>, vector<8x64xf32>,
    %c16_192 = arith.constant 16 : index
    %c0_193 = arith.constant 0 : index
    %454 = vector.load %arg18[%c16_192, %c0_193] : memref<64x256xf32, #tpu.memory_space<vmem>>, vector<8x256xf32>
    %cst_194 = arith.constant dense<0.000000e+00> : vector<8x256xf32>
    %455 = tpu.matmul %452, %413, %cst_194 {dimension_numbers = #tpu.dot_dimension_numbers<[1], [0], [0], [1], [0, 0, 1, 1], [], []>} : vector<8x64xf32>, vector<64x256xf32>, vector<8x256xf32> -> vector<8x256xf32>
    %456 = arith.addf %454, %455 : vector<8x256xf32>
    %457 = math.tanh %456 : vector<8x256xf32>
    %458 = vector.extract_strided_slice %457 {offsets = [0, 0], sizes = [8, 192], strides = [1, 1]} : vector<8x256xf32> to vector<8x192xf32>
    %cst_195 = arith.constant 5.000000e-01 : f32
    %459 = vector.broadcast %cst_195 : f32 to vector<8x192xf32>
    %460 = arith.mulf %458, %459 : vector<8x192xf32>
    %cst_196 = arith.constant 5.000000e-01 : f32
    %461 = vector.broadcast %cst_196 : f32 to vector<8x192xf32>
    %462 = arith.addf %460, %461 : vector<8x192xf32>
    %463 = vector.extract_strided_slice %462 {offsets = [0, 0], sizes = [8, 64], strides = [1, 1]} : vector<8x192xf32> to vector<8x64xf32>
    %464 = vector.extract_strided_slice %462 {offsets = [0, 64], sizes = [8, 64], strides = [1, 1]} : vector<8x192xf32> to vector<8x64xf32>
    %465 = vector.extract_strided_slice %462 {offsets = [0, 128], sizes = [8, 64], strides = [1, 1]} : vector<8x192xf32> to vector<8x64xf32>
    %466 = vector.extract_strided_slice %457 {offsets = [0, 192], sizes = [8, 64], strides = [1, 1]} : vector<8x256xf32> to vector<8x64xf32>
    %467 = arith.mulf %464, %450 : vector<8x64xf32>
    %468 = arith.mulf %463, %466 : vector<8x64xf32>
    %469 = arith.addf %467, %468 : vector<8x64xf32>
    %470 = math.tanh %469 : vector<8x64xf32>
    %471 = arith.mulf %465, %470 : vector<8x64xf32>
    %c16_197 = arith.constant 16 : index
    %c0_198 = arith.constant 0 : index
    %472 = vector.load %arg17[%c16_197, %c0_198] : memref<64x64xf32, #tpu.memory_space<vmem>>, vector<8x64xf32>
    tpu.vector_store %arg17[%c16_197, %c0_198], %471 {strides = array<i32>} : memref<64x64xf32, #tpu.memory_space<vmem>>, vector<8x64xf32>,
    %c24_199 = arith.constant 24 : index
    %c0_200 = arith.constant 0 : index
    %473 = vector.load %arg18[%c24_199, %c0_200] : memref<64x256xf32, #tpu.memory_space<vmem>>, vector<8x256xf32>
    %cst_201 = arith.constant dense<0.000000e+00> : vector<8x256xf32>
    %474 = tpu.matmul %471, %413, %cst_201 {dimension_numbers = #tpu.dot_dimension_numbers<[1], [0], [0], [1], [0, 0, 1, 1], [], []>} : vector<8x64xf32>, vector<64x256xf32>, vector<8x256xf32> -> vector<8x256xf32>
    %475 = arith.addf %473, %474 : vector<8x256xf32>
    %476 = math.tanh %475 : vector<8x256xf32>
    %477 = vector.extract_strided_slice %476 {offsets = [0, 0], sizes = [8, 192], strides = [1, 1]} : vector<8x256xf32> to vector<8x192xf32>
    %cst_202 = arith.constant 5.000000e-01 : f32
    %478 = vector.broadcast %cst_202 : f32 to vector<8x192xf32>
    %479 = arith.mulf %477, %478 : vector<8x192xf32>
    %cst_203 = arith.constant 5.000000e-01 : f32
    %480 = vector.broadcast %cst_203 : f32 to vector<8x192xf32>
    %481 = arith.addf %479, %480 : vector<8x192xf32>
    %482 = vector.extract_strided_slice %481 {offsets = [0, 0], sizes = [8, 64], strides = [1, 1]} : vector<8x192xf32> to vector<8x64xf32>
    %483 = vector.extract_strided_slice %481 {offsets = [0, 64], sizes = [8, 64], strides = [1, 1]} : vector<8x192xf32> to vector<8x64xf32>
    %484 = vector.extract_strided_slice %481 {offsets = [0, 128], sizes = [8, 64], strides = [1, 1]} : vector<8x192xf32> to vector<8x64xf32>
    %485 = vector.extract_strided_slice %476 {offsets = [0, 192], sizes = [8, 64], strides = [1, 1]} : vector<8x256xf32> to vector<8x64xf32>
    %486 = arith.mulf %483, %469 : vector<8x64xf32>
    %487 = arith.mulf %482, %485 : vector<8x64xf32>
    %488 = arith.addf %486, %487 : vector<8x64xf32>
    %489 = math.tanh %488 : vector<8x64xf32>
    %490 = arith.mulf %484, %489 : vector<8x64xf32>
    %c24_204 = arith.constant 24 : index
    %c0_205 = arith.constant 0 : index
    %491 = vector.load %arg17[%c24_204, %c0_205] : memref<64x64xf32, #tpu.memory_space<vmem>>, vector<8x64xf32>
    tpu.vector_store %arg17[%c24_204, %c0_205], %490 {strides = array<i32>} : memref<64x64xf32, #tpu.memory_space<vmem>>, vector<8x64xf32>,
    %c32_206 = arith.constant 32 : index
    %c0_207 = arith.constant 0 : index
    %492 = vector.load %arg18[%c32_206, %c0_207] : memref<64x256xf32, #tpu.memory_space<vmem>>, vector<8x256xf32>
    %cst_208 = arith.constant dense<0.000000e+00> : vector<8x256xf32>
    %493 = tpu.matmul %490, %413, %cst_208 {dimension_numbers = #tpu.dot_dimension_numbers<[1], [0], [0], [1], [0, 0, 1, 1], [], []>} : vector<8x64xf32>, vector<64x256xf32>, vector<8x256xf32> -> vector<8x256xf32>
    %494 = arith.addf %492, %493 : vector<8x256xf32>
    %495 = math.tanh %494 : vector<8x256xf32>
    %496 = vector.extract_strided_slice %495 {offsets = [0, 0], sizes = [8, 192], strides = [1, 1]} : vector<8x256xf32> to vector<8x192xf32>
    %cst_209 = arith.constant 5.000000e-01 : f32
    %497 = vector.broadcast %cst_209 : f32 to vector<8x192xf32>
    %498 = arith.mulf %496, %497 : vector<8x192xf32>
    %cst_210 = arith.constant 5.000000e-01 : f32
    %499 = vector.broadcast %cst_210 : f32 to vector<8x192xf32>
    %500 = arith.addf %498, %499 : vector<8x192xf32>
    %501 = vector.extract_strided_slice %500 {offsets = [0, 0], sizes = [8, 64], strides = [1, 1]} : vector<8x192xf32> to vector<8x64xf32>
    %502 = vector.extract_strided_slice %500 {offsets = [0, 64], sizes = [8, 64], strides = [1, 1]} : vector<8x192xf32> to vector<8x64xf32>
    %503 = vector.extract_strided_slice %500 {offsets = [0, 128], sizes = [8, 64], strides = [1, 1]} : vector<8x192xf32> to vector<8x64xf32>
    %504 = vector.extract_strided_slice %495 {offsets = [0, 192], sizes = [8, 64], strides = [1, 1]} : vector<8x256xf32> to vector<8x64xf32>
    %505 = arith.mulf %502, %488 : vector<8x64xf32>
    %506 = arith.mulf %501, %504 : vector<8x64xf32>
    %507 = arith.addf %505, %506 : vector<8x64xf32>
    %508 = math.tanh %507 : vector<8x64xf32>
    %509 = arith.mulf %503, %508 : vector<8x64xf32>
    %c32_211 = arith.constant 32 : index
    %c0_212 = arith.constant 0 : index
    %510 = vector.load %arg17[%c32_211, %c0_212] : memref<64x64xf32, #tpu.memory_space<vmem>>, vector<8x64xf32>
    tpu.vector_store %arg17[%c32_211, %c0_212], %509 {strides = array<i32>} : memref<64x64xf32, #tpu.memory_space<vmem>>, vector<8x64xf32>,
    %c40_213 = arith.constant 40 : index
    %c0_214 = arith.constant 0 : index
    %511 = vector.load %arg18[%c40_213, %c0_214] : memref<64x256xf32, #tpu.memory_space<vmem>>, vector<8x256xf32>
    %cst_215 = arith.constant dense<0.000000e+00> : vector<8x256xf32>
    %512 = tpu.matmul %509, %413, %cst_215 {dimension_numbers = #tpu.dot_dimension_numbers<[1], [0], [0], [1], [0, 0, 1, 1], [], []>} : vector<8x64xf32>, vector<64x256xf32>, vector<8x256xf32> -> vector<8x256xf32>
    %513 = arith.addf %511, %512 : vector<8x256xf32>
    %514 = math.tanh %513 : vector<8x256xf32>
    %515 = vector.extract_strided_slice %514 {offsets = [0, 0], sizes = [8, 192], strides = [1, 1]} : vector<8x256xf32> to vector<8x192xf32>
    %cst_216 = arith.constant 5.000000e-01 : f32
    %516 = vector.broadcast %cst_216 : f32 to vector<8x192xf32>
    %517 = arith.mulf %515, %516 : vector<8x192xf32>
    %cst_217 = arith.constant 5.000000e-01 : f32
    %518 = vector.broadcast %cst_217 : f32 to vector<8x192xf32>
    %519 = arith.addf %517, %518 : vector<8x192xf32>
    %520 = vector.extract_strided_slice %519 {offsets = [0, 0], sizes = [8, 64], strides = [1, 1]} : vector<8x192xf32> to vector<8x64xf32>
    %521 = vector.extract_strided_slice %519 {offsets = [0, 64], sizes = [8, 64], strides = [1, 1]} : vector<8x192xf32> to vector<8x64xf32>
    %522 = vector.extract_strided_slice %519 {offsets = [0, 128], sizes = [8, 64], strides = [1, 1]} : vector<8x192xf32> to vector<8x64xf32>
    %523 = vector.extract_strided_slice %514 {offsets = [0, 192], sizes = [8, 64], strides = [1, 1]} : vector<8x256xf32> to vector<8x64xf32>
    %524 = arith.mulf %521, %507 : vector<8x64xf32>
    %525 = arith.mulf %520, %523 : vector<8x64xf32>
    %526 = arith.addf %524, %525 : vector<8x64xf32>
    %527 = math.tanh %526 : vector<8x64xf32>
    %528 = arith.mulf %522, %527 : vector<8x64xf32>
    %c40_218 = arith.constant 40 : index
    %c0_219 = arith.constant 0 : index
    %529 = vector.load %arg17[%c40_218, %c0_219] : memref<64x64xf32, #tpu.memory_space<vmem>>, vector<8x64xf32>
    tpu.vector_store %arg17[%c40_218, %c0_219], %528 {strides = array<i32>} : memref<64x64xf32, #tpu.memory_space<vmem>>, vector<8x64xf32>,
    %c48_220 = arith.constant 48 : index
    %c0_221 = arith.constant 0 : index
    %530 = vector.load %arg18[%c48_220, %c0_221] : memref<64x256xf32, #tpu.memory_space<vmem>>, vector<8x256xf32>
    %cst_222 = arith.constant dense<0.000000e+00> : vector<8x256xf32>
    %531 = tpu.matmul %528, %413, %cst_222 {dimension_numbers = #tpu.dot_dimension_numbers<[1], [0], [0], [1], [0, 0, 1, 1], [], []>} : vector<8x64xf32>, vector<64x256xf32>, vector<8x256xf32> -> vector<8x256xf32>
    %532 = arith.addf %530, %531 : vector<8x256xf32>
    %533 = math.tanh %532 : vector<8x256xf32>
    %534 = vector.extract_strided_slice %533 {offsets = [0, 0], sizes = [8, 192], strides = [1, 1]} : vector<8x256xf32> to vector<8x192xf32>
    %cst_223 = arith.constant 5.000000e-01 : f32
    %535 = vector.broadcast %cst_223 : f32 to vector<8x192xf32>
    %536 = arith.mulf %534, %535 : vector<8x192xf32>
    %cst_224 = arith.constant 5.000000e-01 : f32
    %537 = vector.broadcast %cst_224 : f32 to vector<8x192xf32>
    %538 = arith.addf %536, %537 : vector<8x192xf32>
    %539 = vector.extract_strided_slice %538 {offsets = [0, 0], sizes = [8, 64], strides = [1, 1]} : vector<8x192xf32> to vector<8x64xf32>
    %540 = vector.extract_strided_slice %538 {offsets = [0, 64], sizes = [8, 64], strides = [1, 1]} : vector<8x192xf32> to vector<8x64xf32>
    %541 = vector.extract_strided_slice %538 {offsets = [0, 128], sizes = [8, 64], strides = [1, 1]} : vector<8x192xf32> to vector<8x64xf32>
    %542 = vector.extract_strided_slice %533 {offsets = [0, 192], sizes = [8, 64], strides = [1, 1]} : vector<8x256xf32> to vector<8x64xf32>
    %543 = arith.mulf %540, %526 : vector<8x64xf32>
    %544 = arith.mulf %539, %542 : vector<8x64xf32>
    %545 = arith.addf %543, %544 : vector<8x64xf32>
    %546 = math.tanh %545 : vector<8x64xf32>
    %547 = arith.mulf %541, %546 : vector<8x64xf32>
    %c48_225 = arith.constant 48 : index
    %c0_226 = arith.constant 0 : index
    %548 = vector.load %arg17[%c48_225, %c0_226] : memref<64x64xf32, #tpu.memory_space<vmem>>, vector<8x64xf32>
    tpu.vector_store %arg17[%c48_225, %c0_226], %547 {strides = array<i32>} : memref<64x64xf32, #tpu.memory_space<vmem>>, vector<8x64xf32>,
    %c56_227 = arith.constant 56 : index
    %c0_228 = arith.constant 0 : index
    %549 = vector.load %arg18[%c56_227, %c0_228] : memref<64x256xf32, #tpu.memory_space<vmem>>, vector<8x256xf32>
    %cst_229 = arith.constant dense<0.000000e+00> : vector<8x256xf32>
    %550 = tpu.matmul %547, %413, %cst_229 {dimension_numbers = #tpu.dot_dimension_numbers<[1], [0], [0], [1], [0, 0, 1, 1], [], []>} : vector<8x64xf32>, vector<64x256xf32>, vector<8x256xf32> -> vector<8x256xf32>
    %551 = arith.addf %549, %550 : vector<8x256xf32>
    %552 = math.tanh %551 : vector<8x256xf32>
    %553 = vector.extract_strided_slice %552 {offsets = [0, 0], sizes = [8, 192], strides = [1, 1]} : vector<8x256xf32> to vector<8x192xf32>
    %cst_230 = arith.constant 5.000000e-01 : f32
    %554 = vector.broadcast %cst_230 : f32 to vector<8x192xf32>
    %555 = arith.mulf %553, %554 : vector<8x192xf32>
    %cst_231 = arith.constant 5.000000e-01 : f32
    %556 = vector.broadcast %cst_231 : f32 to vector<8x192xf32>
    %557 = arith.addf %555, %556 : vector<8x192xf32>
    %558 = vector.extract_strided_slice %557 {offsets = [0, 0], sizes = [8, 64], strides = [1, 1]} : vector<8x192xf32> to vector<8x64xf32>
    %559 = vector.extract_strided_slice %557 {offsets = [0, 64], sizes = [8, 64], strides = [1, 1]} : vector<8x192xf32> to vector<8x64xf32>
    %560 = vector.extract_strided_slice %557 {offsets = [0, 128], sizes = [8, 64], strides = [1, 1]} : vector<8x192xf32> to vector<8x64xf32>
    %561 = vector.extract_strided_slice %552 {offsets = [0, 192], sizes = [8, 64], strides = [1, 1]} : vector<8x256xf32> to vector<8x64xf32>
    %562 = arith.mulf %559, %545 : vector<8x64xf32>
    %563 = arith.mulf %558, %561 : vector<8x64xf32>
    %564 = arith.addf %562, %563 : vector<8x64xf32>
    %565 = math.tanh %564 : vector<8x64xf32>
    %566 = arith.mulf %560, %565 : vector<8x64xf32>
    %c56_232 = arith.constant 56 : index
    %c0_233 = arith.constant 0 : index
    %567 = vector.load %arg17[%c56_232, %c0_233] : memref<64x64xf32, #tpu.memory_space<vmem>>, vector<8x64xf32>
    tpu.vector_store %arg17[%c56_232, %c0_233], %566 {strides = array<i32>} : memref<64x64xf32, #tpu.memory_space<vmem>>, vector<8x64xf32>,
    %c0_234 = arith.constant 0 : index
    %c0_235 = arith.constant 0 : index
    %568 = vector.load %arg17[%c0_234, %c0_235] : memref<64x64xf32, #tpu.memory_space<vmem>>, vector<64x64xf32>
    %569 = vector.extract_strided_slice %568 {offsets = [0, 0], sizes = [64, 32], strides = [1, 1]} : vector<64x64xf32> to vector<64x32xf32>
    %c0_236 = arith.constant 0 : index
    %c0_237 = arith.constant 0 : index
    %570 = vector.load %arg13[%c0_236, %c0_237] : memref<32x128xf32, #tpu.memory_space<vmem>>, vector<32x128xf32>
    %cst_238 = arith.constant dense<0.000000e+00> : vector<64x128xf32>
    %571 = tpu.matmul %569, %570, %cst_238 {dimension_numbers = #tpu.dot_dimension_numbers<[1], [0], [0], [1], [0, 0, 1, 1], [], []>} : vector<64x32xf32>, vector<32x128xf32>, vector<64x128xf32> -> vector<64x128xf32>
    %c0_239 = arith.constant 0 : index
    %c0_240 = arith.constant 0 : index
    %572 = vector.load %arg15[%c0_239, %c0_240] : memref<1x128xf32, #tpu.memory_space<vmem>>, vector<1x128xf32>
    %573 = vector.broadcast %572 : vector<1x128xf32> to vector<64x128xf32>
    %574 = arith.addf %571, %573 : vector<64x128xf32>
    %575 = vector.extract_strided_slice %568 {offsets = [0, 32], sizes = [64, 32], strides = [1, 1]} : vector<64x64xf32> to vector<64x32xf32>
    %c0_241 = arith.constant 0 : index
    %c0_242 = arith.constant 0 : index
    %576 = vector.load %arg14[%c0_241, %c0_242] : memref<32x128xf32, #tpu.memory_space<vmem>>, vector<32x128xf32>
    %cst_243 = arith.constant dense<0.000000e+00> : vector<64x128xf32>
    %577 = tpu.matmul %575, %576, %cst_243 {dimension_numbers = #tpu.dot_dimension_numbers<[1], [0], [0], [1], [0, 0, 1, 1], [], []>} : vector<64x32xf32>, vector<32x128xf32>, vector<64x128xf32> -> vector<64x128xf32>
    %578 = vector.extract_strided_slice %574 {offsets = [0, 0], sizes = [8, 128], strides = [1, 1]} : vector<64x128xf32> to vector<8x128xf32>
    %579 = vector.extract_strided_slice %577 {offsets = [56, 0], sizes = [8, 128], strides = [1, 1]} : vector<64x128xf32> to vector<8x128xf32>
    %580 = arith.addf %578, %579 : vector<8x128xf32>
    %c0_244 = arith.constant 0 : index
    %c0_245 = arith.constant 0 : index
    %c0_246 = arith.constant 0 : index
    %581 = vector.load %arg16[%c0_244, %c0_245, %c0_246] : memref<1x64x128xf32, #tpu.memory_space<vmem>>, vector<1x8x128xf32>
    %582 = vector.shape_cast %581 : vector<1x8x128xf32> to vector<8x128xf32>
    %583 = vector.shape_cast %580 : vector<8x128xf32> to vector<1x8x128xf32>
    tpu.vector_store %arg16[%c0_244, %c0_245, %c0_246], %583 {strides = array<i32>} : memref<1x64x128xf32, #tpu.memory_space<vmem>>, vector<1x8x128xf32>,
    %584 = vector.extract_strided_slice %574 {offsets = [8, 0], sizes = [8, 128], strides = [1, 1]} : vector<64x128xf32> to vector<8x128xf32>
    %585 = vector.extract_strided_slice %577 {offsets = [48, 0], sizes = [8, 128], strides = [1, 1]} : vector<64x128xf32> to vector<8x128xf32>
    %586 = arith.addf %584, %585 : vector<8x128xf32>
    %c0_247 = arith.constant 0 : index
    %c8_248 = arith.constant 8 : index
    %c0_249 = arith.constant 0 : index
    %587 = vector.load %arg16[%c0_247, %c8_248, %c0_249] : memref<1x64x128xf32, #tpu.memory_space<vmem>>, vector<1x8x128xf32>
    %588 = vector.shape_cast %587 : vector<1x8x128xf32> to vector<8x128xf32>
    %589 = vector.shape_cast %586 : vector<8x128xf32> to vector<1x8x128xf32>
    tpu.vector_store %arg16[%c0_247, %c8_248, %c0_249], %589 {strides = array<i32>} : memref<1x64x128xf32, #tpu.memory_space<vmem>>, vector<1x8x128xf32>,
    %590 = vector.extract_strided_slice %574 {offsets = [16, 0], sizes = [8, 128], strides = [1, 1]} : vector<64x128xf32> to vector<8x128xf32>
    %591 = vector.extract_strided_slice %577 {offsets = [40, 0], sizes = [8, 128], strides = [1, 1]} : vector<64x128xf32> to vector<8x128xf32>
    %592 = arith.addf %590, %591 : vector<8x128xf32>
    %c0_250 = arith.constant 0 : index
    %c16_251 = arith.constant 16 : index
    %c0_252 = arith.constant 0 : index
    %593 = vector.load %arg16[%c0_250, %c16_251, %c0_252] : memref<1x64x128xf32, #tpu.memory_space<vmem>>, vector<1x8x128xf32>
    %594 = vector.shape_cast %593 : vector<1x8x128xf32> to vector<8x128xf32>
    %595 = vector.shape_cast %592 : vector<8x128xf32> to vector<1x8x128xf32>
    tpu.vector_store %arg16[%c0_250, %c16_251, %c0_252], %595 {strides = array<i32>} : memref<1x64x128xf32, #tpu.memory_space<vmem>>, vector<1x8x128xf32>,
    %596 = vector.extract_strided_slice %574 {offsets = [24, 0], sizes = [8, 128], strides = [1, 1]} : vector<64x128xf32> to vector<8x128xf32>
    %597 = vector.extract_strided_slice %577 {offsets = [32, 0], sizes = [8, 128], strides = [1, 1]} : vector<64x128xf32> to vector<8x128xf32>
    %598 = arith.addf %596, %597 : vector<8x128xf32>
    %c0_253 = arith.constant 0 : index
    %c24_254 = arith.constant 24 : index
    %c0_255 = arith.constant 0 : index
    %599 = vector.load %arg16[%c0_253, %c24_254, %c0_255] : memref<1x64x128xf32, #tpu.memory_space<vmem>>, vector<1x8x128xf32>
    %600 = vector.shape_cast %599 : vector<1x8x128xf32> to vector<8x128xf32>
    %601 = vector.shape_cast %598 : vector<8x128xf32> to vector<1x8x128xf32>
    tpu.vector_store %arg16[%c0_253, %c24_254, %c0_255], %601 {strides = array<i32>} : memref<1x64x128xf32, #tpu.memory_space<vmem>>, vector<1x8x128xf32>,
    %602 = vector.extract_strided_slice %574 {offsets = [32, 0], sizes = [8, 128], strides = [1, 1]} : vector<64x128xf32> to vector<8x128xf32>
    %603 = vector.extract_strided_slice %577 {offsets = [24, 0], sizes = [8, 128], strides = [1, 1]} : vector<64x128xf32> to vector<8x128xf32>
    %604 = arith.addf %602, %603 : vector<8x128xf32>
    %c0_256 = arith.constant 0 : index
    %c32_257 = arith.constant 32 : index
    %c0_258 = arith.constant 0 : index
    %605 = vector.load %arg16[%c0_256, %c32_257, %c0_258] : memref<1x64x128xf32, #tpu.memory_space<vmem>>, vector<1x8x128xf32>
    %606 = vector.shape_cast %605 : vector<1x8x128xf32> to vector<8x128xf32>
    %607 = vector.shape_cast %604 : vector<8x128xf32> to vector<1x8x128xf32>
    tpu.vector_store %arg16[%c0_256, %c32_257, %c0_258], %607 {strides = array<i32>} : memref<1x64x128xf32, #tpu.memory_space<vmem>>, vector<1x8x128xf32>,
    %608 = vector.extract_strided_slice %574 {offsets = [40, 0], sizes = [8, 128], strides = [1, 1]} : vector<64x128xf32> to vector<8x128xf32>
    %609 = vector.extract_strided_slice %577 {offsets = [16, 0], sizes = [8, 128], strides = [1, 1]} : vector<64x128xf32> to vector<8x128xf32>
    %610 = arith.addf %608, %609 : vector<8x128xf32>
    %c0_259 = arith.constant 0 : index
    %c40_260 = arith.constant 40 : index
    %c0_261 = arith.constant 0 : index
    %611 = vector.load %arg16[%c0_259, %c40_260, %c0_261] : memref<1x64x128xf32, #tpu.memory_space<vmem>>, vector<1x8x128xf32>
    %612 = vector.shape_cast %611 : vector<1x8x128xf32> to vector<8x128xf32>
    %613 = vector.shape_cast %610 : vector<8x128xf32> to vector<1x8x128xf32>
    tpu.vector_store %arg16[%c0_259, %c40_260, %c0_261], %613 {strides = array<i32>} : memref<1x64x128xf32, #tpu.memory_space<vmem>>, vector<1x8x128xf32>,
    %614 = vector.extract_strided_slice %574 {offsets = [48, 0], sizes = [8, 128], strides = [1, 1]} : vector<64x128xf32> to vector<8x128xf32>
    %615 = vector.extract_strided_slice %577 {offsets = [8, 0], sizes = [8, 128], strides = [1, 1]} : vector<64x128xf32> to vector<8x128xf32>
    %616 = arith.addf %614, %615 : vector<8x128xf32>
    %c0_262 = arith.constant 0 : index
    %c48_263 = arith.constant 48 : index
    %c0_264 = arith.constant 0 : index
    %617 = vector.load %arg16[%c0_262, %c48_263, %c0_264] : memref<1x64x128xf32, #tpu.memory_space<vmem>>, vector<1x8x128xf32>
    %618 = vector.shape_cast %617 : vector<1x8x128xf32> to vector<8x128xf32>
    %619 = vector.shape_cast %616 : vector<8x128xf32> to vector<1x8x128xf32>
    tpu.vector_store %arg16[%c0_262, %c48_263, %c0_264], %619 {strides = array<i32>} : memref<1x64x128xf32, #tpu.memory_space<vmem>>, vector<1x8x128xf32>,
    %620 = vector.extract_strided_slice %574 {offsets = [56, 0], sizes = [8, 128], strides = [1, 1]} : vector<64x128xf32> to vector<8x128xf32>
    %621 = vector.extract_strided_slice %577 {offsets = [0, 0], sizes = [8, 128], strides = [1, 1]} : vector<64x128xf32> to vector<8x128xf32>
    %622 = arith.addf %620, %621 : vector<8x128xf32>
    %c0_265 = arith.constant 0 : index
    %c56_266 = arith.constant 56 : index
    %c0_267 = arith.constant 0 : index
    %623 = vector.load %arg16[%c0_265, %c56_266, %c0_267] : memref<1x64x128xf32, #tpu.memory_space<vmem>>, vector<1x8x128xf32>
    %624 = vector.shape_cast %623 : vector<1x8x128xf32> to vector<8x128xf32>
    %625 = vector.shape_cast %622 : vector<8x128xf32> to vector<1x8x128xf32>
    tpu.vector_store %arg16[%c0_265, %c56_266, %c0_267], %625 {strides = array<i32>} : memref<1x64x128xf32, #tpu.memory_space<vmem>>, vector<1x8x128xf32>,
    return
  }
  func.func @transform_0(%arg0: i32) -> (i32, i32, i32) {
    %c0_i32 = arith.constant 0 : i32
    %c0_i32_0 = arith.constant 0 : i32
    %c0_i32_1 = arith.constant 0 : i32
    return %arg0, %c0_i32, %c0_i32_0 : i32, i32, i32
  }
  func.func @transform_1(%arg0: i32) -> (i32, i32) {
    %c0_i32 = arith.constant 0 : i32
    %c0_i32_0 = arith.constant 0 : i32
    %c0_i32_1 = arith.constant 0 : i32
    return %c0_i32, %c0_i32_0 : i32, i32
  }
  func.func @transform_2(%arg0: i32) -> (i32, i32) {
    %c0_i32 = arith.constant 0 : i32
    %c0_i32_0 = arith.constant 0 : i32
    %c0_i32_1 = arith.constant 0 : i32
    return %c0_i32, %c0_i32_0 : i32, i32
  }
  func.func @transform_3(%arg0: i32) -> (i32, i32) {
    %c0_i32 = arith.constant 0 : i32
    %c0_i32_0 = arith.constant 0 : i32
    %c0_i32_1 = arith.constant 0 : i32
    return %c0_i32, %c0_i32_0 : i32, i32
  }
  func.func @transform_4(%arg0: i32) -> (i32, i32) {
    %c0_i32 = arith.constant 0 : i32
    %c0_i32_0 = arith.constant 0 : i32
    %c0_i32_1 = arith.constant 0 : i32
    return %c0_i32, %c0_i32_0 : i32, i32
  }
  func.func @transform_5(%arg0: i32) -> (i32, i32) {
    %c0_i32 = arith.constant 0 : i32
    %c0_i32_0 = arith.constant 0 : i32
    %c0_i32_1 = arith.constant 0 : i32
    return %c0_i32, %c0_i32_0 : i32, i32
  }
  func.func @transform_6(%arg0: i32) -> (i32, i32) {
    %c0_i32 = arith.constant 0 : i32
    %c0_i32_0 = arith.constant 0 : i32
    %c0_i32_1 = arith.constant 0 : i32
    return %c0_i32, %c0_i32_0 : i32, i32
  }
  func.func @transform_7(%arg0: i32) -> (i32, i32) {
    %c0_i32 = arith.constant 0 : i32
    %c0_i32_0 = arith.constant 0 : i32
    %c0_i32_1 = arith.constant 0 : i32
    return %c0_i32, %c0_i32_0 : i32, i32
  }
  func.func @transform_8(%arg0: i32) -> (i32, i32) {
    %c0_i32 = arith.constant 0 : i32
    %c0_i32_0 = arith.constant 0 : i32
    %c0_i32_1 = arith.constant 0 : i32
    return %c0_i32, %c0_i32_0 : i32, i32
  }
  func.func @transform_9(%arg0: i32) -> (i32, i32) {
    %c0_i32 = arith.constant 0 : i32
    %c0_i32_0 = arith.constant 0 : i32
    %c0_i32_1 = arith.constant 0 : i32
    return %c0_i32, %c0_i32_0 : i32, i32
  }
  func.func @transform_10(%arg0: i32) -> (i32, i32) {
    %c0_i32 = arith.constant 0 : i32
    %c0_i32_0 = arith.constant 0 : i32
    %c0_i32_1 = arith.constant 0 : i32
    return %c0_i32, %c0_i32_0 : i32, i32
  }
  func.func @transform_11(%arg0: i32) -> (i32, i32) {
    %c0_i32 = arith.constant 0 : i32
    %c0_i32_0 = arith.constant 0 : i32
    %c0_i32_1 = arith.constant 0 : i32
    return %c0_i32, %c0_i32_0 : i32, i32
  }
  func.func @transform_12(%arg0: i32) -> (i32, i32) {
    %c0_i32 = arith.constant 0 : i32
    %c0_i32_0 = arith.constant 0 : i32
    %c0_i32_1 = arith.constant 0 : i32
    return %c0_i32, %c0_i32_0 : i32, i32
  }
  func.func @transform_13(%arg0: i32) -> (i32, i32) {
    %c0_i32 = arith.constant 0 : i32
    %c0_i32_0 = arith.constant 0 : i32
    %c0_i32_1 = arith.constant 0 : i32
    return %c0_i32, %c0_i32_0 : i32, i32
  }
  func.func @transform_14(%arg0: i32) -> (i32, i32) {
    %c0_i32 = arith.constant 0 : i32
    %c0_i32_0 = arith.constant 0 : i32
    %c0_i32_1 = arith.constant 0 : i32
    return %c0_i32, %c0_i32_0 : i32, i32
  }
  func.func @transform_15(%arg0: i32) -> (i32, i32, i32) {
    %c0_i32 = arith.constant 0 : i32
    %c0_i32_0 = arith.constant 0 : i32
    %c0_i32_1 = arith.constant 0 : i32
    return %arg0, %c0_i32, %c0_i32_0 : i32, i32, i32
  }
}

</mosaic_0001>

<llo_original>
// kernel: forward.1
$region0: #{forward.1}
  #allocation0 [shape = 'u32[]', space=smem, size = 0x4, offset = 0x4, fixed_abs, tag = 'smem constant byte address 0x4 - core index']
  #allocation1 [shape = 'u32[144,128]{1,0:T(1,128)}', space=vmem, size = 0x12000, scoped, tag = 'internal scratch']
  #allocation2 [shape = 'f32[64,64]{1,0:T(8,128)}', space=vmem, size = 0x8000, scoped, tag = 'scratch operand']
  #allocation3 [shape = 'f32[64,256]{1,0:T(8,128)}', space=vmem, size = 0x10000, scoped, tag = 'scratch operand']
  %s0 = inlined_call_operand.vmem [shape: f32[1,64,8], index: 0, kind: input, shape index: {}]
  %s1 = inlined_call_operand.vmem [shape: f32[128,256], index: 1, kind: input, shape index: {}]
  %s2 = inlined_call_operand.vmem [shape: f32[1,256], index: 2, kind: input, shape index: {}]
  %s3 = inlined_call_operand.vmem [shape: f32[64,256], index: 3, kind: input, shape index: {}]
  %s4 = inlined_call_operand.hbm [shape: f32[64,256], index: 4, kind: input, shape index: {}]
  %s5 = inlined_call_operand.vmem [shape: f32[1,256], index: 5, kind: input, shape index: {}]
  %s6 = inlined_call_operand.hbm [shape: f32[64,256], index: 6, kind: input, shape index: {}]
  %s7 = inlined_call_operand.hbm [shape: f32[64,256], index: 7, kind: input, shape index: {}]
  %s8 = inlined_call_operand.vmem [shape: f32[1,256], index: 8, kind: input, shape index: {}]
  %s9 = inlined_call_operand.hbm [shape: f32[64,256], index: 9, kind: input, shape index: {}]
  %s10 = inlined_call_operand.hbm [shape: f32[64,256], index: 10, kind: input, shape index: {}]
  %s11 = inlined_call_operand.hbm [shape: f32[64,256], index: 11, kind: input, shape index: {}]
  %s12 = inlined_call_operand.hbm [shape: f32[32,128], index: 12, kind: input, shape index: {}]
  %s13 = inlined_call_operand.hbm [shape: f32[32,128], index: 13, kind: input, shape index: {}]
  %s14 = inlined_call_operand.vmem [shape: f32[1,128], index: 14, kind: input, shape index: {}]
  %s15 = inlined_call_operand.vmem [shape: f32[1,64,128], index: 15, kind: output, shape index: {}]
  %s16 = sld [smem:[#allocation0]]
  $region102: #{forward.1} parent=0
    _
  %s18 = ssub.s32 1, %s16
  %s19 = scalar_select 0, %s18, %s16
  $region1: #{forward.1} parent=0
    #allocation4 [shape = 'u8[65536]{0}', space=vmem, size = 0x10000, scoped, tag = 'input window, operand 4, single buffered']
    #allocation5 [shape = 's32[1]{0}', space=sflag, size = 0x4, scoped, tag = 'scoped memory for forward.1']
    #allocation6 [shape = 'u8[65536]{0}', space=vmem, size = 0x10000, scoped, tag = 'input window, operand 6, single buffered']
    #allocation7 [shape = 's32[1]{0}', space=sflag, size = 0x4, scoped, tag = 'scoped memory for forward.1']
    #allocation8 [shape = 'u8[65536]{0}', space=vmem, size = 0x10000, scoped, tag = 'input window, operand 7, single buffered']
    #allocation9 [shape = 'u8[65536]{0}', space=vmem, size = 0x10000, scoped, tag = 'input window, operand 9, single buffered']
    #allocation10 [shape = 's32[1]{0}', space=sflag, size = 0x4, scoped, tag = 'scoped memory for forward.1']
    #allocation11 [shape = 'u8[65536]{0}', space=vmem, size = 0x10000, scoped, tag = 'input window, operand 10, single buffered']
    #allocation12 [shape = 'u8[65536]{0}', space=vmem, size = 0x10000, scoped, tag = 'input window, operand 11, single buffered']
    #allocation13 [shape = 's32[1]{0}', space=sflag, size = 0x4, scoped, tag = 'scoped memory for forward.1']
    #allocation14 [shape = 'u8[16384]{0}', space=vmem, size = 0x4000, scoped, tag = 'input window, operand 12, single buffered']
    #allocation15 [shape = 'u8[16384]{0}', space=vmem, size = 0x4000, scoped, tag = 'input window, operand 13, single buffered']
    #allocation16 [shape = 's32[1]{0}', space=sflag, size = 0x4, scoped, tag = 'scoped memory for forward.1']
    %20 = vsyncpa [#allocation5], 0
    %21 = vsyncpa [#allocation7], 0
    %22 = vsyncpa [#allocation10], 0
    %23 = vsyncpa [#allocation13], 0
    %24 = vsyncpa [#allocation16], 0
    // Predicated region
    $region2: #{forward.1} parent=1 // pred_check
      _
    $region3: #{forward.1} parent=1 // pred_check_branch
      %26 = sbr.rel (0) target = $region5
    $region4: #{forward.1} parent=1 // pred_region
      _
    $region5: #{forward.1} parent=1 // pred_fallthru
      _
    // Predicated region
    $region6: #{forward.1} parent=1 // pred_check
      _
    $region7: #{forward.1} parent=1 // pred_check_branch
      %28 = sbr.rel (0) target = $region9
    $region8: #{forward.1} parent=1 // pred_region
      _
    $region9: #{forward.1} parent=1 // pred_fallthru
      _
    // Predicated region
    $region10: #{forward.1} parent=1 // pred_check
      _
    $region11: #{forward.1} parent=1 // pred_check_branch
      %30 = sbr.rel (0) target = $region13
    $region12: #{forward.1} parent=1 // pred_region
      _
    $region13: #{forward.1} parent=1 // pred_fallthru
      _
    // Predicated region
    $region14: #{forward.1} parent=1 // pred_check
      _
    $region15: #{forward.1} parent=1 // pred_check_branch
      %32 = sbr.rel (0) target = $region17
    $region16: #{forward.1} parent=1 // pred_region
      _
    $region17: #{forward.1} parent=1 // pred_fallthru
      _
    // Predicated region
    $region18: #{forward.1} parent=1 // pred_check
      _
    $region19: #{forward.1} parent=1 // pred_check_branch
      %34 = sbr.rel (0) target = $region21
    $region20: #{forward.1} parent=1 // pred_region
      %s36 = ssub.s32 2048, 2048
      %37 = vsyncadd [#allocation5], %s36
      %s38 = sshll.u32 [#allocation4], 4
      %s39 = int_to_ptr.vmem [resolvable:$true] %s38
      %44 = dma.hbm_to_vmem [thread:$0]  %s4, 2048, %s39, [#allocation5], 256, 256, 16
    $region21: #{forward.1} parent=1 // pred_fallthru
      _
    // Predicated region
    $region22: #{forward.1} parent=1 // pred_check
      _
    $region23: #{forward.1} parent=1 // pred_check_branch
      %46 = sbr.rel (0) target = $region25
    $region24: #{forward.1} parent=1 // pred_region
      _
    $region25: #{forward.1} parent=1 // pred_fallthru
      _
    // Predicated region
    $region26: #{forward.1} parent=1 // pred_check
      _
    $region27: #{forward.1} parent=1 // pred_check_branch
      %48 = sbr.rel (0) target = $region29
    $region28: #{forward.1} parent=1 // pred_region
      %s50 = ssub.s32 2048, 2048
      %51 = vsyncadd [#allocation7], %s50
      %s52 = sshll.u32 [#allocation6], 4
      %s53 = int_to_ptr.vmem [resolvable:$true] %s52
      %58 = dma.hbm_to_vmem [thread:$0]  %s6, 2048, %s53, [#allocation7], 256, 256, 16
    $region29: #{forward.1} parent=1 // pred_fallthru
      _
    // Predicated region
    $region30: #{forward.1} parent=1 // pred_check
      _
    $region31: #{forward.1} parent=1 // pred_check_branch
      %60 = sbr.rel (0) target = $region33
    $region32: #{forward.1} parent=1 // pred_region
      %s62 = ssub.s32 2048, 2048
      %63 = vsyncadd [#allocation7], %s62
      %s64 = sshll.u32 [#allocation8], 4
      %s65 = int_to_ptr.vmem [resolvable:$true] %s64
      %70 = dma.hbm_to_vmem [thread:$0]  %s7, 2048, %s65, [#allocation7], 256, 256, 16
    $region33: #{forward.1} parent=1 // pred_fallthru
      _
    // Predicated region
    $region34: #{forward.1} parent=1 // pred_check
      _
    $region35: #{forward.1} parent=1 // pred_check_branch
      %72 = sbr.rel (0) target = $region37
    $region36: #{forward.1} parent=1 // pred_region
      _
    $region37: #{forward.1} parent=1 // pred_fallthru
      _
    // Predicated region
    $region38: #{forward.1} parent=1 // pred_check
      _
    $region39: #{forward.1} parent=1 // pred_check_branch
      %74 = sbr.rel (0) target = $region41
    $region40: #{forward.1} parent=1 // pred_region
      %s76 = ssub.s32 2048, 2048
      %77 = vsyncadd [#allocation10], %s76
      %s78 = sshll.u32 [#allocation9], 4
      %s79 = int_to_ptr.vmem [resolvable:$true] %s78
      %84 = dma.hbm_to_vmem [thread:$0]  %s9, 2048, %s79, [#allocation10], 256, 256, 16
    $region41: #{forward.1} parent=1 // pred_fallthru
      _
    // Predicated region
    $region42: #{forward.1} parent=1 // pred_check
      _
    $region43: #{forward.1} parent=1 // pred_check_branch
      %86 = sbr.rel (0) target = $region45
    $region44: #{forward.1} parent=1 // pred_region
      %s88 = ssub.s32 2048, 2048
      %89 = vsyncadd [#allocation10], %s88
      %s90 = sshll.u32 [#allocation11], 4
      %s91 = int_to_ptr.vmem [resolvable:$true] %s90
      %96 = dma.hbm_to_vmem [thread:$0]  %s10, 2048, %s91, [#allocation10], 256, 256, 16
    $region45: #{forward.1} parent=1 // pred_fallthru
      _
    // Predicated region
    $region46: #{forward.1} parent=1 // pred_check
      _
    $region47: #{forward.1} parent=1 // pred_check_branch
      %98 = sbr.rel (0) target = $region49
    $region48: #{forward.1} parent=1 // pred_region
      %s100 = ssub.s32 2048, 2048
      %101 = vsyncadd [#allocation13], %s100
      %s102 = sshll.u32 [#allocation12], 4
      %s103 = int_to_ptr.vmem [resolvable:$true] %s102
      %108 = dma.hbm_to_vmem [thread:$0]  %s11, 2048, %s103, [#allocation13], 256, 256, 16
    $region49: #{forward.1} parent=1 // pred_fallthru
      _
    // Predicated region
    $region50: #{forward.1} parent=1 // pred_check
      _
    $region51: #{forward.1} parent=1 // pred_check_branch
      %110 = sbr.rel (0) target = $region53
    $region52: #{forward.1} parent=1 // pred_region
      %s112 = ssub.s32 512, 512
      %113 = vsyncadd [#allocation13], %s112
      %s114 = sshll.u32 [#allocation14], 4
      %s115 = int_to_ptr.vmem [resolvable:$true] %s114
      %120 = dma.hbm_to_vmem [thread:$0]  %s12, 512, %s115, [#allocation13], 128, 128, 8
    $region53: #{forward.1} parent=1 // pred_fallthru
      _
    // Predicated region
    $region54: #{forward.1} parent=1 // pred_check
      _
    $region55: #{forward.1} parent=1 // pred_check_branch
      %122 = sbr.rel (0) target = $region57
    $region56: #{forward.1} parent=1 // pred_region
      %s124 = ssub.s32 512, 512
      %125 = vsyncadd [#allocation16], %s124
      %s126 = sshll.u32 [#allocation15], 4
      %s127 = int_to_ptr.vmem [resolvable:$true] %s126
      %132 = dma.hbm_to_vmem [thread:$0]  %s13, 512, %s127, [#allocation16], 128, 128, 8
    $region57: #{forward.1} parent=1 // pred_fallthru
      _
    // Predicated region
    $region58: #{forward.1} parent=1 // pred_check
      _
    $region59: #{forward.1} parent=1 // pred_check_branch
      %134 = sbr.rel (0) target = $region61
    $region60: #{forward.1} parent=1 // pred_region
      _
    $region61: #{forward.1} parent=1 // pred_fallthru
      _
    // Predicated region
    $region62: #{forward.1} parent=1 // pred_check
      _
    $region63: #{forward.1} parent=1 // pred_check_branch
      %136 = sbr.rel (0) target = $region65
    $region64: #{forward.1} parent=1 // pred_region
      %137 = dma.done [#allocation5], 2048
    $region65: #{forward.1} parent=1 // pred_fallthru
      _
    // Predicated region
    $region66: #{forward.1} parent=1 // pred_check
      _
    $region67: #{forward.1} parent=1 // pred_check_branch
      %139 = sbr.rel (0) target = $region69
    $region68: #{forward.1} parent=1 // pred_region
      %140 = dma.done [#allocation7], 2048
    $region69: #{forward.1} parent=1 // pred_fallthru
      _
    // Predicated region
    $region70: #{forward.1} parent=1 // pred_check
      _
    $region71: #{forward.1} parent=1 // pred_check_branch
      %142 = sbr.rel (0) target = $region73
    $region72: #{forward.1} parent=1 // pred_region
      %143 = dma.done [#allocation7], 2048
    $region73: #{forward.1} parent=1 // pred_fallthru
      _
    // Predicated region
    $region74: #{forward.1} parent=1 // pred_check
      _
    $region75: #{forward.1} parent=1 // pred_check_branch
      %145 = sbr.rel (0) target = $region77
    $region76: #{forward.1} parent=1 // pred_region
      %146 = dma.done [#allocation10], 2048
    $region77: #{forward.1} parent=1 // pred_fallthru
      _
    // Predicated region
    $region78: #{forward.1} parent=1 // pred_check
      _
    $region79: #{forward.1} parent=1 // pred_check_branch
      %148 = sbr.rel (0) target = $region81
    $region80: #{forward.1} parent=1 // pred_region
      %149 = dma.done [#allocation10], 2048
    $region81: #{forward.1} parent=1 // pred_fallthru
      _
    // Predicated region
    $region82: #{forward.1} parent=1 // pred_check
      _
    $region83: #{forward.1} parent=1 // pred_check_branch
      %151 = sbr.rel (0) target = $region85
    $region84: #{forward.1} parent=1 // pred_region
      %152 = dma.done [#allocation13], 2048
    $region85: #{forward.1} parent=1 // pred_fallthru
      _
    // Predicated region
    $region86: #{forward.1} parent=1 // pred_check
      _
    $region87: #{forward.1} parent=1 // pred_check_branch
      %154 = sbr.rel (0) target = $region89
    $region88: #{forward.1} parent=1 // pred_region
      %155 = dma.done [#allocation13], 512
    $region89: #{forward.1} parent=1 // pred_fallthru
      _
    // Predicated region
    $region90: #{forward.1} parent=1 // pred_check
      _
    $region91: #{forward.1} parent=1 // pred_check_branch
      %157 = sbr.rel (0) target = $region93
    $region92: #{forward.1} parent=1 // pred_region
      %158 = dma.done [#allocation16], 512
    $region93: #{forward.1} parent=1 // pred_fallthru
      _
    %v159 = vlaneseq
    %v160 = vand.u32 %v159, 127
    %v161 = vand.u32 %v160, 15
    %v162 = vcvt.s32.f32 %v161
    %v163 = vshra.s32 %v160, 4
    %v164 = vlaneseq
    %v165 = vshrl.u32 %v164, 7
    %vm166 = vcmp.eq.s32.totalorder %v163, %v165
    %v167 = vsel %vm166, 1, 0
    %v168 = vcvt.s32.f32 %v167
    %v169 = vld [vmem:[%s0] sm:$0xff]
    %v170 = vld [vmem:[%s0 + $0x8] sm:$0xff]
    %v171 = vld [vmem:[%s0 + $0x10] sm:$0xff]
    %v172 = vld [vmem:[%s0 + $0x18] sm:$0xff]
    %v173 = vld [vmem:[%s0 + $0x20] sm:$0xff]
    %v174 = vld [vmem:[%s0 + $0x28] sm:$0xff]
    %v175 = vld [vmem:[%s0 + $0x30] sm:$0xff]
    %v176 = vld [vmem:[%s0 + $0x38] sm:$0xff]
    %vm177 = vcmask 64512
    %v179 = vsel %vm177, %v169, 0
    %v182 = vsel %vm177, %v170, 0
    %v185 = vsel %vm177, %v171, 0
    %v188 = vsel %vm177, %v172, 0
    %v191 = vsel %vm177, %v173, 0
    %v194 = vsel %vm177, %v174, 0
    %v197 = vsel %vm177, %v175, 0
    %v200 = vsel %vm177, %v176, 0
    %202 = vmatprep.subr.mxu0 0.0
    %203 = vmatpush1.msra.mxu0 %v168
    %204 = vmatprep.subr.mxu0 0.0
    %205 = vmatpush1.msra.mxu0 0.0
    %206 = vmatprep.subr.mxu0 0.0
    %207 = vmatpush1.msra.mxu0 0.0
    %208 = vmatprep.subr.mxu0 0.0
    %209 = vmatpush1.msra.mxu0 0.0
    %210 = vmatprep.subr.mxu0 0.0
    %211 = vmatpush1.msra.mxu0 0.0
    %212 = vmatprep.subr.mxu0 0.0
    %213 = vmatpush1.msra.mxu0 0.0
    %214 = vmatprep.subr.mxu0 0.0
    %215 = vmatpush1.msra.mxu0 0.0
    %216 = vmatprep.subr.mxu0 0.0
    %217 = vmatpush1.msra.mxu0 0.0
    %218 = vmatprep.subr.mxu0 0.0
    %219 = vmatpush1.msra.mxu0 0.0
    %220 = vmatprep.subr.mxu0 0.0
    %221 = vmatpush1.msra.mxu0 0.0
    %222 = vmatprep.subr.mxu0 0.0
    %223 = vmatpush1.msra.mxu0 0.0
    %224 = vmatprep.subr.mxu0 0.0
    %225 = vmatpush1.msra.mxu0 0.0
    %226 = vmatprep.subr.mxu0 0.0
    %227 = vmatpush1.msra.mxu0 0.0
    %228 = vmatprep.subr.mxu0 0.0
    %229 = vmatpush1.msra.mxu0 0.0
    %230 = vmatprep.subr.mxu0 0.0
    %231 = vmatpush1.msra.mxu0 0.0
    %232 = vmatprep.subr.mxu0 0.0
    %233 = vmatpush1.msra.mxu0 0.0
    %234 = vmatprep.subr.mxu0 0.0
    %235 = vmatpush1.msra.mxu0 0.0
    %236 = vmatprep.subr.mxu0 0.0
    %237 = vmatpush1.msra.mxu0 0.0
    %238 = vmatprep.subr.mxu0 0.0
    %239 = vmatpush1.msra.mxu0 0.0
    %240 = vmatprep.subr.mxu0 0.0
    %241 = vmatpush1.msra.mxu0 0.0
    %242 = vmatprep.subr.mxu0 0.0
    %243 = vmatpush1.msra.mxu0 0.0
    %244 = vmatprep.subr.mxu0 0.0
    %245 = vmatpush1.msra.mxu0 0.0
    %246 = vmatprep.subr.mxu0 0.0
    %247 = vmatpush1.msra.mxu0 0.0
    %248 = vmatprep.subr.mxu0 0.0
    %249 = vmatpush1.msra.mxu0 0.0
    %250 = vmatprep.subr.mxu0 0.0
    %251 = vmatpush1.msra.mxu0 0.0
    %252 = vmatprep.subr.mxu0 0.0
    %253 = vmatpush1.msra.mxu0 0.0
    %254 = vmatprep.subr.mxu0 0.0
    %255 = vmatpush1.msra.mxu0 0.0
    %256 = vmatprep.subr.mxu0 0.0
    %257 = vmatpush1.msra.mxu0 0.0
    %258 = vmatprep.subr.mxu0 0.0
    %259 = vmatpush1.msra.mxu0 0.0
    %260 = vmatprep.subr.mxu0 0.0
    %261 = vmatpush1.msra.mxu0 0.0
    %262 = vmatprep.subr.mxu0 0.0
    %263 = vmatpush1.msra.mxu0 0.0
    %264 = vmatprep.subr.mxu0 0.0
    %265 = vmatpush1.msra.mxu0 0.0
    %266 = vmatprep.mubr.f32.mxu0 0.0
    %267 = vmatmul.mubr.f32.gmra.mrb[0].mxu0 %v179
    %v268 = vpop.f32.mrb[0].mxu0
    %v269 = vadd.f32 0.0, %v268
    %v270 = vpop.f32.mrb[0].mxu0
    %271 = vmatprep.mubr.f32.mxu0 0.0
    %272 = vmatmul.mubr.f32.gmra.mrb[0].mxu0 %v182
    %v273 = vpop.f32.mrb[0].mxu0
    %v274 = vadd.f32 0.0, %v273
    %v275 = vpop.f32.mrb[0].mxu0
    %276 = vmatprep.mubr.f32.mxu0 0.0
    %277 = vmatmul.mubr.f32.gmra.mrb[0].mxu0 %v185
    %v278 = vpop.f32.mrb[0].mxu0
    %v279 = vadd.f32 0.0, %v278
    %v280 = vpop.f32.mrb[0].mxu0
    %281 = vmatprep.mubr.f32.mxu0 0.0
    %282 = vmatmul.mubr.f32.gmra.mrb[0].mxu0 %v188
    %v283 = vpop.f32.mrb[0].mxu0
    %v284 = vadd.f32 0.0, %v283
    %v285 = vpop.f32.mrb[0].mxu0
    %286 = vmatprep.mubr.f32.mxu0 0.0
    %287 = vmatmul.mubr.f32.gmra.mrb[0].mxu0 %v191
    %v288 = vpop.f32.mrb[0].mxu0
    %v289 = vadd.f32 0.0, %v288
    %v290 = vpop.f32.mrb[0].mxu0
    %291 = vmatprep.mubr.f32.mxu0 0.0
    %292 = vmatmul.mubr.f32.gmra.mrb[0].mxu0 %v194
    %v293 = vpop.f32.mrb[0].mxu0
    %v294 = vadd.f32 0.0, %v293
    %v295 = vpop.f32.mrb[0].mxu0
    %296 = vmatprep.mubr.f32.mxu0 0.0
    %297 = vmatmul.mubr.f32.gmra.mrb[0].mxu0 %v197
    %v298 = vpop.f32.mrb[0].mxu0
    %v299 = vadd.f32 0.0, %v298
    %v300 = vpop.f32.mrb[0].mxu0
    %301 = vmatprep.mubr.f32.mxu0 0.0
    %302 = vmatmul.mubr.f32.gmra.mrb[0].mxu0 %v200
    %v303 = vpop.f32.mrb[0].mxu0
    %v304 = vadd.f32 0.0, %v303
    %v305 = vpop.f32.mrb[0].mxu0
    %306 = vdwg.mxu0
    %vm307 = vcmp.eq.f32.partialorder %v269, %v162
    %vm308 = vcmp.eq.f32.partialorder %v274, %v162
    %vm309 = vcmp.eq.f32.partialorder %v279, %v162
    %vm310 = vcmp.eq.f32.partialorder %v284, %v162
    %vm311 = vcmp.eq.f32.partialorder %v289, %v162
    %vm312 = vcmp.eq.f32.partialorder %v294, %v162
    %vm313 = vcmp.eq.f32.partialorder %v299, %v162
    %vm314 = vcmp.eq.f32.partialorder %v304, %v162
    %v315 = vsel %vm307, 1, 0
    %v316 = vsel %vm308, 1, 0
    %v317 = vsel %vm309, 1, 0
    %v318 = vsel %vm310, 1, 0
    %v319 = vsel %vm311, 1, 0
    %v320 = vsel %vm312, 1, 0
    %v321 = vsel %vm313, 1, 0
    %v322 = vsel %vm314, 1, 0
    %v323 = vcvt.s32.f32 %v315
    %v324 = vcvt.s32.f32 %v316
    %v325 = vcvt.s32.f32 %v317
    %v326 = vcvt.s32.f32 %v318
    %v327 = vcvt.s32.f32 %v319
    %v328 = vcvt.s32.f32 %v320
    %v329 = vcvt.s32.f32 %v321
    %v330 = vcvt.s32.f32 %v322
    %v331 = vld [vmem:[%s1] sm:$0xff]
    %v332 = vld [vmem:[%s1 + $0x8] sm:$0xff]
    %v333 = vld [vmem:[%s1 + $0x10] sm:$0xff]
    %v334 = vld [vmem:[%s1 + $0x18] sm:$0xff]
    %v335 = vld [vmem:[%s1 + $0x20] sm:$0xff]
    %v336 = vld [vmem:[%s1 + $0x28] sm:$0xff]
    %v337 = vld [vmem:[%s1 + $0x30] sm:$0xff]
    %v338 = vld [vmem:[%s1 + $0x38] sm:$0xff]
    %v339 = vld [vmem:[%s1 + $0x40] sm:$0xff]
    %v340 = vld [vmem:[%s1 + $0x48] sm:$0xff]
    %v341 = vld [vmem:[%s1 + $0x50] sm:$0xff]
    %v342 = vld [vmem:[%s1 + $0x58] sm:$0xff]
    %v343 = vld [vmem:[%s1 + $0x60] sm:$0xff]
    %v344 = vld [vmem:[%s1 + $0x68] sm:$0xff]
    %v345 = vld [vmem:[%s1 + $0x70] sm:$0xff]
    %v346 = vld [vmem:[%s1 + $0x78] sm:$0xff]
    %v347 = vld [vmem:[%s1 + $0x80] sm:$0xff]
    %v348 = vld [vmem:[%s1 + $0x88] sm:$0xff]
    %v349 = vld [vmem:[%s1 + $0x90] sm:$0xff]
    %v350 = vld [vmem:[%s1 + $0x98] sm:$0xff]
    %v351 = vld [vmem:[%s1 + $0xa0] sm:$0xff]
    %v352 = vld [vmem:[%s1 + $0xa8] sm:$0xff]
    %v353 = vld [vmem:[%s1 + $0xb0] sm:$0xff]
    %v354 = vld [vmem:[%s1 + $0xb8] sm:$0xff]
    %v355 = vld [vmem:[%s1 + $0xc0] sm:$0xff]
    %v356 = vld [vmem:[%s1 + $0xc8] sm:$0xff]
    %v357 = vld [vmem:[%s1 + $0xd0] sm:$0xff]
    %v358 = vld [vmem:[%s1 + $0xd8] sm:$0xff]
    %v359 = vld [vmem:[%s1 + $0xe0] sm:$0xff]
    %v360 = vld [vmem:[%s1 + $0xe8] sm:$0xff]
    %v361 = vld [vmem:[%s1 + $0xf0] sm:$0xff]
    %v362 = vld [vmem:[%s1 + $0xf8] sm:$0xff]
    %v363 = vld [vmem:[%s2] sm:$0x3]
    %v365 = vlaneseq
    %v366 = vshrl.u32 %v365, 7
    %v367 = vsub.s32 0, %v366
    %v368 = vrot.slane %v363, %v367
    %v369 = vlaneseq
    %v370 = vshrl.u32 %v369, 7
    %v371 = vsub.s32 1, %v370
    %v372 = vrot.slane %v363, %v371
    %375 = vmatprep.subr.mxu0 %v332
    %376 = vmatpush1.msra.mxu0 %v331
    %377 = vmatprep.subr.mxu0 %v334
    %378 = vmatpush1.msra.mxu0 %v333
    %379 = vmatprep.subr.mxu0 %v336
    %380 = vmatpush1.msra.mxu0 %v335
    %381 = vmatprep.subr.mxu0 %v338
    %382 = vmatpush1.msra.mxu0 %v337
    %383 = vmatprep.subr.mxu0 %v340
    %384 = vmatpush1.msra.mxu0 %v339
    %385 = vmatprep.subr.mxu0 %v342
    %386 = vmatpush1.msra.mxu0 %v341
    %387 = vmatprep.subr.mxu0 %v344
    %388 = vmatpush1.msra.mxu0 %v343
    %389 = vmatprep.subr.mxu0 %v346
    %390 = vmatpush1.msra.mxu0 %v345
    %391 = vmatprep.subr.mxu0 %v348
    %392 = vmatpush1.msra.mxu0 %v347
    %393 = vmatprep.subr.mxu0 %v350
    %394 = vmatpush1.msra.mxu0 %v349
    %395 = vmatprep.subr.mxu0 %v352
    %396 = vmatpush1.msra.mxu0 %v351
    %397 = vmatprep.subr.mxu0 %v354
    %398 = vmatpush1.msra.mxu0 %v353
    %399 = vmatprep.subr.mxu0 %v356
    %400 = vmatpush1.msra.mxu0 %v355
    %401 = vmatprep.subr.mxu0 %v358
    %402 = vmatpush1.msra.mxu0 %v357
    %403 = vmatprep.subr.mxu0 %v360
    %404 = vmatpush1.msra.mxu0 %v359
    %405 = vmatprep.subr.mxu0 %v362
    %406 = vmatpush1.msra.mxu0 %v361
    %407 = vmatprep.subr.mxu0 0.0
    %408 = vmatpush1.msra.mxu0 0.0
    %409 = vmatprep.subr.mxu0 0.0
    %410 = vmatpush1.msra.mxu0 0.0
    %411 = vmatprep.subr.mxu0 0.0
    %412 = vmatpush1.msra.mxu0 0.0
    %413 = vmatprep.subr.mxu0 0.0
    %414 = vmatpush1.msra.mxu0 0.0
    %415 = vmatprep.subr.mxu0 0.0
    %416 = vmatpush1.msra.mxu0 0.0
    %417 = vmatprep.subr.mxu0 0.0
    %418 = vmatpush1.msra.mxu0 0.0
    %419 = vmatprep.subr.mxu0 0.0
    %420 = vmatpush1.msra.mxu0 0.0
    %421 = vmatprep.subr.mxu0 0.0
    %422 = vmatpush1.msra.mxu0 0.0
    %423 = vmatprep.subr.mxu0 0.0
    %424 = vmatpush1.msra.mxu0 0.0
    %425 = vmatprep.subr.mxu0 0.0
    %426 = vmatpush1.msra.mxu0 0.0
    %427 = vmatprep.subr.mxu0 0.0
    %428 = vmatpush1.msra.mxu0 0.0
    %429 = vmatprep.subr.mxu0 0.0
    %430 = vmatpush1.msra.mxu0 0.0
    %431 = vmatprep.subr.mxu0 0.0
    %432 = vmatpush1.msra.mxu0 0.0
    %433 = vmatprep.subr.mxu0 0.0
    %434 = vmatpush1.msra.mxu0 0.0
    %435 = vmatprep.subr.mxu0 0.0
    %436 = vmatpush1.msra.mxu0 0.0
    %437 = vmatprep.subr.mxu0 0.0
    %438 = vmatpush1.msra.mxu0 0.0
    %439 = vmatprep.mubr.f32.mxu0 0.0
    %440 = vmatmul.mubr.f32.gmra.mrb[0].mxu0 %v323
    %v441 = vpop.f32.mrb[0].mxu0
    %v442 = vadd.f32 %v368, %v441
    %v443 = vpop.f32.mrb[0].mxu0
    %v444 = vadd.f32 %v372, %v443
    %445 = vmatprep.mubr.f32.mxu0 0.0
    %446 = vmatmul.mubr.f32.gmra.mrb[0].mxu0 %v324
    %v447 = vpop.f32.mrb[0].mxu0
    %v448 = vadd.f32 %v368, %v447
    %v449 = vpop.f32.mrb[0].mxu0
    %v450 = vadd.f32 %v372, %v449
    %451 = vmatprep.mubr.f32.mxu0 0.0
    %452 = vmatmul.mubr.f32.gmra.mrb[0].mxu0 %v325
    %v453 = vpop.f32.mrb[0].mxu0
    %v454 = vadd.f32 %v368, %v453
    %v455 = vpop.f32.mrb[0].mxu0
    %v456 = vadd.f32 %v372, %v455
    %457 = vmatprep.mubr.f32.mxu0 0.0
    %458 = vmatmul.mubr.f32.gmra.mrb[0].mxu0 %v326
    %v459 = vpop.f32.mrb[0].mxu0
    %v460 = vadd.f32 %v368, %v459
    %v461 = vpop.f32.mrb[0].mxu0
    %v462 = vadd.f32 %v372, %v461
    %463 = vmatprep.mubr.f32.mxu0 0.0
    %464 = vmatmul.mubr.f32.gmra.mrb[0].mxu0 %v327
    %v465 = vpop.f32.mrb[0].mxu0
    %v466 = vadd.f32 %v368, %v465
    %v467 = vpop.f32.mrb[0].mxu0
    %v468 = vadd.f32 %v372, %v467
    %469 = vmatprep.mubr.f32.mxu0 0.0
    %470 = vmatmul.mubr.f32.gmra.mrb[0].mxu0 %v328
    %v471 = vpop.f32.mrb[0].mxu0
    %v472 = vadd.f32 %v368, %v471
    %v473 = vpop.f32.mrb[0].mxu0
    %v474 = vadd.f32 %v372, %v473
    %475 = vmatprep.mubr.f32.mxu0 0.0
    %476 = vmatmul.mubr.f32.gmra.mrb[0].mxu0 %v329
    %v477 = vpop.f32.mrb[0].mxu0
    %v478 = vadd.f32 %v368, %v477
    %v479 = vpop.f32.mrb[0].mxu0
    %v480 = vadd.f32 %v372, %v479
    %481 = vmatprep.mubr.f32.mxu0 0.0
    %482 = vmatmul.mubr.f32.gmra.mrb[0].mxu0 %v330
    %v483 = vpop.f32.mrb[0].mxu0
    %v484 = vadd.f32 %v368, %v483
    %v485 = vpop.f32.mrb[0].mxu0
    %v486 = vadd.f32 %v372, %v485
    %487 = vdwg.mxu0
    %488 = vst [vmem:[#allocation3] sm:$0xff] %v442
    %489 = vst [vmem:[#allocation3 + $0x8] sm:$0xff] %v444
    %490 = vst [vmem:[#allocation3 + $0x10] sm:$0xff] %v448
    %491 = vst [vmem:[#allocation3 + $0x18] sm:$0xff] %v450
    %492 = vst [vmem:[#allocation3 + $0x20] sm:$0xff] %v454
    %493 = vst [vmem:[#allocation3 + $0x28] sm:$0xff] %v456
    %494 = vst [vmem:[#allocation3 + $0x30] sm:$0xff] %v460
    %495 = vst [vmem:[#allocation3 + $0x38] sm:$0xff] %v462
    %496 = vst [vmem:[#allocation3 + $0x40] sm:$0xff] %v466
    %497 = vst [vmem:[#allocation3 + $0x48] sm:$0xff] %v468
    %498 = vst [vmem:[#allocation3 + $0x50] sm:$0xff] %v472
    %499 = vst [vmem:[#allocation3 + $0x58] sm:$0xff] %v474
    %500 = vst [vmem:[#allocation3 + $0x60] sm:$0xff] %v478
    %501 = vst [vmem:[#allocation3 + $0x68] sm:$0xff] %v480
    %502 = vst [vmem:[#allocation3 + $0x70] sm:$0xff] %v484
    %503 = vst [vmem:[#allocation3 + $0x78] sm:$0xff] %v486
    %v504 = vld [vmem:[#allocation9] sm:$0xff]
    %v505 = vld [vmem:[#allocation9 + $0x8] sm:$0xff]
    %v506 = vld [vmem:[#allocation9 + $0x10] sm:$0xff]
    %v507 = vld [vmem:[#allocation9 + $0x18] sm:$0xff]
    %v508 = vld [vmem:[#allocation9 + $0x20] sm:$0xff]
    %v509 = vld [vmem:[#allocation9 + $0x28] sm:$0xff]
    %v510 = vld [vmem:[#allocation9 + $0x30] sm:$0xff]
    %v511 = vld [vmem:[#allocation9 + $0x38] sm:$0xff]
    %v512 = vld [vmem:[#allocation9 + $0x40] sm:$0xff]
    %v513 = vld [vmem:[#allocation9 + $0x48] sm:$0xff]
    %v514 = vld [vmem:[#allocation9 + $0x50] sm:$0xff]
    %v515 = vld [vmem:[#allocation9 + $0x58] sm:$0xff]
    %v516 = vld [vmem:[#allocation9 + $0x60] sm:$0xff]
    %v517 = vld [vmem:[#allocation9 + $0x68] sm:$0xff]
    %v518 = vld [vmem:[#allocation9 + $0x70] sm:$0xff]
    %v519 = vld [vmem:[#allocation9 + $0x78] sm:$0xff]
    %v520 = vld [vmem:[#allocation3] sm:$0xff]
    %v521 = vld [vmem:[#allocation3 + $0x8] sm:$0xff]
    %vm522 = vcmask 523264
    %v524 = vsel %vm522, 0.0, 0
    %526 = vmatprep.subr.mxu0 %v505
    %527 = vmatpush1.msra.mxu0 %v504
    %528 = vmatprep.subr.mxu0 %v507
    %529 = vmatpush1.msra.mxu0 %v506
    %530 = vmatprep.subr.mxu0 %v509
    %531 = vmatpush1.msra.mxu0 %v508
    %532 = vmatprep.subr.mxu0 %v511
    %533 = vmatpush1.msra.mxu0 %v510
    %534 = vmatprep.subr.mxu0 %v513
    %535 = vmatpush1.msra.mxu0 %v512
    %536 = vmatprep.subr.mxu0 %v515
    %537 = vmatpush1.msra.mxu0 %v514
    %538 = vmatprep.subr.mxu0 %v517
    %539 = vmatpush1.msra.mxu0 %v516
    %540 = vmatprep.subr.mxu0 %v519
    %541 = vmatpush1.msra.mxu0 %v518
    %542 = vmatprep.subr.mxu0 0.0
    %543 = vmatpush1.msra.mxu0 0.0
    %544 = vmatprep.subr.mxu0 0.0
    %545 = vmatpush1.msra.mxu0 0.0
    %546 = vmatprep.subr.mxu0 0.0
    %547 = vmatpush1.msra.mxu0 0.0
    %548 = vmatprep.subr.mxu0 0.0
    %549 = vmatpush1.msra.mxu0 0.0
    %550 = vmatprep.subr.mxu0 0.0
    %551 = vmatpush1.msra.mxu0 0.0
    %552 = vmatprep.subr.mxu0 0.0
    %553 = vmatpush1.msra.mxu0 0.0
    %554 = vmatprep.subr.mxu0 0.0
    %555 = vmatpush1.msra.mxu0 0.0
    %556 = vmatprep.subr.mxu0 0.0
    %557 = vmatpush1.msra.mxu0 0.0
    %558 = vmatprep.subr.mxu0 0.0
    %559 = vmatpush1.msra.mxu0 0.0
    %560 = vmatprep.subr.mxu0 0.0
    %561 = vmatpush1.msra.mxu0 0.0
    %562 = vmatprep.subr.mxu0 0.0
    %563 = vmatpush1.msra.mxu0 0.0
    %564 = vmatprep.subr.mxu0 0.0
    %565 = vmatpush1.msra.mxu0 0.0
    %566 = vmatprep.subr.mxu0 0.0
    %567 = vmatpush1.msra.mxu0 0.0
    %568 = vmatprep.subr.mxu0 0.0
    %569 = vmatpush1.msra.mxu0 0.0
    %570 = vmatprep.subr.mxu0 0.0
    %571 = vmatpush1.msra.mxu0 0.0
    %572 = vmatprep.subr.mxu0 0.0
    %573 = vmatpush1.msra.mxu0 0.0
    %574 = vmatprep.subr.mxu0 0.0
    %575 = vmatpush1.msra.mxu0 0.0
    %576 = vmatprep.subr.mxu0 0.0
    %577 = vmatpush1.msra.mxu0 0.0
    %578 = vmatprep.subr.mxu0 0.0
    %579 = vmatpush1.msra.mxu0 0.0
    %580 = vmatprep.subr.mxu0 0.0
    %581 = vmatpush1.msra.mxu0 0.0
    %582 = vmatprep.subr.mxu0 0.0
    %583 = vmatpush1.msra.mxu0 0.0
    %584 = vmatprep.subr.mxu0 0.0
    %585 = vmatpush1.msra.mxu0 0.0
    %586 = vmatprep.subr.mxu0 0.0
    %587 = vmatpush1.msra.mxu0 0.0
    %588 = vmatprep.subr.mxu0 0.0
    %589 = vmatpush1.msra.mxu0 0.0
    %590 = vmatprep.mubr.f32.mxu0 0.0
    %591 = vmatmul.mubr.f32.gmra.mrb[0].mxu0 %v524
    %v592 = vpop.f32.mrb[0].mxu0
    %v593 = vadd.f32 0.0, %v592
    %v594 = vpop.f32.mrb[0].mxu0
    %v595 = vadd.f32 0.0, %v594
    %596 = vdwg.mxu0
    %v597 = vadd.f32 %v520, %v593
    %v598 = vadd.f32 %v521, %v595
    %v599 = vtanh.pop %v597
    %v600 = vtanh.pop %v598
    %v601 = vmul.f32 %v599, 0.5
    %v602 = vmul.f32 %v600, 0.5
    %v603 = vadd.f32 %v601, 0.5
    %v604 = vadd.f32 %v602, 0.5
    %v605 = vmul.f32 %v603, 0.0
    %607 = vrot.lane.b32.xlu0 %v600, 64
    %v608 = vpop.permute.xlu0 %607
    %v610 = vmul.f32 %v603, %v608
    %612 = vrot.lane.b32.xlu0 %v610, 64
    %v613 = vpop.permute.xlu0 %612
    %v615 = vadd.f32 %v605, %v613
    %v616 = vtanh.pop %v615
    %618 = vrot.lane.b32.xlu0 %v616, 64
    %v619 = vpop.permute.xlu0 %618
    %v621 = vmul.f32 %v604, %v619
    %622 = vst.msk [vmem:[#allocation2] sm:$0xff] %vm522, %v621
    %v623 = vld [vmem:[#allocation3 + $0x10] sm:$0xff]
    %v624 = vld [vmem:[#allocation3 + $0x18] sm:$0xff]
    %v626 = vsel %vm522, %v621, 0
    %628 = vmatprep.subr.mxu0 %v505
    %629 = vmatpush1.msra.mxu0 %v504
    %630 = vmatprep.subr.mxu0 %v507
    %631 = vmatpush1.msra.mxu0 %v506
    %632 = vmatprep.subr.mxu0 %v509
    %633 = vmatpush1.msra.mxu0 %v508
    %634 = vmatprep.subr.mxu0 %v511
    %635 = vmatpush1.msra.mxu0 %v510
    %636 = vmatprep.subr.mxu0 %v513
    %637 = vmatpush1.msra.mxu0 %v512
    %638 = vmatprep.subr.mxu0 %v515
    %639 = vmatpush1.msra.mxu0 %v514
    %640 = vmatprep.subr.mxu0 %v517
    %641 = vmatpush1.msra.mxu0 %v516
    %642 = vmatprep.subr.mxu0 %v519
    %643 = vmatpush1.msra.mxu0 %v518
    %644 = vmatprep.subr.mxu0 0.0
    %645 = vmatpush1.msra.mxu0 0.0
    %646 = vmatprep.subr.mxu0 0.0
    %647 = vmatpush1.msra.mxu0 0.0
    %648 = vmatprep.subr.mxu0 0.0
    %649 = vmatpush1.msra.mxu0 0.0
    %650 = vmatprep.subr.mxu0 0.0
    %651 = vmatpush1.msra.mxu0 0.0
    %652 = vmatprep.subr.mxu0 0.0
    %653 = vmatpush1.msra.mxu0 0.0
    %654 = vmatprep.subr.mxu0 0.0
    %655 = vmatpush1.msra.mxu0 0.0
    %656 = vmatprep.subr.mxu0 0.0
    %657 = vmatpush1.msra.mxu0 0.0
    %658 = vmatprep.subr.mxu0 0.0
    %659 = vmatpush1.msra.mxu0 0.0
    %660 = vmatprep.subr.mxu0 0.0
    %661 = vmatpush1.msra.mxu0 0.0
    %662 = vmatprep.subr.mxu0 0.0
    %663 = vmatpush1.msra.mxu0 0.0
    %664 = vmatprep.subr.mxu0 0.0
    %665 = vmatpush1.msra.mxu0 0.0
    %666 = vmatprep.subr.mxu0 0.0
    %667 = vmatpush1.msra.mxu0 0.0
    %668 = vmatprep.subr.mxu0 0.0
    %669 = vmatpush1.msra.mxu0 0.0
    %670 = vmatprep.subr.mxu0 0.0
    %671 = vmatpush1.msra.mxu0 0.0
    %672 = vmatprep.subr.mxu0 0.0
    %673 = vmatpush1.msra.mxu0 0.0
    %674 = vmatprep.subr.mxu0 0.0
    %675 = vmatpush1.msra.mxu0 0.0
    %676 = vmatprep.subr.mxu0 0.0
    %677 = vmatpush1.msra.mxu0 0.0
    %678 = vmatprep.subr.mxu0 0.0
    %679 = vmatpush1.msra.mxu0 0.0
    %680 = vmatprep.subr.mxu0 0.0
    %681 = vmatpush1.msra.mxu0 0.0
    %682 = vmatprep.subr.mxu0 0.0
    %683 = vmatpush1.msra.mxu0 0.0
    %684 = vmatprep.subr.mxu0 0.0
    %685 = vmatpush1.msra.mxu0 0.0
    %686 = vmatprep.subr.mxu0 0.0
    %687 = vmatpush1.msra.mxu0 0.0
    %688 = vmatprep.subr.mxu0 0.0
    %689 = vmatpush1.msra.mxu0 0.0
    %690 = vmatprep.subr.mxu0 0.0
    %691 = vmatpush1.msra.mxu0 0.0
    %692 = vmatprep.mubr.f32.mxu0 0.0
    %693 = vmatmul.mubr.f32.gmra.mrb[0].mxu0 %v626
    %v694 = vpop.f32.mrb[0].mxu0
    %v695 = vadd.f32 0.0, %v694
    %v696 = vpop.f32.mrb[0].mxu0
    %v697 = vadd.f32 0.0, %v696
    %698 = vdwg.mxu0
    %v699 = vadd.f32 %v623, %v695
    %v700 = vadd.f32 %v624, %v697
    %v701 = vtanh.pop %v699
    %v702 = vtanh.pop %v700
    %v703 = vmul.f32 %v701, 0.5
    %v704 = vmul.f32 %v702, 0.5
    %v705 = vadd.f32 %v703, 0.5
    %v706 = vadd.f32 %v704, 0.5
    %v707 = vmul.f32 %v705, %v615
    %709 = vrot.lane.b32.xlu0 %v702, 64
    %v710 = vpop.permute.xlu0 %709
    %v712 = vmul.f32 %v705, %v710
    %714 = vrot.lane.b32.xlu0 %v712, 64
    %v715 = vpop.permute.xlu0 %714
    %v717 = vadd.f32 %v707, %v715
    %v718 = vtanh.pop %v717
    %720 = vrot.lane.b32.xlu0 %v718, 64
    %v721 = vpop.permute.xlu0 %720
    %v723 = vmul.f32 %v706, %v721
    %724 = vst.msk [vmem:[#allocation2 + $0x8] sm:$0xff] %vm522, %v723
    %v725 = vld [vmem:[#allocation3 + $0x20] sm:$0xff]
    %v726 = vld [vmem:[#allocation3 + $0x28] sm:$0xff]
    %v728 = vsel %vm522, %v723, 0
    %730 = vmatprep.subr.mxu0 %v505
    %731 = vmatpush1.msra.mxu0 %v504
    %732 = vmatprep.subr.mxu0 %v507
    %733 = vmatpush1.msra.mxu0 %v506
    %734 = vmatprep.subr.mxu0 %v509
    %735 = vmatpush1.msra.mxu0 %v508
    %736 = vmatprep.subr.mxu0 %v511
    %737 = vmatpush1.msra.mxu0 %v510
    %738 = vmatprep.subr.mxu0 %v513
    %739 = vmatpush1.msra.mxu0 %v512
    %740 = vmatprep.subr.mxu0 %v515
    %741 = vmatpush1.msra.mxu0 %v514
    %742 = vmatprep.subr.mxu0 %v517
    %743 = vmatpush1.msra.mxu0 %v516
    %744 = vmatprep.subr.mxu0 %v519
    %745 = vmatpush1.msra.mxu0 %v518
    %746 = vmatprep.subr.mxu0 0.0
    %747 = vmatpush1.msra.mxu0 0.0
    %748 = vmatprep.subr.mxu0 0.0
    %749 = vmatpush1.msra.mxu0 0.0
    %750 = vmatprep.subr.mxu0 0.0
    %751 = vmatpush1.msra.mxu0 0.0
    %752 = vmatprep.subr.mxu0 0.0
    %753 = vmatpush1.msra.mxu0 0.0
    %754 = vmatprep.subr.mxu0 0.0
    %755 = vmatpush1.msra.mxu0 0.0
    %756 = vmatprep.subr.mxu0 0.0
    %757 = vmatpush1.msra.mxu0 0.0
    %758 = vmatprep.subr.mxu0 0.0
    %759 = vmatpush1.msra.mxu0 0.0
    %760 = vmatprep.subr.mxu0 0.0
    %761 = vmatpush1.msra.mxu0 0.0
    %762 = vmatprep.subr.mxu0 0.0
    %763 = vmatpush1.msra.mxu0 0.0
    %764 = vmatprep.subr.mxu0 0.0
    %765 = vmatpush1.msra.mxu0 0.0
    %766 = vmatprep.subr.mxu0 0.0
    %767 = vmatpush1.msra.mxu0 0.0
    %768 = vmatprep.subr.mxu0 0.0
    %769 = vmatpush1.msra.mxu0 0.0
    %770 = vmatprep.subr.mxu0 0.0
    %771 = vmatpush1.msra.mxu0 0.0
    %772 = vmatprep.subr.mxu0 0.0
    %773 = vmatpush1.msra.mxu0 0.0
    %774 = vmatprep.subr.mxu0 0.0
    %775 = vmatpush1.msra.mxu0 0.0
    %776 = vmatprep.subr.mxu0 0.0
    %777 = vmatpush1.msra.mxu0 0.0
    %778 = vmatprep.subr.mxu0 0.0
    %779 = vmatpush1.msra.mxu0 0.0
    %780 = vmatprep.subr.mxu0 0.0
    %781 = vmatpush1.msra.mxu0 0.0
    %782 = vmatprep.subr.mxu0 0.0
    %783 = vmatpush1.msra.mxu0 0.0
    %784 = vmatprep.subr.mxu0 0.0
    %785 = vmatpush1.msra.mxu0 0.0
    %786 = vmatprep.subr.mxu0 0.0
    %787 = vmatpush1.msra.mxu0 0.0
    %788 = vmatprep.subr.mxu0 0.0
    %789 = vmatpush1.msra.mxu0 0.0
    %790 = vmatprep.subr.mxu0 0.0
    %791 = vmatpush1.msra.mxu0 0.0
    %792 = vmatprep.subr.mxu0 0.0
    %793 = vmatpush1.msra.mxu0 0.0
    %794 = vmatprep.mubr.f32.mxu0 0.0
    %795 = vmatmul.mubr.f32.gmra.mrb[0].mxu0 %v728
    %v796 = vpop.f32.mrb[0].mxu0
    %v797 = vadd.f32 0.0, %v796
    %v798 = vpop.f32.mrb[0].mxu0
    %v799 = vadd.f32 0.0, %v798
    %800 = vdwg.mxu0
    %v801 = vadd.f32 %v725, %v797
    %v802 = vadd.f32 %v726, %v799
    %v803 = vtanh.pop %v801
    %v804 = vtanh.pop %v802
    %v805 = vmul.f32 %v803, 0.5
    %v806 = vmul.f32 %v804, 0.5
    %v807 = vadd.f32 %v805, 0.5
    %v808 = vadd.f32 %v806, 0.5
    %v809 = vmul.f32 %v807, %v717
    %811 = vrot.lane.b32.xlu0 %v804, 64
    %v812 = vpop.permute.xlu0 %811
    %v814 = vmul.f32 %v807, %v812
    %816 = vrot.lane.b32.xlu0 %v814, 64
    %v817 = vpop.permute.xlu0 %816
    %v819 = vadd.f32 %v809, %v817
    %v820 = vtanh.pop %v819
    %822 = vrot.lane.b32.xlu0 %v820, 64
    %v823 = vpop.permute.xlu0 %822
    %v825 = vmul.f32 %v808, %v823
    %826 = vst.msk [vmem:[#allocation2 + $0x10] sm:$0xff] %vm522, %v825
    %v827 = vld [vmem:[#allocation3 + $0x30] sm:$0xff]
    %v828 = vld [vmem:[#allocation3 + $0x38] sm:$0xff]
    %v830 = vsel %vm522, %v825, 0
    %832 = vmatprep.subr.mxu0 %v505
    %833 = vmatpush1.msra.mxu0 %v504
    %834 = vmatprep.subr.mxu0 %v507
    %835 = vmatpush1.msra.mxu0 %v506
    %836 = vmatprep.subr.mxu0 %v509
    %837 = vmatpush1.msra.mxu0 %v508
    %838 = vmatprep.subr.mxu0 %v511
    %839 = vmatpush1.msra.mxu0 %v510
    %840 = vmatprep.subr.mxu0 %v513
    %841 = vmatpush1.msra.mxu0 %v512
    %842 = vmatprep.subr.mxu0 %v515
    %843 = vmatpush1.msra.mxu0 %v514
    %844 = vmatprep.subr.mxu0 %v517
    %845 = vmatpush1.msra.mxu0 %v516
    %846 = vmatprep.subr.mxu0 %v519
    %847 = vmatpush1.msra.mxu0 %v518
    %848 = vmatprep.subr.mxu0 0.0
    %849 = vmatpush1.msra.mxu0 0.0
    %850 = vmatprep.subr.mxu0 0.0
    %851 = vmatpush1.msra.mxu0 0.0
    %852 = vmatprep.subr.mxu0 0.0
    %853 = vmatpush1.msra.mxu0 0.0
    %854 = vmatprep.subr.mxu0 0.0
    %855 = vmatpush1.msra.mxu0 0.0
    %856 = vmatprep.subr.mxu0 0.0
    %857 = vmatpush1.msra.mxu0 0.0
    %858 = vmatprep.subr.mxu0 0.0
    %859 = vmatpush1.msra.mxu0 0.0
    %860 = vmatprep.subr.mxu0 0.0
    %861 = vmatpush1.msra.mxu0 0.0
    %862 = vmatprep.subr.mxu0 0.0
    %863 = vmatpush1.msra.mxu0 0.0
    %864 = vmatprep.subr.mxu0 0.0
    %865 = vmatpush1.msra.mxu0 0.0
    %866 = vmatprep.subr.mxu0 0.0
    %867 = vmatpush1.msra.mxu0 0.0
    %868 = vmatprep.subr.mxu0 0.0
    %869 = vmatpush1.msra.mxu0 0.0
    %870 = vmatprep.subr.mxu0 0.0
    %871 = vmatpush1.msra.mxu0 0.0
    %872 = vmatprep.subr.mxu0 0.0
    %873 = vmatpush1.msra.mxu0 0.0
    %874 = vmatprep.subr.mxu0 0.0
    %875 = vmatpush1.msra.mxu0 0.0
    %876 = vmatprep.subr.mxu0 0.0
    %877 = vmatpush1.msra.mxu0 0.0
    %878 = vmatprep.subr.mxu0 0.0
    %879 = vmatpush1.msra.mxu0 0.0
    %880 = vmatprep.subr.mxu0 0.0
    %881 = vmatpush1.msra.mxu0 0.0
    %882 = vmatprep.subr.mxu0 0.0
    %883 = vmatpush1.msra.mxu0 0.0
    %884 = vmatprep.subr.mxu0 0.0
    %885 = vmatpush1.msra.mxu0 0.0
    %886 = vmatprep.subr.mxu0 0.0
    %887 = vmatpush1.msra.mxu0 0.0
    %888 = vmatprep.subr.mxu0 0.0
    %889 = vmatpush1.msra.mxu0 0.0
    %890 = vmatprep.subr.mxu0 0.0
    %891 = vmatpush1.msra.mxu0 0.0
    %892 = vmatprep.subr.mxu0 0.0
    %893 = vmatpush1.msra.mxu0 0.0
    %894 = vmatprep.subr.mxu0 0.0
    %895 = vmatpush1.msra.mxu0 0.0
    %896 = vmatprep.mubr.f32.mxu0 0.0
    %897 = vmatmul.mubr.f32.gmra.mrb[0].mxu0 %v830
    %v898 = vpop.f32.mrb[0].mxu0
    %v899 = vadd.f32 0.0, %v898
    %v900 = vpop.f32.mrb[0].mxu0
    %v901 = vadd.f32 0.0, %v900
    %902 = vdwg.mxu0
    %v903 = vadd.f32 %v827, %v899
    %v904 = vadd.f32 %v828, %v901
    %v905 = vtanh.pop %v903
    %v906 = vtanh.pop %v904
    %v907 = vmul.f32 %v905, 0.5
    %v908 = vmul.f32 %v906, 0.5
    %v909 = vadd.f32 %v907, 0.5
    %v910 = vadd.f32 %v908, 0.5
    %v911 = vmul.f32 %v909, %v819
    %913 = vrot.lane.b32.xlu0 %v906, 64
    %v914 = vpop.permute.xlu0 %913
    %v916 = vmul.f32 %v909, %v914
    %918 = vrot.lane.b32.xlu0 %v916, 64
    %v919 = vpop.permute.xlu0 %918
    %v921 = vadd.f32 %v911, %v919
    %v922 = vtanh.pop %v921
    %924 = vrot.lane.b32.xlu0 %v922, 64
    %v925 = vpop.permute.xlu0 %924
    %v927 = vmul.f32 %v910, %v925
    %928 = vst.msk [vmem:[#allocation2 + $0x18] sm:$0xff] %vm522, %v927
    %v929 = vld [vmem:[#allocation3 + $0x40] sm:$0xff]
    %v930 = vld [vmem:[#allocation3 + $0x48] sm:$0xff]
    %v932 = vsel %vm522, %v927, 0
    %934 = vmatprep.subr.mxu0 %v505
    %935 = vmatpush1.msra.mxu0 %v504
    %936 = vmatprep.subr.mxu0 %v507
    %937 = vmatpush1.msra.mxu0 %v506
    %938 = vmatprep.subr.mxu0 %v509
    %939 = vmatpush1.msra.mxu0 %v508
    %940 = vmatprep.subr.mxu0 %v511
    %941 = vmatpush1.msra.mxu0 %v510
    %942 = vmatprep.subr.mxu0 %v513
    %943 = vmatpush1.msra.mxu0 %v512
    %944 = vmatprep.subr.mxu0 %v515
    %945 = vmatpush1.msra.mxu0 %v514
    %946 = vmatprep.subr.mxu0 %v517
    %947 = vmatpush1.msra.mxu0 %v516
    %948 = vmatprep.subr.mxu0 %v519
    %949 = vmatpush1.msra.mxu0 %v518
    %950 = vmatprep.subr.mxu0 0.0
    %951 = vmatpush1.msra.mxu0 0.0
    %952 = vmatprep.subr.mxu0 0.0
    %953 = vmatpush1.msra.mxu0 0.0
    %954 = vmatprep.subr.mxu0 0.0
    %955 = vmatpush1.msra.mxu0 0.0
    %956 = vmatprep.subr.mxu0 0.0
    %957 = vmatpush1.msra.mxu0 0.0
    %958 = vmatprep.subr.mxu0 0.0
    %959 = vmatpush1.msra.mxu0 0.0
    %960 = vmatprep.subr.mxu0 0.0
    %961 = vmatpush1.msra.mxu0 0.0
    %962 = vmatprep.subr.mxu0 0.0
    %963 = vmatpush1.msra.mxu0 0.0
    %964 = vmatprep.subr.mxu0 0.0
    %965 = vmatpush1.msra.mxu0 0.0
    %966 = vmatprep.subr.mxu0 0.0
    %967 = vmatpush1.msra.mxu0 0.0
    %968 = vmatprep.subr.mxu0 0.0
    %969 = vmatpush1.msra.mxu0 0.0
    %970 = vmatprep.subr.mxu0 0.0
    %971 = vmatpush1.msra.mxu0 0.0
    %972 = vmatprep.subr.mxu0 0.0
    %973 = vmatpush1.msra.mxu0 0.0
    %974 = vmatprep.subr.mxu0 0.0
    %975 = vmatpush1.msra.mxu0 0.0
    %976 = vmatprep.subr.mxu0 0.0
    %977 = vmatpush1.msra.mxu0 0.0
    %978 = vmatprep.subr.mxu0 0.0
    %979 = vmatpush1.msra.mxu0 0.0
    %980 = vmatprep.subr.mxu0 0.0
    %981 = vmatpush1.msra.mxu0 0.0
    %982 = vmatprep.subr.mxu0 0.0
    %983 = vmatpush1.msra.mxu0 0.0
    %984 = vmatprep.subr.mxu0 0.0
    %985 = vmatpush1.msra.mxu0 0.0
    %986 = vmatprep.subr.mxu0 0.0
    %987 = vmatpush1.msra.mxu0 0.0
    %988 = vmatprep.subr.mxu0 0.0
    %989 = vmatpush1.msra.mxu0 0.0
    %990 = vmatprep.subr.mxu0 0.0
    %991 = vmatpush1.msra.mxu0 0.0
    %992 = vmatprep.subr.mxu0 0.0
    %993 = vmatpush1.msra.mxu0 0.0
    %994 = vmatprep.subr.mxu0 0.0
    %995 = vmatpush1.msra.mxu0 0.0
    %996 = vmatprep.subr.mxu0 0.0
    %997 = vmatpush1.msra.mxu0 0.0
    %998 = vmatprep.mubr.f32.mxu0 0.0
    %999 = vmatmul.mubr.f32.gmra.mrb[0].mxu0 %v932
    %v1000 = vpop.f32.mrb[0].mxu0
    %v1001 = vadd.f32 0.0, %v1000
    %v1002 = vpop.f32.mrb[0].mxu0
    %v1003 = vadd.f32 0.0, %v1002
    %1004 = vdwg.mxu0
    %v1005 = vadd.f32 %v929, %v1001
    %v1006 = vadd.f32 %v930, %v1003
    %v1007 = vtanh.pop %v1005
    %v1008 = vtanh.pop %v1006
    %v1009 = vmul.f32 %v1007, 0.5
    %v1010 = vmul.f32 %v1008, 0.5
    %v1011 = vadd.f32 %v1009, 0.5
    %v1012 = vadd.f32 %v1010, 0.5
    %v1013 = vmul.f32 %v1011, %v921
    %1015 = vrot.lane.b32.xlu0 %v1008, 64
    %v1016 = vpop.permute.xlu0 %1015
    %v1018 = vmul.f32 %v1011, %v1016
    %1020 = vrot.lane.b32.xlu0 %v1018, 64
    %v1021 = vpop.permute.xlu0 %1020
    %v1023 = vadd.f32 %v1013, %v1021
    %v1024 = vtanh.pop %v1023
    %1026 = vrot.lane.b32.xlu0 %v1024, 64
    %v1027 = vpop.permute.xlu0 %1026
    %v1029 = vmul.f32 %v1012, %v1027
    %1030 = vst.msk [vmem:[#allocation2 + $0x20] sm:$0xff] %vm522, %v1029
    %v1031 = vld [vmem:[#allocation3 + $0x50] sm:$0xff]
    %v1032 = vld [vmem:[#allocation3 + $0x58] sm:$0xff]
    %v1034 = vsel %vm522, %v1029, 0
    %1036 = vmatprep.subr.mxu0 %v505
    %1037 = vmatpush1.msra.mxu0 %v504
    %1038 = vmatprep.subr.mxu0 %v507
    %1039 = vmatpush1.msra.mxu0 %v506
    %1040 = vmatprep.subr.mxu0 %v509
    %1041 = vmatpush1.msra.mxu0 %v508
    %1042 = vmatprep.subr.mxu0 %v511
    %1043 = vmatpush1.msra.mxu0 %v510
    %1044 = vmatprep.subr.mxu0 %v513
    %1045 = vmatpush1.msra.mxu0 %v512
    %1046 = vmatprep.subr.mxu0 %v515
    %1047 = vmatpush1.msra.mxu0 %v514
    %1048 = vmatprep.subr.mxu0 %v517
    %1049 = vmatpush1.msra.mxu0 %v516
    %1050 = vmatprep.subr.mxu0 %v519
    %1051 = vmatpush1.msra.mxu0 %v518
    %1052 = vmatprep.subr.mxu0 0.0
    %1053 = vmatpush1.msra.mxu0 0.0
    %1054 = vmatprep.subr.mxu0 0.0
    %1055 = vmatpush1.msra.mxu0 0.0
    %1056 = vmatprep.subr.mxu0 0.0
    %1057 = vmatpush1.msra.mxu0 0.0
    %1058 = vmatprep.subr.mxu0 0.0
    %1059 = vmatpush1.msra.mxu0 0.0
    %1060 = vmatprep.subr.mxu0 0.0
    %1061 = vmatpush1.msra.mxu0 0.0
    %1062 = vmatprep.subr.mxu0 0.0
    %1063 = vmatpush1.msra.mxu0 0.0
    %1064 = vmatprep.subr.mxu0 0.0
    %1065 = vmatpush1.msra.mxu0 0.0
    %1066 = vmatprep.subr.mxu0 0.0
    %1067 = vmatpush1.msra.mxu0 0.0
    %1068 = vmatprep.subr.mxu0 0.0
    %1069 = vmatpush1.msra.mxu0 0.0
    %1070 = vmatprep.subr.mxu0 0.0
    %1071 = vmatpush1.msra.mxu0 0.0
    %1072 = vmatprep.subr.mxu0 0.0
    %1073 = vmatpush1.msra.mxu0 0.0
    %1074 = vmatprep.subr.mxu0 0.0
    %1075 = vmatpush1.msra.mxu0 0.0
    %1076 = vmatprep.subr.mxu0 0.0
    %1077 = vmatpush1.msra.mxu0 0.0
    %1078 = vmatprep.subr.mxu0 0.0
    %1079 = vmatpush1.msra.mxu0 0.0
    %1080 = vmatprep.subr.mxu0 0.0
    %1081 = vmatpush1.msra.mxu0 0.0
    %1082 = vmatprep.subr.mxu0 0.0
    %1083 = vmatpush1.msra.mxu0 0.0
    %1084 = vmatprep.subr.mxu0 0.0
    %1085 = vmatpush1.msra.mxu0 0.0
    %1086 = vmatprep.subr.mxu0 0.0
    %1087 = vmatpush1.msra.mxu0 0.0
    %1088 = vmatprep.subr.mxu0 0.0
    %1089 = vmatpush1.msra.mxu0 0.0
    %1090 = vmatprep.subr.mxu0 0.0
    %1091 = vmatpush1.msra.mxu0 0.0
    %1092 = vmatprep.subr.mxu0 0.0
    %1093 = vmatpush1.msra.mxu0 0.0
    %1094 = vmatprep.subr.mxu0 0.0
    %1095 = vmatpush1.msra.mxu0 0.0
    %1096 = vmatprep.subr.mxu0 0.0
    %1097 = vmatpush1.msra.mxu0 0.0
    %1098 = vmatprep.subr.mxu0 0.0
    %1099 = vmatpush1.msra.mxu0 0.0
    %1100 = vmatprep.mubr.f32.mxu0 0.0
    %1101 = vmatmul.mubr.f32.gmra.mrb[0].mxu0 %v1034
    %v1102 = vpop.f32.mrb[0].mxu0
    %v1103 = vadd.f32 0.0, %v1102
    %v1104 = vpop.f32.mrb[0].mxu0
    %v1105 = vadd.f32 0.0, %v1104
    %1106 = vdwg.mxu0
    %v1107 = vadd.f32 %v1031, %v1103
    %v1108 = vadd.f32 %v1032, %v1105
    %v1109 = vtanh.pop %v1107
    %v1110 = vtanh.pop %v1108
    %v1111 = vmul.f32 %v1109, 0.5
    %v1112 = vmul.f32 %v1110, 0.5
    %v1113 = vadd.f32 %v1111, 0.5
    %v1114 = vadd.f32 %v1112, 0.5
    %v1115 = vmul.f32 %v1113, %v1023
    %1117 = vrot.lane.b32.xlu0 %v1110, 64
    %v1118 = vpop.permute.xlu0 %1117
    %v1120 = vmul.f32 %v1113, %v1118
    %1122 = vrot.lane.b32.xlu0 %v1120, 64
    %v1123 = vpop.permute.xlu0 %1122
    %v1125 = vadd.f32 %v1115, %v1123
    %v1126 = vtanh.pop %v1125
    %1128 = vrot.lane.b32.xlu0 %v1126, 64
    %v1129 = vpop.permute.xlu0 %1128
    %v1131 = vmul.f32 %v1114, %v1129
    %1132 = vst.msk [vmem:[#allocation2 + $0x28] sm:$0xff] %vm522, %v1131
    %v1133 = vld [vmem:[#allocation3 + $0x60] sm:$0xff]
    %v1134 = vld [vmem:[#allocation3 + $0x68] sm:$0xff]
    %v1136 = vsel %vm522, %v1131, 0
    %1138 = vmatprep.subr.mxu0 %v505
    %1139 = vmatpush1.msra.mxu0 %v504
    %1140 = vmatprep.subr.mxu0 %v507
    %1141 = vmatpush1.msra.mxu0 %v506
    %1142 = vmatprep.subr.mxu0 %v509
    %1143 = vmatpush1.msra.mxu0 %v508
    %1144 = vmatprep.subr.mxu0 %v511
    %1145 = vmatpush1.msra.mxu0 %v510
    %1146 = vmatprep.subr.mxu0 %v513
    %1147 = vmatpush1.msra.mxu0 %v512
    %1148 = vmatprep.subr.mxu0 %v515
    %1149 = vmatpush1.msra.mxu0 %v514
    %1150 = vmatprep.subr.mxu0 %v517
    %1151 = vmatpush1.msra.mxu0 %v516
    %1152 = vmatprep.subr.mxu0 %v519
    %1153 = vmatpush1.msra.mxu0 %v518
    %1154 = vmatprep.subr.mxu0 0.0
    %1155 = vmatpush1.msra.mxu0 0.0
    %1156 = vmatprep.subr.mxu0 0.0
    %1157 = vmatpush1.msra.mxu0 0.0
    %1158 = vmatprep.subr.mxu0 0.0
    %1159 = vmatpush1.msra.mxu0 0.0
    %1160 = vmatprep.subr.mxu0 0.0
    %1161 = vmatpush1.msra.mxu0 0.0
    %1162 = vmatprep.subr.mxu0 0.0
    %1163 = vmatpush1.msra.mxu0 0.0
    %1164 = vmatprep.subr.mxu0 0.0
    %1165 = vmatpush1.msra.mxu0 0.0
    %1166 = vmatprep.subr.mxu0 0.0
    %1167 = vmatpush1.msra.mxu0 0.0
    %1168 = vmatprep.subr.mxu0 0.0
    %1169 = vmatpush1.msra.mxu0 0.0
    %1170 = vmatprep.subr.mxu0 0.0
    %1171 = vmatpush1.msra.mxu0 0.0
    %1172 = vmatprep.subr.mxu0 0.0
    %1173 = vmatpush1.msra.mxu0 0.0
    %1174 = vmatprep.subr.mxu0 0.0
    %1175 = vmatpush1.msra.mxu0 0.0
    %1176 = vmatprep.subr.mxu0 0.0
    %1177 = vmatpush1.msra.mxu0 0.0
    %1178 = vmatprep.subr.mxu0 0.0
    %1179 = vmatpush1.msra.mxu0 0.0
    %1180 = vmatprep.subr.mxu0 0.0
    %1181 = vmatpush1.msra.mxu0 0.0
    %1182 = vmatprep.subr.mxu0 0.0
    %1183 = vmatpush1.msra.mxu0 0.0
    %1184 = vmatprep.subr.mxu0 0.0
    %1185 = vmatpush1.msra.mxu0 0.0
    %1186 = vmatprep.subr.mxu0 0.0
    %1187 = vmatpush1.msra.mxu0 0.0
    %1188 = vmatprep.subr.mxu0 0.0
    %1189 = vmatpush1.msra.mxu0 0.0
    %1190 = vmatprep.subr.mxu0 0.0
    %1191 = vmatpush1.msra.mxu0 0.0
    %1192 = vmatprep.subr.mxu0 0.0
    %1193 = vmatpush1.msra.mxu0 0.0
    %1194 = vmatprep.subr.mxu0 0.0
    %1195 = vmatpush1.msra.mxu0 0.0
    %1196 = vmatprep.subr.mxu0 0.0
    %1197 = vmatpush1.msra.mxu0 0.0
    %1198 = vmatprep.subr.mxu0 0.0
    %1199 = vmatpush1.msra.mxu0 0.0
    %1200 = vmatprep.subr.mxu0 0.0
    %1201 = vmatpush1.msra.mxu0 0.0
    %1202 = vmatprep.mubr.f32.mxu0 0.0
    %1203 = vmatmul.mubr.f32.gmra.mrb[0].mxu0 %v1136
    %v1204 = vpop.f32.mrb[0].mxu0
    %v1205 = vadd.f32 0.0, %v1204
    %v1206 = vpop.f32.mrb[0].mxu0
    %v1207 = vadd.f32 0.0, %v1206
    %1208 = vdwg.mxu0
    %v1209 = vadd.f32 %v1133, %v1205
    %v1210 = vadd.f32 %v1134, %v1207
    %v1211 = vtanh.pop %v1209
    %v1212 = vtanh.pop %v1210
    %v1213 = vmul.f32 %v1211, 0.5
    %v1214 = vmul.f32 %v1212, 0.5
    %v1215 = vadd.f32 %v1213, 0.5
    %v1216 = vadd.f32 %v1214, 0.5
    %v1217 = vmul.f32 %v1215, %v1125
    %1219 = vrot.lane.b32.xlu0 %v1212, 64
    %v1220 = vpop.permute.xlu0 %1219
    %v1222 = vmul.f32 %v1215, %v1220
    %1224 = vrot.lane.b32.xlu0 %v1222, 64
    %v1225 = vpop.permute.xlu0 %1224
    %v1227 = vadd.f32 %v1217, %v1225
    %v1228 = vtanh.pop %v1227
    %1230 = vrot.lane.b32.xlu0 %v1228, 64
    %v1231 = vpop.permute.xlu0 %1230
    %v1233 = vmul.f32 %v1216, %v1231
    %1234 = vst.msk [vmem:[#allocation2 + $0x30] sm:$0xff] %vm522, %v1233
    %v1235 = vld [vmem:[#allocation3 + $0x70] sm:$0xff]
    %v1236 = vld [vmem:[#allocation3 + $0x78] sm:$0xff]
    %v1238 = vsel %vm522, %v1233, 0
    %1240 = vmatprep.subr.mxu0 %v505
    %1241 = vmatpush1.msra.mxu0 %v504
    %1242 = vmatprep.subr.mxu0 %v507
    %1243 = vmatpush1.msra.mxu0 %v506
    %1244 = vmatprep.subr.mxu0 %v509
    %1245 = vmatpush1.msra.mxu0 %v508
    %1246 = vmatprep.subr.mxu0 %v511
    %1247 = vmatpush1.msra.mxu0 %v510
    %1248 = vmatprep.subr.mxu0 %v513
    %1249 = vmatpush1.msra.mxu0 %v512
    %1250 = vmatprep.subr.mxu0 %v515
    %1251 = vmatpush1.msra.mxu0 %v514
    %1252 = vmatprep.subr.mxu0 %v517
    %1253 = vmatpush1.msra.mxu0 %v516
    %1254 = vmatprep.subr.mxu0 %v519
    %1255 = vmatpush1.msra.mxu0 %v518
    %1256 = vmatprep.subr.mxu0 0.0
    %1257 = vmatpush1.msra.mxu0 0.0
    %1258 = vmatprep.subr.mxu0 0.0
    %1259 = vmatpush1.msra.mxu0 0.0
    %1260 = vmatprep.subr.mxu0 0.0
    %1261 = vmatpush1.msra.mxu0 0.0
    %1262 = vmatprep.subr.mxu0 0.0
    %1263 = vmatpush1.msra.mxu0 0.0
    %1264 = vmatprep.subr.mxu0 0.0
    %1265 = vmatpush1.msra.mxu0 0.0
    %1266 = vmatprep.subr.mxu0 0.0
    %1267 = vmatpush1.msra.mxu0 0.0
    %1268 = vmatprep.subr.mxu0 0.0
    %1269 = vmatpush1.msra.mxu0 0.0
    %1270 = vmatprep.subr.mxu0 0.0
    %1271 = vmatpush1.msra.mxu0 0.0
    %1272 = vmatprep.subr.mxu0 0.0
    %1273 = vmatpush1.msra.mxu0 0.0
    %1274 = vmatprep.subr.mxu0 0.0
    %1275 = vmatpush1.msra.mxu0 0.0
    %1276 = vmatprep.subr.mxu0 0.0
    %1277 = vmatpush1.msra.mxu0 0.0
    %1278 = vmatprep.subr.mxu0 0.0
    %1279 = vmatpush1.msra.mxu0 0.0
    %1280 = vmatprep.subr.mxu0 0.0
    %1281 = vmatpush1.msra.mxu0 0.0
    %1282 = vmatprep.subr.mxu0 0.0
    %1283 = vmatpush1.msra.mxu0 0.0
    %1284 = vmatprep.subr.mxu0 0.0
    %1285 = vmatpush1.msra.mxu0 0.0
    %1286 = vmatprep.subr.mxu0 0.0
    %1287 = vmatpush1.msra.mxu0 0.0
    %1288 = vmatprep.subr.mxu0 0.0
    %1289 = vmatpush1.msra.mxu0 0.0
    %1290 = vmatprep.subr.mxu0 0.0
    %1291 = vmatpush1.msra.mxu0 0.0
    %1292 = vmatprep.subr.mxu0 0.0
    %1293 = vmatpush1.msra.mxu0 0.0
    %1294 = vmatprep.subr.mxu0 0.0
    %1295 = vmatpush1.msra.mxu0 0.0
    %1296 = vmatprep.subr.mxu0 0.0
    %1297 = vmatpush1.msra.mxu0 0.0
    %1298 = vmatprep.subr.mxu0 0.0
    %1299 = vmatpush1.msra.mxu0 0.0
    %1300 = vmatprep.subr.mxu0 0.0
    %1301 = vmatpush1.msra.mxu0 0.0
    %1302 = vmatprep.subr.mxu0 0.0
    %1303 = vmatpush1.msra.mxu0 0.0
    %1304 = vmatprep.mubr.f32.mxu0 0.0
    %1305 = vmatmul.mubr.f32.gmra.mrb[0].mxu0 %v1238
    %v1306 = vpop.f32.mrb[0].mxu0
    %v1307 = vadd.f32 0.0, %v1306
    %v1308 = vpop.f32.mrb[0].mxu0
    %v1309 = vadd.f32 0.0, %v1308
    %1310 = vdwg.mxu0
    %v1311 = vadd.f32 %v1235, %v1307
    %v1312 = vadd.f32 %v1236, %v1309
    %v1313 = vtanh.pop %v1311
    %v1314 = vtanh.pop %v1312
    %v1315 = vmul.f32 %v1313, 0.5
    %v1316 = vmul.f32 %v1314, 0.5
    %v1317 = vadd.f32 %v1315, 0.5
    %v1318 = vadd.f32 %v1316, 0.5
    %v1319 = vmul.f32 %v1317, %v1227
    %1321 = vrot.lane.b32.xlu0 %v1314, 64
    %v1322 = vpop.permute.xlu0 %1321
    %v1324 = vmul.f32 %v1317, %v1322
    %1326 = vrot.lane.b32.xlu0 %v1324, 64
    %v1327 = vpop.permute.xlu0 %1326
    %v1329 = vadd.f32 %v1319, %v1327
    %v1330 = vtanh.pop %v1329
    %1332 = vrot.lane.b32.xlu0 %v1330, 64
    %v1333 = vpop.permute.xlu0 %1332
    %v1335 = vmul.f32 %v1318, %v1333
    %1336 = vst.msk [vmem:[#allocation2 + $0x38] sm:$0xff] %vm522, %v1335
    %v1337 = vld [vmem:[#allocation2] sm:$0xff]
    %v1338 = vld [vmem:[#allocation2 + $0x8] sm:$0xff]
    %v1339 = vld [vmem:[#allocation2 + $0x10] sm:$0xff]
    %v1340 = vld [vmem:[#allocation2 + $0x18] sm:$0xff]
    %v1341 = vld [vmem:[#allocation2 + $0x20] sm:$0xff]
    %v1342 = vld [vmem:[#allocation2 + $0x28] sm:$0xff]
    %v1343 = vld [vmem:[#allocation2 + $0x30] sm:$0xff]
    %v1344 = vld [vmem:[#allocation2 + $0x38] sm:$0xff]
    %v1345 = vld [vmem:[%s3] sm:$0xff]
    %v1346 = vld [vmem:[%s3 + $0x8] sm:$0xff]
    %v1347 = vld [vmem:[%s3 + $0x10] sm:$0xff]
    %v1348 = vld [vmem:[%s3 + $0x18] sm:$0xff]
    %v1349 = vld [vmem:[%s3 + $0x20] sm:$0xff]
    %v1350 = vld [vmem:[%s3 + $0x28] sm:$0xff]
    %v1351 = vld [vmem:[%s3 + $0x30] sm:$0xff]
    %v1352 = vld [vmem:[%s3 + $0x38] sm:$0xff]
    %v1353 = vld [vmem:[%s3 + $0x40] sm:$0xff]
    %v1354 = vld [vmem:[%s3 + $0x48] sm:$0xff]
    %v1355 = vld [vmem:[%s3 + $0x50] sm:$0xff]
    %v1356 = vld [vmem:[%s3 + $0x58] sm:$0xff]
    %v1357 = vld [vmem:[%s3 + $0x60] sm:$0xff]
    %v1358 = vld [vmem:[%s3 + $0x68] sm:$0xff]
    %v1359 = vld [vmem:[%s3 + $0x70] sm:$0xff]
    %v1360 = vld [vmem:[%s3 + $0x78] sm:$0xff]
    %v1361 = vld [vmem:[%s5] sm:$0x3]
    %v1363 = vlaneseq
    %v1364 = vshrl.u32 %v1363, 7
    %v1365 = vsub.s32 0, %v1364
    %v1366 = vrot.slane %v1361, %v1365
    %v1367 = vlaneseq
    %v1368 = vshrl.u32 %v1367, 7
    %v1369 = vsub.s32 1, %v1368
    %v1370 = vrot.slane %v1361, %v1369
    %v1374 = vsel %vm522, %v1337, 0
    %v1377 = vsel %vm522, %v1338, 0
    %v1380 = vsel %vm522, %v1339, 0
    %v1383 = vsel %vm522, %v1340, 0
    %v1386 = vsel %vm522, %v1341, 0
    %v1389 = vsel %vm522, %v1342, 0
    %v1392 = vsel %vm522, %v1343, 0
    %v1395 = vsel %vm522, %v1344, 0
    %1397 = vmatprep.subr.mxu0 %v1346
    %1398 = vmatpush1.msra.mxu0 %v1345
    %1399 = vmatprep.subr.mxu0 %v1348
    %1400 = vmatpush1.msra.mxu0 %v1347
    %1401 = vmatprep.subr.mxu0 %v1350
    %1402 = vmatpush1.msra.mxu0 %v1349
    %1403 = vmatprep.subr.mxu0 %v1352
    %1404 = vmatpush1.msra.mxu0 %v1351
    %1405 = vmatprep.subr.mxu0 %v1354
    %1406 = vmatpush1.msra.mxu0 %v1353
    %1407 = vmatprep.subr.mxu0 %v1356
    %1408 = vmatpush1.msra.mxu0 %v1355
    %1409 = vmatprep.subr.mxu0 %v1358
    %1410 = vmatpush1.msra.mxu0 %v1357
    %1411 = vmatprep.subr.mxu0 %v1360
    %1412 = vmatpush1.msra.mxu0 %v1359
    %1413 = vmatprep.subr.mxu0 0.0
    %1414 = vmatpush1.msra.mxu0 0.0
    %1415 = vmatprep.subr.mxu0 0.0
    %1416 = vmatpush1.msra.mxu0 0.0
    %1417 = vmatprep.subr.mxu0 0.0
    %1418 = vmatpush1.msra.mxu0 0.0
    %1419 = vmatprep.subr.mxu0 0.0
    %1420 = vmatpush1.msra.mxu0 0.0
    %1421 = vmatprep.subr.mxu0 0.0
    %1422 = vmatpush1.msra.mxu0 0.0
    %1423 = vmatprep.subr.mxu0 0.0
    %1424 = vmatpush1.msra.mxu0 0.0
    %1425 = vmatprep.subr.mxu0 0.0
    %1426 = vmatpush1.msra.mxu0 0.0
    %1427 = vmatprep.subr.mxu0 0.0
    %1428 = vmatpush1.msra.mxu0 0.0
    %1429 = vmatprep.subr.mxu0 0.0
    %1430 = vmatpush1.msra.mxu0 0.0
    %1431 = vmatprep.subr.mxu0 0.0
    %1432 = vmatpush1.msra.mxu0 0.0
    %1433 = vmatprep.subr.mxu0 0.0
    %1434 = vmatpush1.msra.mxu0 0.0
    %1435 = vmatprep.subr.mxu0 0.0
    %1436 = vmatpush1.msra.mxu0 0.0
    %1437 = vmatprep.subr.mxu0 0.0
    %1438 = vmatpush1.msra.mxu0 0.0
    %1439 = vmatprep.subr.mxu0 0.0
    %1440 = vmatpush1.msra.mxu0 0.0
    %1441 = vmatprep.subr.mxu0 0.0
    %1442 = vmatpush1.msra.mxu0 0.0
    %1443 = vmatprep.subr.mxu0 0.0
    %1444 = vmatpush1.msra.mxu0 0.0
    %1445 = vmatprep.subr.mxu0 0.0
    %1446 = vmatpush1.msra.mxu0 0.0
    %1447 = vmatprep.subr.mxu0 0.0
    %1448 = vmatpush1.msra.mxu0 0.0
    %1449 = vmatprep.subr.mxu0 0.0
    %1450 = vmatpush1.msra.mxu0 0.0
    %1451 = vmatprep.subr.mxu0 0.0
    %1452 = vmatpush1.msra.mxu0 0.0
    %1453 = vmatprep.subr.mxu0 0.0
    %1454 = vmatpush1.msra.mxu0 0.0
    %1455 = vmatprep.subr.mxu0 0.0
    %1456 = vmatpush1.msra.mxu0 0.0
    %1457 = vmatprep.subr.mxu0 0.0
    %1458 = vmatpush1.msra.mxu0 0.0
    %1459 = vmatprep.subr.mxu0 0.0
    %1460 = vmatpush1.msra.mxu0 0.0
    %1461 = vmatprep.mubr.f32.mxu0 0.0
    %1462 = vmatmul.mubr.f32.gmra.mrb[0].mxu0 %v1374
    %v1463 = vpop.f32.mrb[0].mxu0
    %v1464 = vadd.f32 %v1366, %v1463
    %v1465 = vpop.f32.mrb[0].mxu0
    %v1466 = vadd.f32 %v1370, %v1465
    %1467 = vmatprep.mubr.f32.mxu0 0.0
    %1468 = vmatmul.mubr.f32.gmra.mrb[0].mxu0 %v1377
    %v1469 = vpop.f32.mrb[0].mxu0
    %v1470 = vadd.f32 %v1366, %v1469
    %v1471 = vpop.f32.mrb[0].mxu0
    %v1472 = vadd.f32 %v1370, %v1471
    %1473 = vmatprep.mubr.f32.mxu0 0.0
    %1474 = vmatmul.mubr.f32.gmra.mrb[0].mxu0 %v1380
    %v1475 = vpop.f32.mrb[0].mxu0
    %v1476 = vadd.f32 %v1366, %v1475
    %v1477 = vpop.f32.mrb[0].mxu0
    %v1478 = vadd.f32 %v1370, %v1477
    %1479 = vmatprep.mubr.f32.mxu0 0.0
    %1480 = vmatmul.mubr.f32.gmra.mrb[0].mxu0 %v1383
    %v1481 = vpop.f32.mrb[0].mxu0
    %v1482 = vadd.f32 %v1366, %v1481
    %v1483 = vpop.f32.mrb[0].mxu0
    %v1484 = vadd.f32 %v1370, %v1483
    %1485 = vmatprep.mubr.f32.mxu0 0.0
    %1486 = vmatmul.mubr.f32.gmra.mrb[0].mxu0 %v1386
    %v1487 = vpop.f32.mrb[0].mxu0
    %v1488 = vadd.f32 %v1366, %v1487
    %v1489 = vpop.f32.mrb[0].mxu0
    %v1490 = vadd.f32 %v1370, %v1489
    %1491 = vmatprep.mubr.f32.mxu0 0.0
    %1492 = vmatmul.mubr.f32.gmra.mrb[0].mxu0 %v1389
    %v1493 = vpop.f32.mrb[0].mxu0
    %v1494 = vadd.f32 %v1366, %v1493
    %v1495 = vpop.f32.mrb[0].mxu0
    %v1496 = vadd.f32 %v1370, %v1495
    %1497 = vmatprep.mubr.f32.mxu0 0.0
    %1498 = vmatmul.mubr.f32.gmra.mrb[0].mxu0 %v1392
    %v1499 = vpop.f32.mrb[0].mxu0
    %v1500 = vadd.f32 %v1366, %v1499
    %v1501 = vpop.f32.mrb[0].mxu0
    %v1502 = vadd.f32 %v1370, %v1501
    %1503 = vmatprep.mubr.f32.mxu0 0.0
    %1504 = vmatmul.mubr.f32.gmra.mrb[0].mxu0 %v1395
    %v1505 = vpop.f32.mrb[0].mxu0
    %v1506 = vadd.f32 %v1366, %v1505
    %v1507 = vpop.f32.mrb[0].mxu0
    %v1508 = vadd.f32 %v1370, %v1507
    %1509 = vdwg.mxu0
    %v1510 = vld [vmem:[#allocation4] sm:$0xff]
    %v1511 = vld [vmem:[#allocation4 + $0x8] sm:$0xff]
    %v1512 = vld [vmem:[#allocation4 + $0x10] sm:$0xff]
    %v1513 = vld [vmem:[#allocation4 + $0x18] sm:$0xff]
    %v1514 = vld [vmem:[#allocation4 + $0x20] sm:$0xff]
    %v1515 = vld [vmem:[#allocation4 + $0x28] sm:$0xff]
    %v1516 = vld [vmem:[#allocation4 + $0x30] sm:$0xff]
    %v1517 = vld [vmem:[#allocation4 + $0x38] sm:$0xff]
    %v1518 = vld [vmem:[#allocation4 + $0x40] sm:$0xff]
    %v1519 = vld [vmem:[#allocation4 + $0x48] sm:$0xff]
    %v1520 = vld [vmem:[#allocation4 + $0x50] sm:$0xff]
    %v1521 = vld [vmem:[#allocation4 + $0x58] sm:$0xff]
    %v1522 = vld [vmem:[#allocation4 + $0x60] sm:$0xff]
    %v1523 = vld [vmem:[#allocation4 + $0x68] sm:$0xff]
    %v1524 = vld [vmem:[#allocation4 + $0x70] sm:$0xff]
    %v1525 = vld [vmem:[#allocation4 + $0x78] sm:$0xff]
    %1526 = vmatprep.subr.mxu0 %v1511
    %1527 = vmatpush1.msra.mxu0 %v1510
    %1528 = vmatprep.subr.mxu0 %v1513
    %1529 = vmatpush1.msra.mxu0 %v1512
    %1530 = vmatprep.subr.mxu0 %v1515
    %1531 = vmatpush1.msra.mxu0 %v1514
    %1532 = vmatprep.subr.mxu0 %v1517
    %1533 = vmatpush1.msra.mxu0 %v1516
    %1534 = vmatprep.subr.mxu0 %v1519
    %1535 = vmatpush1.msra.mxu0 %v1518
    %1536 = vmatprep.subr.mxu0 %v1521
    %1537 = vmatpush1.msra.mxu0 %v1520
    %1538 = vmatprep.subr.mxu0 %v1523
    %1539 = vmatpush1.msra.mxu0 %v1522
    %1540 = vmatprep.subr.mxu0 %v1525
    %1541 = vmatpush1.msra.mxu0 %v1524
    %1542 = vmatprep.subr.mxu0 0.0
    %1543 = vmatpush1.msra.mxu0 0.0
    %1544 = vmatprep.subr.mxu0 0.0
    %1545 = vmatpush1.msra.mxu0 0.0
    %1546 = vmatprep.subr.mxu0 0.0
    %1547 = vmatpush1.msra.mxu0 0.0
    %1548 = vmatprep.subr.mxu0 0.0
    %1549 = vmatpush1.msra.mxu0 0.0
    %1550 = vmatprep.subr.mxu0 0.0
    %1551 = vmatpush1.msra.mxu0 0.0
    %1552 = vmatprep.subr.mxu0 0.0
    %1553 = vmatpush1.msra.mxu0 0.0
    %1554 = vmatprep.subr.mxu0 0.0
    %1555 = vmatpush1.msra.mxu0 0.0
    %1556 = vmatprep.subr.mxu0 0.0
    %1557 = vmatpush1.msra.mxu0 0.0
    %1558 = vmatprep.subr.mxu0 0.0
    %1559 = vmatpush1.msra.mxu0 0.0
    %1560 = vmatprep.subr.mxu0 0.0
    %1561 = vmatpush1.msra.mxu0 0.0
    %1562 = vmatprep.subr.mxu0 0.0
    %1563 = vmatpush1.msra.mxu0 0.0
    %1564 = vmatprep.subr.mxu0 0.0
    %1565 = vmatpush1.msra.mxu0 0.0
    %1566 = vmatprep.subr.mxu0 0.0
    %1567 = vmatpush1.msra.mxu0 0.0
    %1568 = vmatprep.subr.mxu0 0.0
    %1569 = vmatpush1.msra.mxu0 0.0
    %1570 = vmatprep.subr.mxu0 0.0
    %1571 = vmatpush1.msra.mxu0 0.0
    %1572 = vmatprep.subr.mxu0 0.0
    %1573 = vmatpush1.msra.mxu0 0.0
    %1574 = vmatprep.subr.mxu0 0.0
    %1575 = vmatpush1.msra.mxu0 0.0
    %1576 = vmatprep.subr.mxu0 0.0
    %1577 = vmatpush1.msra.mxu0 0.0
    %1578 = vmatprep.subr.mxu0 0.0
    %1579 = vmatpush1.msra.mxu0 0.0
    %1580 = vmatprep.subr.mxu0 0.0
    %1581 = vmatpush1.msra.mxu0 0.0
    %1582 = vmatprep.subr.mxu0 0.0
    %1583 = vmatpush1.msra.mxu0 0.0
    %1584 = vmatprep.subr.mxu0 0.0
    %1585 = vmatpush1.msra.mxu0 0.0
    %1586 = vmatprep.subr.mxu0 0.0
    %1587 = vmatpush1.msra.mxu0 0.0
    %1588 = vmatprep.subr.mxu0 0.0
    %1589 = vmatpush1.msra.mxu0 0.0
    %1590 = vmatprep.mubr.f32.mxu0 0.0
    %1591 = vmatmul.mubr.f32.gmra.mrb[0].mxu0 %v1374
    %v1592 = vpop.f32.mrb[0].mxu0
    %v1593 = vadd.f32 0.0, %v1592
    %v1594 = vpop.f32.mrb[0].mxu0
    %v1595 = vadd.f32 0.0, %v1594
    %1596 = vmatprep.mubr.f32.mxu0 0.0
    %1597 = vmatmul.mubr.f32.gmra.mrb[0].mxu0 %v1377
    %v1598 = vpop.f32.mrb[0].mxu0
    %v1599 = vadd.f32 0.0, %v1598
    %v1600 = vpop.f32.mrb[0].mxu0
    %v1601 = vadd.f32 0.0, %v1600
    %1602 = vmatprep.mubr.f32.mxu0 0.0
    %1603 = vmatmul.mubr.f32.gmra.mrb[0].mxu0 %v1380
    %v1604 = vpop.f32.mrb[0].mxu0
    %v1605 = vadd.f32 0.0, %v1604
    %v1606 = vpop.f32.mrb[0].mxu0
    %v1607 = vadd.f32 0.0, %v1606
    %1608 = vmatprep.mubr.f32.mxu0 0.0
    %1609 = vmatmul.mubr.f32.gmra.mrb[0].mxu0 %v1383
    %v1610 = vpop.f32.mrb[0].mxu0
    %v1611 = vadd.f32 0.0, %v1610
    %v1612 = vpop.f32.mrb[0].mxu0
    %v1613 = vadd.f32 0.0, %v1612
    %1614 = vmatprep.mubr.f32.mxu0 0.0
    %1615 = vmatmul.mubr.f32.gmra.mrb[0].mxu0 %v1386
    %v1616 = vpop.f32.mrb[0].mxu0
    %v1617 = vadd.f32 0.0, %v1616
    %v1618 = vpop.f32.mrb[0].mxu0
    %v1619 = vadd.f32 0.0, %v1618
    %1620 = vmatprep.mubr.f32.mxu0 0.0
    %1621 = vmatmul.mubr.f32.gmra.mrb[0].mxu0 %v1389
    %v1622 = vpop.f32.mrb[0].mxu0
    %v1623 = vadd.f32 0.0, %v1622
    %v1624 = vpop.f32.mrb[0].mxu0
    %v1625 = vadd.f32 0.0, %v1624
    %1626 = vmatprep.mubr.f32.mxu0 0.0
    %1627 = vmatmul.mubr.f32.gmra.mrb[0].mxu0 %v1392
    %v1628 = vpop.f32.mrb[0].mxu0
    %v1629 = vadd.f32 0.0, %v1628
    %v1630 = vpop.f32.mrb[0].mxu0
    %v1631 = vadd.f32 0.0, %v1630
    %1632 = vmatprep.mubr.f32.mxu0 0.0
    %1633 = vmatmul.mubr.f32.gmra.mrb[0].mxu0 %v1395
    %v1634 = vpop.f32.mrb[0].mxu0
    %v1635 = vadd.f32 0.0, %v1634
    %v1636 = vpop.f32.mrb[0].mxu0
    %v1637 = vadd.f32 0.0, %v1636
    %1638 = vdwg.mxu0
    %v1639 = vadd.f32 %v1464, %v1635
    %v1640 = vadd.f32 %v1466, %v1637
    %1641 = vst [vmem:[#allocation3] sm:$0xff] %v1639
    %1642 = vst [vmem:[#allocation3 + $0x8] sm:$0xff] %v1640
    %v1643 = vadd.f32 %v1470, %v1629
    %v1644 = vadd.f32 %v1472, %v1631
    %1645 = vst [vmem:[#allocation3 + $0x10] sm:$0xff] %v1643
    %1646 = vst [vmem:[#allocation3 + $0x18] sm:$0xff] %v1644
    %v1647 = vadd.f32 %v1476, %v1623
    %v1648 = vadd.f32 %v1478, %v1625
    %1649 = vst [vmem:[#allocation3 + $0x20] sm:$0xff] %v1647
    %1650 = vst [vmem:[#allocation3 + $0x28] sm:$0xff] %v1648
    %v1651 = vadd.f32 %v1482, %v1617
    %v1652 = vadd.f32 %v1484, %v1619
    %1653 = vst [vmem:[#allocation3 + $0x30] sm:$0xff] %v1651
    %1654 = vst [vmem:[#allocation3 + $0x38] sm:$0xff] %v1652
    %v1655 = vadd.f32 %v1488, %v1611
    %v1656 = vadd.f32 %v1490, %v1613
    %1657 = vst [vmem:[#allocation3 + $0x40] sm:$0xff] %v1655
    %1658 = vst [vmem:[#allocation3 + $0x48] sm:$0xff] %v1656
    %v1659 = vadd.f32 %v1494, %v1605
    %v1660 = vadd.f32 %v1496, %v1607
    %1661 = vst [vmem:[#allocation3 + $0x50] sm:$0xff] %v1659
    %1662 = vst [vmem:[#allocation3 + $0x58] sm:$0xff] %v1660
    %v1663 = vadd.f32 %v1500, %v1599
    %v1664 = vadd.f32 %v1502, %v1601
    %1665 = vst [vmem:[#allocation3 + $0x60] sm:$0xff] %v1663
    %1666 = vst [vmem:[#allocation3 + $0x68] sm:$0xff] %v1664
    %v1667 = vadd.f32 %v1506, %v1593
    %v1668 = vadd.f32 %v1508, %v1595
    %1669 = vst [vmem:[#allocation3 + $0x70] sm:$0xff] %v1667
    %1670 = vst [vmem:[#allocation3 + $0x78] sm:$0xff] %v1668
    %v1671 = vld [vmem:[#allocation11] sm:$0xff]
    %v1672 = vld [vmem:[#allocation11 + $0x8] sm:$0xff]
    %v1673 = vld [vmem:[#allocation11 + $0x10] sm:$0xff]
    %v1674 = vld [vmem:[#allocation11 + $0x18] sm:$0xff]
    %v1675 = vld [vmem:[#allocation11 + $0x20] sm:$0xff]
    %v1676 = vld [vmem:[#allocation11 + $0x28] sm:$0xff]
    %v1677 = vld [vmem:[#allocation11 + $0x30] sm:$0xff]
    %v1678 = vld [vmem:[#allocation11 + $0x38] sm:$0xff]
    %v1679 = vld [vmem:[#allocation11 + $0x40] sm:$0xff]
    %v1680 = vld [vmem:[#allocation11 + $0x48] sm:$0xff]
    %v1681 = vld [vmem:[#allocation11 + $0x50] sm:$0xff]
    %v1682 = vld [vmem:[#allocation11 + $0x58] sm:$0xff]
    %v1683 = vld [vmem:[#allocation11 + $0x60] sm:$0xff]
    %v1684 = vld [vmem:[#allocation11 + $0x68] sm:$0xff]
    %v1685 = vld [vmem:[#allocation11 + $0x70] sm:$0xff]
    %v1686 = vld [vmem:[#allocation11 + $0x78] sm:$0xff]
    %v1687 = vld [vmem:[#allocation3] sm:$0xff]
    %v1688 = vld [vmem:[#allocation3 + $0x8] sm:$0xff]
    %1689 = vmatprep.subr.mxu0 %v1672
    %1690 = vmatpush1.msra.mxu0 %v1671
    %1691 = vmatprep.subr.mxu0 %v1674
    %1692 = vmatpush1.msra.mxu0 %v1673
    %1693 = vmatprep.subr.mxu0 %v1676
    %1694 = vmatpush1.msra.mxu0 %v1675
    %1695 = vmatprep.subr.mxu0 %v1678
    %1696 = vmatpush1.msra.mxu0 %v1677
    %1697 = vmatprep.subr.mxu0 %v1680
    %1698 = vmatpush1.msra.mxu0 %v1679
    %1699 = vmatprep.subr.mxu0 %v1682
    %1700 = vmatpush1.msra.mxu0 %v1681
    %1701 = vmatprep.subr.mxu0 %v1684
    %1702 = vmatpush1.msra.mxu0 %v1683
    %1703 = vmatprep.subr.mxu0 %v1686
    %1704 = vmatpush1.msra.mxu0 %v1685
    %1705 = vmatprep.subr.mxu0 0.0
    %1706 = vmatpush1.msra.mxu0 0.0
    %1707 = vmatprep.subr.mxu0 0.0
    %1708 = vmatpush1.msra.mxu0 0.0
    %1709 = vmatprep.subr.mxu0 0.0
    %1710 = vmatpush1.msra.mxu0 0.0
    %1711 = vmatprep.subr.mxu0 0.0
    %1712 = vmatpush1.msra.mxu0 0.0
    %1713 = vmatprep.subr.mxu0 0.0
    %1714 = vmatpush1.msra.mxu0 0.0
    %1715 = vmatprep.subr.mxu0 0.0
    %1716 = vmatpush1.msra.mxu0 0.0
    %1717 = vmatprep.subr.mxu0 0.0
    %1718 = vmatpush1.msra.mxu0 0.0
    %1719 = vmatprep.subr.mxu0 0.0
    %1720 = vmatpush1.msra.mxu0 0.0
    %1721 = vmatprep.subr.mxu0 0.0
    %1722 = vmatpush1.msra.mxu0 0.0
    %1723 = vmatprep.subr.mxu0 0.0
    %1724 = vmatpush1.msra.mxu0 0.0
    %1725 = vmatprep.subr.mxu0 0.0
    %1726 = vmatpush1.msra.mxu0 0.0
    %1727 = vmatprep.subr.mxu0 0.0
    %1728 = vmatpush1.msra.mxu0 0.0
    %1729 = vmatprep.subr.mxu0 0.0
    %1730 = vmatpush1.msra.mxu0 0.0
    %1731 = vmatprep.subr.mxu0 0.0
    %1732 = vmatpush1.msra.mxu0 0.0
    %1733 = vmatprep.subr.mxu0 0.0
    %1734 = vmatpush1.msra.mxu0 0.0
    %1735 = vmatprep.subr.mxu0 0.0
    %1736 = vmatpush1.msra.mxu0 0.0
    %1737 = vmatprep.subr.mxu0 0.0
    %1738 = vmatpush1.msra.mxu0 0.0
    %1739 = vmatprep.subr.mxu0 0.0
    %1740 = vmatpush1.msra.mxu0 0.0
    %1741 = vmatprep.subr.mxu0 0.0
    %1742 = vmatpush1.msra.mxu0 0.0
    %1743 = vmatprep.subr.mxu0 0.0
    %1744 = vmatpush1.msra.mxu0 0.0
    %1745 = vmatprep.subr.mxu0 0.0
    %1746 = vmatpush1.msra.mxu0 0.0
    %1747 = vmatprep.subr.mxu0 0.0
    %1748 = vmatpush1.msra.mxu0 0.0
    %1749 = vmatprep.subr.mxu0 0.0
    %1750 = vmatpush1.msra.mxu0 0.0
    %1751 = vmatprep.subr.mxu0 0.0
    %1752 = vmatpush1.msra.mxu0 0.0
    %1753 = vmatprep.mubr.f32.mxu0 0.0
    %1754 = vmatmul.mubr.f32.gmra.mrb[0].mxu0 %v524
    %v1755 = vpop.f32.mrb[0].mxu0
    %v1756 = vadd.f32 0.0, %v1755
    %v1757 = vpop.f32.mrb[0].mxu0
    %v1758 = vadd.f32 0.0, %v1757
    %1759 = vdwg.mxu0
    %v1760 = vadd.f32 %v1687, %v1756
    %v1761 = vadd.f32 %v1688, %v1758
    %v1762 = vtanh.pop %v1760
    %v1763 = vtanh.pop %v1761
    %v1764 = vmul.f32 %v1762, 0.5
    %v1765 = vmul.f32 %v1763, 0.5
    %v1766 = vadd.f32 %v1764, 0.5
    %v1767 = vadd.f32 %v1765, 0.5
    %v1768 = vmul.f32 %v1766, 0.0
    %1770 = vrot.lane.b32.xlu0 %v1763, 64
    %v1771 = vpop.permute.xlu0 %1770
    %v1773 = vmul.f32 %v1766, %v1771
    %1775 = vrot.lane.b32.xlu0 %v1773, 64
    %v1776 = vpop.permute.xlu0 %1775
    %v1778 = vadd.f32 %v1768, %v1776
    %v1779 = vtanh.pop %v1778
    %1781 = vrot.lane.b32.xlu0 %v1779, 64
    %v1782 = vpop.permute.xlu0 %1781
    %v1784 = vmul.f32 %v1767, %v1782
    %1785 = vst.msk [vmem:[#allocation2] sm:$0xff] %vm522, %v1784
    %v1786 = vld [vmem:[#allocation3 + $0x10] sm:$0xff]
    %v1787 = vld [vmem:[#allocation3 + $0x18] sm:$0xff]
    %v1789 = vsel %vm522, %v1784, 0
    %1791 = vmatprep.subr.mxu0 %v1672
    %1792 = vmatpush1.msra.mxu0 %v1671
    %1793 = vmatprep.subr.mxu0 %v1674
    %1794 = vmatpush1.msra.mxu0 %v1673
    %1795 = vmatprep.subr.mxu0 %v1676
    %1796 = vmatpush1.msra.mxu0 %v1675
    %1797 = vmatprep.subr.mxu0 %v1678
    %1798 = vmatpush1.msra.mxu0 %v1677
    %1799 = vmatprep.subr.mxu0 %v1680
    %1800 = vmatpush1.msra.mxu0 %v1679
    %1801 = vmatprep.subr.mxu0 %v1682
    %1802 = vmatpush1.msra.mxu0 %v1681
    %1803 = vmatprep.subr.mxu0 %v1684
    %1804 = vmatpush1.msra.mxu0 %v1683
    %1805 = vmatprep.subr.mxu0 %v1686
    %1806 = vmatpush1.msra.mxu0 %v1685
    %1807 = vmatprep.subr.mxu0 0.0
    %1808 = vmatpush1.msra.mxu0 0.0
    %1809 = vmatprep.subr.mxu0 0.0
    %1810 = vmatpush1.msra.mxu0 0.0
    %1811 = vmatprep.subr.mxu0 0.0
    %1812 = vmatpush1.msra.mxu0 0.0
    %1813 = vmatprep.subr.mxu0 0.0
    %1814 = vmatpush1.msra.mxu0 0.0
    %1815 = vmatprep.subr.mxu0 0.0
    %1816 = vmatpush1.msra.mxu0 0.0
    %1817 = vmatprep.subr.mxu0 0.0
    %1818 = vmatpush1.msra.mxu0 0.0
    %1819 = vmatprep.subr.mxu0 0.0
    %1820 = vmatpush1.msra.mxu0 0.0
    %1821 = vmatprep.subr.mxu0 0.0
    %1822 = vmatpush1.msra.mxu0 0.0
    %1823 = vmatprep.subr.mxu0 0.0
    %1824 = vmatpush1.msra.mxu0 0.0
    %1825 = vmatprep.subr.mxu0 0.0
    %1826 = vmatpush1.msra.mxu0 0.0
    %1827 = vmatprep.subr.mxu0 0.0
    %1828 = vmatpush1.msra.mxu0 0.0
    %1829 = vmatprep.subr.mxu0 0.0
    %1830 = vmatpush1.msra.mxu0 0.0
    %1831 = vmatprep.subr.mxu0 0.0
    %1832 = vmatpush1.msra.mxu0 0.0
    %1833 = vmatprep.subr.mxu0 0.0
    %1834 = vmatpush1.msra.mxu0 0.0
    %1835 = vmatprep.subr.mxu0 0.0
    %1836 = vmatpush1.msra.mxu0 0.0
    %1837 = vmatprep.subr.mxu0 0.0
    %1838 = vmatpush1.msra.mxu0 0.0
    %1839 = vmatprep.subr.mxu0 0.0
    %1840 = vmatpush1.msra.mxu0 0.0
    %1841 = vmatprep.subr.mxu0 0.0
    %1842 = vmatpush1.msra.mxu0 0.0
    %1843 = vmatprep.subr.mxu0 0.0
    %1844 = vmatpush1.msra.mxu0 0.0
    %1845 = vmatprep.subr.mxu0 0.0
    %1846 = vmatpush1.msra.mxu0 0.0
    %1847 = vmatprep.subr.mxu0 0.0
    %1848 = vmatpush1.msra.mxu0 0.0
    %1849 = vmatprep.subr.mxu0 0.0
    %1850 = vmatpush1.msra.mxu0 0.0
    %1851 = vmatprep.subr.mxu0 0.0
    %1852 = vmatpush1.msra.mxu0 0.0
    %1853 = vmatprep.subr.mxu0 0.0
    %1854 = vmatpush1.msra.mxu0 0.0
    %1855 = vmatprep.mubr.f32.mxu0 0.0
    %1856 = vmatmul.mubr.f32.gmra.mrb[0].mxu0 %v1789
    %v1857 = vpop.f32.mrb[0].mxu0
    %v1858 = vadd.f32 0.0, %v1857
    %v1859 = vpop.f32.mrb[0].mxu0
    %v1860 = vadd.f32 0.0, %v1859
    %1861 = vdwg.mxu0
    %v1862 = vadd.f32 %v1786, %v1858
    %v1863 = vadd.f32 %v1787, %v1860
    %v1864 = vtanh.pop %v1862
    %v1865 = vtanh.pop %v1863
    %v1866 = vmul.f32 %v1864, 0.5
    %v1867 = vmul.f32 %v1865, 0.5
    %v1868 = vadd.f32 %v1866, 0.5
    %v1869 = vadd.f32 %v1867, 0.5
    %v1870 = vmul.f32 %v1868, %v1778
    %1872 = vrot.lane.b32.xlu0 %v1865, 64
    %v1873 = vpop.permute.xlu0 %1872
    %v1875 = vmul.f32 %v1868, %v1873
    %1877 = vrot.lane.b32.xlu0 %v1875, 64
    %v1878 = vpop.permute.xlu0 %1877
    %v1880 = vadd.f32 %v1870, %v1878
    %v1881 = vtanh.pop %v1880
    %1883 = vrot.lane.b32.xlu0 %v1881, 64
    %v1884 = vpop.permute.xlu0 %1883
    %v1886 = vmul.f32 %v1869, %v1884
    %1887 = vst.msk [vmem:[#allocation2 + $0x8] sm:$0xff] %vm522, %v1886
    %v1888 = vld [vmem:[#allocation3 + $0x20] sm:$0xff]
    %v1889 = vld [vmem:[#allocation3 + $0x28] sm:$0xff]
    %v1891 = vsel %vm522, %v1886, 0
    %1893 = vmatprep.subr.mxu0 %v1672
    %1894 = vmatpush1.msra.mxu0 %v1671
    %1895 = vmatprep.subr.mxu0 %v1674
    %1896 = vmatpush1.msra.mxu0 %v1673
    %1897 = vmatprep.subr.mxu0 %v1676
    %1898 = vmatpush1.msra.mxu0 %v1675
    %1899 = vmatprep.subr.mxu0 %v1678
    %1900 = vmatpush1.msra.mxu0 %v1677
    %1901 = vmatprep.subr.mxu0 %v1680
    %1902 = vmatpush1.msra.mxu0 %v1679
    %1903 = vmatprep.subr.mxu0 %v1682
    %1904 = vmatpush1.msra.mxu0 %v1681
    %1905 = vmatprep.subr.mxu0 %v1684
    %1906 = vmatpush1.msra.mxu0 %v1683
    %1907 = vmatprep.subr.mxu0 %v1686
    %1908 = vmatpush1.msra.mxu0 %v1685
    %1909 = vmatprep.subr.mxu0 0.0
    %1910 = vmatpush1.msra.mxu0 0.0
    %1911 = vmatprep.subr.mxu0 0.0
    %1912 = vmatpush1.msra.mxu0 0.0
    %1913 = vmatprep.subr.mxu0 0.0
    %1914 = vmatpush1.msra.mxu0 0.0
    %1915 = vmatprep.subr.mxu0 0.0
    %1916 = vmatpush1.msra.mxu0 0.0
    %1917 = vmatprep.subr.mxu0 0.0
    %1918 = vmatpush1.msra.mxu0 0.0
    %1919 = vmatprep.subr.mxu0 0.0
    %1920 = vmatpush1.msra.mxu0 0.0
    %1921 = vmatprep.subr.mxu0 0.0
    %1922 = vmatpush1.msra.mxu0 0.0
    %1923 = vmatprep.subr.mxu0 0.0
    %1924 = vmatpush1.msra.mxu0 0.0
    %1925 = vmatprep.subr.mxu0 0.0
    %1926 = vmatpush1.msra.mxu0 0.0
    %1927 = vmatprep.subr.mxu0 0.0
    %1928 = vmatpush1.msra.mxu0 0.0
    %1929 = vmatprep.subr.mxu0 0.0
    %1930 = vmatpush1.msra.mxu0 0.0
    %1931 = vmatprep.subr.mxu0 0.0
    %1932 = vmatpush1.msra.mxu0 0.0
    %1933 = vmatprep.subr.mxu0 0.0
    %1934 = vmatpush1.msra.mxu0 0.0
    %1935 = vmatprep.subr.mxu0 0.0
    %1936 = vmatpush1.msra.mxu0 0.0
    %1937 = vmatprep.subr.mxu0 0.0
    %1938 = vmatpush1.msra.mxu0 0.0
    %1939 = vmatprep.subr.mxu0 0.0
    %1940 = vmatpush1.msra.mxu0 0.0
    %1941 = vmatprep.subr.mxu0 0.0
    %1942 = vmatpush1.msra.mxu0 0.0
    %1943 = vmatprep.subr.mxu0 0.0
    %1944 = vmatpush1.msra.mxu0 0.0
    %1945 = vmatprep.subr.mxu0 0.0
    %1946 = vmatpush1.msra.mxu0 0.0
    %1947 = vmatprep.subr.mxu0 0.0
    %1948 = vmatpush1.msra.mxu0 0.0
    %1949 = vmatprep.subr.mxu0 0.0
    %1950 = vmatpush1.msra.mxu0 0.0
    %1951 = vmatprep.subr.mxu0 0.0
    %1952 = vmatpush1.msra.mxu0 0.0
    %1953 = vmatprep.subr.mxu0 0.0
    %1954 = vmatpush1.msra.mxu0 0.0
    %1955 = vmatprep.subr.mxu0 0.0
    %1956 = vmatpush1.msra.mxu0 0.0
    %1957 = vmatprep.mubr.f32.mxu0 0.0
    %1958 = vmatmul.mubr.f32.gmra.mrb[0].mxu0 %v1891
    %v1959 = vpop.f32.mrb[0].mxu0
    %v1960 = vadd.f32 0.0, %v1959
    %v1961 = vpop.f32.mrb[0].mxu0
    %v1962 = vadd.f32 0.0, %v1961
    %1963 = vdwg.mxu0
    %v1964 = vadd.f32 %v1888, %v1960
    %v1965 = vadd.f32 %v1889, %v1962
    %v1966 = vtanh.pop %v1964
    %v1967 = vtanh.pop %v1965
    %v1968 = vmul.f32 %v1966, 0.5
    %v1969 = vmul.f32 %v1967, 0.5
    %v1970 = vadd.f32 %v1968, 0.5
    %v1971 = vadd.f32 %v1969, 0.5
    %v1972 = vmul.f32 %v1970, %v1880
    %1974 = vrot.lane.b32.xlu0 %v1967, 64
    %v1975 = vpop.permute.xlu0 %1974
    %v1977 = vmul.f32 %v1970, %v1975
    %1979 = vrot.lane.b32.xlu0 %v1977, 64
    %v1980 = vpop.permute.xlu0 %1979
    %v1982 = vadd.f32 %v1972, %v1980
    %v1983 = vtanh.pop %v1982
    %1985 = vrot.lane.b32.xlu0 %v1983, 64
    %v1986 = vpop.permute.xlu0 %1985
    %v1988 = vmul.f32 %v1971, %v1986
    %1989 = vst.msk [vmem:[#allocation2 + $0x10] sm:$0xff] %vm522, %v1988
    %v1990 = vld [vmem:[#allocation3 + $0x30] sm:$0xff]
    %v1991 = vld [vmem:[#allocation3 + $0x38] sm:$0xff]
    %v1993 = vsel %vm522, %v1988, 0
    %1995 = vmatprep.subr.mxu0 %v1672
    %1996 = vmatpush1.msra.mxu0 %v1671
    %1997 = vmatprep.subr.mxu0 %v1674
    %1998 = vmatpush1.msra.mxu0 %v1673
    %1999 = vmatprep.subr.mxu0 %v1676
    %2000 = vmatpush1.msra.mxu0 %v1675
    %2001 = vmatprep.subr.mxu0 %v1678
    %2002 = vmatpush1.msra.mxu0 %v1677
    %2003 = vmatprep.subr.mxu0 %v1680
    %2004 = vmatpush1.msra.mxu0 %v1679
    %2005 = vmatprep.subr.mxu0 %v1682
    %2006 = vmatpush1.msra.mxu0 %v1681
    %2007 = vmatprep.subr.mxu0 %v1684
    %2008 = vmatpush1.msra.mxu0 %v1683
    %2009 = vmatprep.subr.mxu0 %v1686
    %2010 = vmatpush1.msra.mxu0 %v1685
    %2011 = vmatprep.subr.mxu0 0.0
    %2012 = vmatpush1.msra.mxu0 0.0
    %2013 = vmatprep.subr.mxu0 0.0
    %2014 = vmatpush1.msra.mxu0 0.0
    %2015 = vmatprep.subr.mxu0 0.0
    %2016 = vmatpush1.msra.mxu0 0.0
    %2017 = vmatprep.subr.mxu0 0.0
    %2018 = vmatpush1.msra.mxu0 0.0
    %2019 = vmatprep.subr.mxu0 0.0
    %2020 = vmatpush1.msra.mxu0 0.0
    %2021 = vmatprep.subr.mxu0 0.0
    %2022 = vmatpush1.msra.mxu0 0.0
    %2023 = vmatprep.subr.mxu0 0.0
    %2024 = vmatpush1.msra.mxu0 0.0
    %2025 = vmatprep.subr.mxu0 0.0
    %2026 = vmatpush1.msra.mxu0 0.0
    %2027 = vmatprep.subr.mxu0 0.0
    %2028 = vmatpush1.msra.mxu0 0.0
    %2029 = vmatprep.subr.mxu0 0.0
    %2030 = vmatpush1.msra.mxu0 0.0
    %2031 = vmatprep.subr.mxu0 0.0
    %2032 = vmatpush1.msra.mxu0 0.0
    %2033 = vmatprep.subr.mxu0 0.0
    %2034 = vmatpush1.msra.mxu0 0.0
    %2035 = vmatprep.subr.mxu0 0.0
    %2036 = vmatpush1.msra.mxu0 0.0
    %2037 = vmatprep.subr.mxu0 0.0
    %2038 = vmatpush1.msra.mxu0 0.0
    %2039 = vmatprep.subr.mxu0 0.0
    %2040 = vmatpush1.msra.mxu0 0.0
    %2041 = vmatprep.subr.mxu0 0.0
    %2042 = vmatpush1.msra.mxu0 0.0
    %2043 = vmatprep.subr.mxu0 0.0
    %2044 = vmatpush1.msra.mxu0 0.0
    %2045 = vmatprep.subr.mxu0 0.0
    %2046 = vmatpush1.msra.mxu0 0.0
    %2047 = vmatprep.subr.mxu0 0.0
    %2048 = vmatpush1.msra.mxu0 0.0
    %2049 = vmatprep.subr.mxu0 0.0
    %2050 = vmatpush1.msra.mxu0 0.0
    %2051 = vmatprep.subr.mxu0 0.0
    %2052 = vmatpush1.msra.mxu0 0.0
    %2053 = vmatprep.subr.mxu0 0.0
    %2054 = vmatpush1.msra.mxu0 0.0
    %2055 = vmatprep.subr.mxu0 0.0
    %2056 = vmatpush1.msra.mxu0 0.0
    %2057 = vmatprep.subr.mxu0 0.0
    %2058 = vmatpush1.msra.mxu0 0.0
    %2059 = vmatprep.mubr.f32.mxu0 0.0
    %2060 = vmatmul.mubr.f32.gmra.mrb[0].mxu0 %v1993
    %v2061 = vpop.f32.mrb[0].mxu0
    %v2062 = vadd.f32 0.0, %v2061
    %v2063 = vpop.f32.mrb[0].mxu0
    %v2064 = vadd.f32 0.0, %v2063
    %2065 = vdwg.mxu0
    %v2066 = vadd.f32 %v1990, %v2062
    %v2067 = vadd.f32 %v1991, %v2064
    %v2068 = vtanh.pop %v2066
    %v2069 = vtanh.pop %v2067
    %v2070 = vmul.f32 %v2068, 0.5
    %v2071 = vmul.f32 %v2069, 0.5
    %v2072 = vadd.f32 %v2070, 0.5
    %v2073 = vadd.f32 %v2071, 0.5
    %v2074 = vmul.f32 %v2072, %v1982
    %2076 = vrot.lane.b32.xlu0 %v2069, 64
    %v2077 = vpop.permute.xlu0 %2076
    %v2079 = vmul.f32 %v2072, %v2077
    %2081 = vrot.lane.b32.xlu0 %v2079, 64
    %v2082 = vpop.permute.xlu0 %2081
    %v2084 = vadd.f32 %v2074, %v2082
    %v2085 = vtanh.pop %v2084
    %2087 = vrot.lane.b32.xlu0 %v2085, 64
    %v2088 = vpop.permute.xlu0 %2087
    %v2090 = vmul.f32 %v2073, %v2088
    %2091 = vst.msk [vmem:[#allocation2 + $0x18] sm:$0xff] %vm522, %v2090
    %v2092 = vld [vmem:[#allocation3 + $0x40] sm:$0xff]
    %v2093 = vld [vmem:[#allocation3 + $0x48] sm:$0xff]
    %v2095 = vsel %vm522, %v2090, 0
    %2097 = vmatprep.subr.mxu0 %v1672
    %2098 = vmatpush1.msra.mxu0 %v1671
    %2099 = vmatprep.subr.mxu0 %v1674
    %2100 = vmatpush1.msra.mxu0 %v1673
    %2101 = vmatprep.subr.mxu0 %v1676
    %2102 = vmatpush1.msra.mxu0 %v1675
    %2103 = vmatprep.subr.mxu0 %v1678
    %2104 = vmatpush1.msra.mxu0 %v1677
    %2105 = vmatprep.subr.mxu0 %v1680
    %2106 = vmatpush1.msra.mxu0 %v1679
    %2107 = vmatprep.subr.mxu0 %v1682
    %2108 = vmatpush1.msra.mxu0 %v1681
    %2109 = vmatprep.subr.mxu0 %v1684
    %2110 = vmatpush1.msra.mxu0 %v1683
    %2111 = vmatprep.subr.mxu0 %v1686
    %2112 = vmatpush1.msra.mxu0 %v1685
    %2113 = vmatprep.subr.mxu0 0.0
    %2114 = vmatpush1.msra.mxu0 0.0
    %2115 = vmatprep.subr.mxu0 0.0
    %2116 = vmatpush1.msra.mxu0 0.0
    %2117 = vmatprep.subr.mxu0 0.0
    %2118 = vmatpush1.msra.mxu0 0.0
    %2119 = vmatprep.subr.mxu0 0.0
    %2120 = vmatpush1.msra.mxu0 0.0
    %2121 = vmatprep.subr.mxu0 0.0
    %2122 = vmatpush1.msra.mxu0 0.0
    %2123 = vmatprep.subr.mxu0 0.0
    %2124 = vmatpush1.msra.mxu0 0.0
    %2125 = vmatprep.subr.mxu0 0.0
    %2126 = vmatpush1.msra.mxu0 0.0
    %2127 = vmatprep.subr.mxu0 0.0
    %2128 = vmatpush1.msra.mxu0 0.0
    %2129 = vmatprep.subr.mxu0 0.0
    %2130 = vmatpush1.msra.mxu0 0.0
    %2131 = vmatprep.subr.mxu0 0.0
    %2132 = vmatpush1.msra.mxu0 0.0
    %2133 = vmatprep.subr.mxu0 0.0
    %2134 = vmatpush1.msra.mxu0 0.0
    %2135 = vmatprep.subr.mxu0 0.0
    %2136 = vmatpush1.msra.mxu0 0.0
    %2137 = vmatprep.subr.mxu0 0.0
    %2138 = vmatpush1.msra.mxu0 0.0
    %2139 = vmatprep.subr.mxu0 0.0
    %2140 = vmatpush1.msra.mxu0 0.0
    %2141 = vmatprep.subr.mxu0 0.0
    %2142 = vmatpush1.msra.mxu0 0.0
    %2143 = vmatprep.subr.mxu0 0.0
    %2144 = vmatpush1.msra.mxu0 0.0
    %2145 = vmatprep.subr.mxu0 0.0
    %2146 = vmatpush1.msra.mxu0 0.0
    %2147 = vmatprep.subr.mxu0 0.0
    %2148 = vmatpush1.msra.mxu0 0.0
    %2149 = vmatprep.subr.mxu0 0.0
    %2150 = vmatpush1.msra.mxu0 0.0
    %2151 = vmatprep.subr.mxu0 0.0
    %2152 = vmatpush1.msra.mxu0 0.0
    %2153 = vmatprep.subr.mxu0 0.0
    %2154 = vmatpush1.msra.mxu0 0.0
    %2155 = vmatprep.subr.mxu0 0.0
    %2156 = vmatpush1.msra.mxu0 0.0
    %2157 = vmatprep.subr.mxu0 0.0
    %2158 = vmatpush1.msra.mxu0 0.0
    %2159 = vmatprep.subr.mxu0 0.0
    %2160 = vmatpush1.msra.mxu0 0.0
    %2161 = vmatprep.mubr.f32.mxu0 0.0
    %2162 = vmatmul.mubr.f32.gmra.mrb[0].mxu0 %v2095
    %v2163 = vpop.f32.mrb[0].mxu0
    %v2164 = vadd.f32 0.0, %v2163
    %v2165 = vpop.f32.mrb[0].mxu0
    %v2166 = vadd.f32 0.0, %v2165
    %2167 = vdwg.mxu0
    %v2168 = vadd.f32 %v2092, %v2164
    %v2169 = vadd.f32 %v2093, %v2166
    %v2170 = vtanh.pop %v2168
    %v2171 = vtanh.pop %v2169
    %v2172 = vmul.f32 %v2170, 0.5
    %v2173 = vmul.f32 %v2171, 0.5
    %v2174 = vadd.f32 %v2172, 0.5
    %v2175 = vadd.f32 %v2173, 0.5
    %v2176 = vmul.f32 %v2174, %v2084
    %2178 = vrot.lane.b32.xlu0 %v2171, 64
    %v2179 = vpop.permute.xlu0 %2178
    %v2181 = vmul.f32 %v2174, %v2179
    %2183 = vrot.lane.b32.xlu0 %v2181, 64
    %v2184 = vpop.permute.xlu0 %2183
    %v2186 = vadd.f32 %v2176, %v2184
    %v2187 = vtanh.pop %v2186
    %2189 = vrot.lane.b32.xlu0 %v2187, 64
    %v2190 = vpop.permute.xlu0 %2189
    %v2192 = vmul.f32 %v2175, %v2190
    %2193 = vst.msk [vmem:[#allocation2 + $0x20] sm:$0xff] %vm522, %v2192
    %v2194 = vld [vmem:[#allocation3 + $0x50] sm:$0xff]
    %v2195 = vld [vmem:[#allocation3 + $0x58] sm:$0xff]
    %v2197 = vsel %vm522, %v2192, 0
    %2199 = vmatprep.subr.mxu0 %v1672
    %2200 = vmatpush1.msra.mxu0 %v1671
    %2201 = vmatprep.subr.mxu0 %v1674
    %2202 = vmatpush1.msra.mxu0 %v1673
    %2203 = vmatprep.subr.mxu0 %v1676
    %2204 = vmatpush1.msra.mxu0 %v1675
    %2205 = vmatprep.subr.mxu0 %v1678
    %2206 = vmatpush1.msra.mxu0 %v1677
    %2207 = vmatprep.subr.mxu0 %v1680
    %2208 = vmatpush1.msra.mxu0 %v1679
    %2209 = vmatprep.subr.mxu0 %v1682
    %2210 = vmatpush1.msra.mxu0 %v1681
    %2211 = vmatprep.subr.mxu0 %v1684
    %2212 = vmatpush1.msra.mxu0 %v1683
    %2213 = vmatprep.subr.mxu0 %v1686
    %2214 = vmatpush1.msra.mxu0 %v1685
    %2215 = vmatprep.subr.mxu0 0.0
    %2216 = vmatpush1.msra.mxu0 0.0
    %2217 = vmatprep.subr.mxu0 0.0
    %2218 = vmatpush1.msra.mxu0 0.0
    %2219 = vmatprep.subr.mxu0 0.0
    %2220 = vmatpush1.msra.mxu0 0.0
    %2221 = vmatprep.subr.mxu0 0.0
    %2222 = vmatpush1.msra.mxu0 0.0
    %2223 = vmatprep.subr.mxu0 0.0
    %2224 = vmatpush1.msra.mxu0 0.0
    %2225 = vmatprep.subr.mxu0 0.0
    %2226 = vmatpush1.msra.mxu0 0.0
    %2227 = vmatprep.subr.mxu0 0.0
    %2228 = vmatpush1.msra.mxu0 0.0
    %2229 = vmatprep.subr.mxu0 0.0
    %2230 = vmatpush1.msra.mxu0 0.0
    %2231 = vmatprep.subr.mxu0 0.0
    %2232 = vmatpush1.msra.mxu0 0.0
    %2233 = vmatprep.subr.mxu0 0.0
    %2234 = vmatpush1.msra.mxu0 0.0
    %2235 = vmatprep.subr.mxu0 0.0
    %2236 = vmatpush1.msra.mxu0 0.0
    %2237 = vmatprep.subr.mxu0 0.0
    %2238 = vmatpush1.msra.mxu0 0.0
    %2239 = vmatprep.subr.mxu0 0.0
    %2240 = vmatpush1.msra.mxu0 0.0
    %2241 = vmatprep.subr.mxu0 0.0
    %2242 = vmatpush1.msra.mxu0 0.0
    %2243 = vmatprep.subr.mxu0 0.0
    %2244 = vmatpush1.msra.mxu0 0.0
    %2245 = vmatprep.subr.mxu0 0.0
    %2246 = vmatpush1.msra.mxu0 0.0
    %2247 = vmatprep.subr.mxu0 0.0
    %2248 = vmatpush1.msra.mxu0 0.0
    %2249 = vmatprep.subr.mxu0 0.0
    %2250 = vmatpush1.msra.mxu0 0.0
    %2251 = vmatprep.subr.mxu0 0.0
    %2252 = vmatpush1.msra.mxu0 0.0
    %2253 = vmatprep.subr.mxu0 0.0
    %2254 = vmatpush1.msra.mxu0 0.0
    %2255 = vmatprep.subr.mxu0 0.0
    %2256 = vmatpush1.msra.mxu0 0.0
    %2257 = vmatprep.subr.mxu0 0.0
    %2258 = vmatpush1.msra.mxu0 0.0
    %2259 = vmatprep.subr.mxu0 0.0
    %2260 = vmatpush1.msra.mxu0 0.0
    %2261 = vmatprep.subr.mxu0 0.0
    %2262 = vmatpush1.msra.mxu0 0.0
    %2263 = vmatprep.mubr.f32.mxu0 0.0
    %2264 = vmatmul.mubr.f32.gmra.mrb[0].mxu0 %v2197
    %v2265 = vpop.f32.mrb[0].mxu0
    %v2266 = vadd.f32 0.0, %v2265
    %v2267 = vpop.f32.mrb[0].mxu0
    %v2268 = vadd.f32 0.0, %v2267
    %2269 = vdwg.mxu0
    %v2270 = vadd.f32 %v2194, %v2266
    %v2271 = vadd.f32 %v2195, %v2268
    %v2272 = vtanh.pop %v2270
    %v2273 = vtanh.pop %v2271
    %v2274 = vmul.f32 %v2272, 0.5
    %v2275 = vmul.f32 %v2273, 0.5
    %v2276 = vadd.f32 %v2274, 0.5
    %v2277 = vadd.f32 %v2275, 0.5
    %v2278 = vmul.f32 %v2276, %v2186
    %2280 = vrot.lane.b32.xlu0 %v2273, 64
    %v2281 = vpop.permute.xlu0 %2280
    %v2283 = vmul.f32 %v2276, %v2281
    %2285 = vrot.lane.b32.xlu0 %v2283, 64
    %v2286 = vpop.permute.xlu0 %2285
    %v2288 = vadd.f32 %v2278, %v2286
    %v2289 = vtanh.pop %v2288
    %2291 = vrot.lane.b32.xlu0 %v2289, 64
    %v2292 = vpop.permute.xlu0 %2291
    %v2294 = vmul.f32 %v2277, %v2292
    %2295 = vst.msk [vmem:[#allocation2 + $0x28] sm:$0xff] %vm522, %v2294
    %v2296 = vld [vmem:[#allocation3 + $0x60] sm:$0xff]
    %v2297 = vld [vmem:[#allocation3 + $0x68] sm:$0xff]
    %v2299 = vsel %vm522, %v2294, 0
    %2301 = vmatprep.subr.mxu0 %v1672
    %2302 = vmatpush1.msra.mxu0 %v1671
    %2303 = vmatprep.subr.mxu0 %v1674
    %2304 = vmatpush1.msra.mxu0 %v1673
    %2305 = vmatprep.subr.mxu0 %v1676
    %2306 = vmatpush1.msra.mxu0 %v1675
    %2307 = vmatprep.subr.mxu0 %v1678
    %2308 = vmatpush1.msra.mxu0 %v1677
    %2309 = vmatprep.subr.mxu0 %v1680
    %2310 = vmatpush1.msra.mxu0 %v1679
    %2311 = vmatprep.subr.mxu0 %v1682
    %2312 = vmatpush1.msra.mxu0 %v1681
    %2313 = vmatprep.subr.mxu0 %v1684
    %2314 = vmatpush1.msra.mxu0 %v1683
    %2315 = vmatprep.subr.mxu0 %v1686
    %2316 = vmatpush1.msra.mxu0 %v1685
    %2317 = vmatprep.subr.mxu0 0.0
    %2318 = vmatpush1.msra.mxu0 0.0
    %2319 = vmatprep.subr.mxu0 0.0
    %2320 = vmatpush1.msra.mxu0 0.0
    %2321 = vmatprep.subr.mxu0 0.0
    %2322 = vmatpush1.msra.mxu0 0.0
    %2323 = vmatprep.subr.mxu0 0.0
    %2324 = vmatpush1.msra.mxu0 0.0
    %2325 = vmatprep.subr.mxu0 0.0
    %2326 = vmatpush1.msra.mxu0 0.0
    %2327 = vmatprep.subr.mxu0 0.0
    %2328 = vmatpush1.msra.mxu0 0.0
    %2329 = vmatprep.subr.mxu0 0.0
    %2330 = vmatpush1.msra.mxu0 0.0
    %2331 = vmatprep.subr.mxu0 0.0
    %2332 = vmatpush1.msra.mxu0 0.0
    %2333 = vmatprep.subr.mxu0 0.0
    %2334 = vmatpush1.msra.mxu0 0.0
    %2335 = vmatprep.subr.mxu0 0.0
    %2336 = vmatpush1.msra.mxu0 0.0
    %2337 = vmatprep.subr.mxu0 0.0
    %2338 = vmatpush1.msra.mxu0 0.0
    %2339 = vmatprep.subr.mxu0 0.0
    %2340 = vmatpush1.msra.mxu0 0.0
    %2341 = vmatprep.subr.mxu0 0.0
    %2342 = vmatpush1.msra.mxu0 0.0
    %2343 = vmatprep.subr.mxu0 0.0
    %2344 = vmatpush1.msra.mxu0 0.0
    %2345 = vmatprep.subr.mxu0 0.0
    %2346 = vmatpush1.msra.mxu0 0.0
    %2347 = vmatprep.subr.mxu0 0.0
    %2348 = vmatpush1.msra.mxu0 0.0
    %2349 = vmatprep.subr.mxu0 0.0
    %2350 = vmatpush1.msra.mxu0 0.0
    %2351 = vmatprep.subr.mxu0 0.0
    %2352 = vmatpush1.msra.mxu0 0.0
    %2353 = vmatprep.subr.mxu0 0.0
    %2354 = vmatpush1.msra.mxu0 0.0
    %2355 = vmatprep.subr.mxu0 0.0
    %2356 = vmatpush1.msra.mxu0 0.0
    %2357 = vmatprep.subr.mxu0 0.0
    %2358 = vmatpush1.msra.mxu0 0.0
    %2359 = vmatprep.subr.mxu0 0.0
    %2360 = vmatpush1.msra.mxu0 0.0
    %2361 = vmatprep.subr.mxu0 0.0
    %2362 = vmatpush1.msra.mxu0 0.0
    %2363 = vmatprep.subr.mxu0 0.0
    %2364 = vmatpush1.msra.mxu0 0.0
    %2365 = vmatprep.mubr.f32.mxu0 0.0
    %2366 = vmatmul.mubr.f32.gmra.mrb[0].mxu0 %v2299
    %v2367 = vpop.f32.mrb[0].mxu0
    %v2368 = vadd.f32 0.0, %v2367
    %v2369 = vpop.f32.mrb[0].mxu0
    %v2370 = vadd.f32 0.0, %v2369
    %2371 = vdwg.mxu0
    %v2372 = vadd.f32 %v2296, %v2368
    %v2373 = vadd.f32 %v2297, %v2370
    %v2374 = vtanh.pop %v2372
    %v2375 = vtanh.pop %v2373
    %v2376 = vmul.f32 %v2374, 0.5
    %v2377 = vmul.f32 %v2375, 0.5
    %v2378 = vadd.f32 %v2376, 0.5
    %v2379 = vadd.f32 %v2377, 0.5
    %v2380 = vmul.f32 %v2378, %v2288
    %2382 = vrot.lane.b32.xlu0 %v2375, 64
    %v2383 = vpop.permute.xlu0 %2382
    %v2385 = vmul.f32 %v2378, %v2383
    %2387 = vrot.lane.b32.xlu0 %v2385, 64
    %v2388 = vpop.permute.xlu0 %2387
    %v2390 = vadd.f32 %v2380, %v2388
    %v2391 = vtanh.pop %v2390
    %2393 = vrot.lane.b32.xlu0 %v2391, 64
    %v2394 = vpop.permute.xlu0 %2393
    %v2396 = vmul.f32 %v2379, %v2394
    %2397 = vst.msk [vmem:[#allocation2 + $0x30] sm:$0xff] %vm522, %v2396
    %v2398 = vld [vmem:[#allocation3 + $0x70] sm:$0xff]
    %v2399 = vld [vmem:[#allocation3 + $0x78] sm:$0xff]
    %v2401 = vsel %vm522, %v2396, 0
    %2403 = vmatprep.subr.mxu0 %v1672
    %2404 = vmatpush1.msra.mxu0 %v1671
    %2405 = vmatprep.subr.mxu0 %v1674
    %2406 = vmatpush1.msra.mxu0 %v1673
    %2407 = vmatprep.subr.mxu0 %v1676
    %2408 = vmatpush1.msra.mxu0 %v1675
    %2409 = vmatprep.subr.mxu0 %v1678
    %2410 = vmatpush1.msra.mxu0 %v1677
    %2411 = vmatprep.subr.mxu0 %v1680
    %2412 = vmatpush1.msra.mxu0 %v1679
    %2413 = vmatprep.subr.mxu0 %v1682
    %2414 = vmatpush1.msra.mxu0 %v1681
    %2415 = vmatprep.subr.mxu0 %v1684
    %2416 = vmatpush1.msra.mxu0 %v1683
    %2417 = vmatprep.subr.mxu0 %v1686
    %2418 = vmatpush1.msra.mxu0 %v1685
    %2419 = vmatprep.subr.mxu0 0.0
    %2420 = vmatpush1.msra.mxu0 0.0
    %2421 = vmatprep.subr.mxu0 0.0
    %2422 = vmatpush1.msra.mxu0 0.0
    %2423 = vmatprep.subr.mxu0 0.0
    %2424 = vmatpush1.msra.mxu0 0.0
    %2425 = vmatprep.subr.mxu0 0.0
    %2426 = vmatpush1.msra.mxu0 0.0
    %2427 = vmatprep.subr.mxu0 0.0
    %2428 = vmatpush1.msra.mxu0 0.0
    %2429 = vmatprep.subr.mxu0 0.0
    %2430 = vmatpush1.msra.mxu0 0.0
    %2431 = vmatprep.subr.mxu0 0.0
    %2432 = vmatpush1.msra.mxu0 0.0
    %2433 = vmatprep.subr.mxu0 0.0
    %2434 = vmatpush1.msra.mxu0 0.0
    %2435 = vmatprep.subr.mxu0 0.0
    %2436 = vmatpush1.msra.mxu0 0.0
    %2437 = vmatprep.subr.mxu0 0.0
    %2438 = vmatpush1.msra.mxu0 0.0
    %2439 = vmatprep.subr.mxu0 0.0
    %2440 = vmatpush1.msra.mxu0 0.0
    %2441 = vmatprep.subr.mxu0 0.0
    %2442 = vmatpush1.msra.mxu0 0.0
    %2443 = vmatprep.subr.mxu0 0.0
    %2444 = vmatpush1.msra.mxu0 0.0
    %2445 = vmatprep.subr.mxu0 0.0
    %2446 = vmatpush1.msra.mxu0 0.0
    %2447 = vmatprep.subr.mxu0 0.0
    %2448 = vmatpush1.msra.mxu0 0.0
    %2449 = vmatprep.subr.mxu0 0.0
    %2450 = vmatpush1.msra.mxu0 0.0
    %2451 = vmatprep.subr.mxu0 0.0
    %2452 = vmatpush1.msra.mxu0 0.0
    %2453 = vmatprep.subr.mxu0 0.0
    %2454 = vmatpush1.msra.mxu0 0.0
    %2455 = vmatprep.subr.mxu0 0.0
    %2456 = vmatpush1.msra.mxu0 0.0
    %2457 = vmatprep.subr.mxu0 0.0
    %2458 = vmatpush1.msra.mxu0 0.0
    %2459 = vmatprep.subr.mxu0 0.0
    %2460 = vmatpush1.msra.mxu0 0.0
    %2461 = vmatprep.subr.mxu0 0.0
    %2462 = vmatpush1.msra.mxu0 0.0
    %2463 = vmatprep.subr.mxu0 0.0
    %2464 = vmatpush1.msra.mxu0 0.0
    %2465 = vmatprep.subr.mxu0 0.0
    %2466 = vmatpush1.msra.mxu0 0.0
    %2467 = vmatprep.mubr.f32.mxu0 0.0
    %2468 = vmatmul.mubr.f32.gmra.mrb[0].mxu0 %v2401
    %v2469 = vpop.f32.mrb[0].mxu0
    %v2470 = vadd.f32 0.0, %v2469
    %v2471 = vpop.f32.mrb[0].mxu0
    %v2472 = vadd.f32 0.0, %v2471
    %2473 = vdwg.mxu0
    %v2474 = vadd.f32 %v2398, %v2470
    %v2475 = vadd.f32 %v2399, %v2472
    %v2476 = vtanh.pop %v2474
    %v2477 = vtanh.pop %v2475
    %v2478 = vmul.f32 %v2476, 0.5
    %v2479 = vmul.f32 %v2477, 0.5
    %v2480 = vadd.f32 %v2478, 0.5
    %v2481 = vadd.f32 %v2479, 0.5
    %v2482 = vmul.f32 %v2480, %v2390
    %2484 = vrot.lane.b32.xlu0 %v2477, 64
    %v2485 = vpop.permute.xlu0 %2484
    %v2487 = vmul.f32 %v2480, %v2485
    %2489 = vrot.lane.b32.xlu0 %v2487, 64
    %v2490 = vpop.permute.xlu0 %2489
    %v2492 = vadd.f32 %v2482, %v2490
    %v2493 = vtanh.pop %v2492
    %2495 = vrot.lane.b32.xlu0 %v2493, 64
    %v2496 = vpop.permute.xlu0 %2495
    %v2498 = vmul.f32 %v2481, %v2496
    %2499 = vst.msk [vmem:[#allocation2 + $0x38] sm:$0xff] %vm522, %v2498
    %v2500 = vld [vmem:[#allocation2] sm:$0xff]
    %v2501 = vld [vmem:[#allocation2 + $0x8] sm:$0xff]
    %v2502 = vld [vmem:[#allocation2 + $0x10] sm:$0xff]
    %v2503 = vld [vmem:[#allocation2 + $0x18] sm:$0xff]
    %v2504 = vld [vmem:[#allocation2 + $0x20] sm:$0xff]
    %v2505 = vld [vmem:[#allocation2 + $0x28] sm:$0xff]
    %v2506 = vld [vmem:[#allocation2 + $0x30] sm:$0xff]
    %v2507 = vld [vmem:[#allocation2 + $0x38] sm:$0xff]
    %v2508 = vld [vmem:[#allocation6] sm:$0xff]
    %v2509 = vld [vmem:[#allocation6 + $0x8] sm:$0xff]
    %v2510 = vld [vmem:[#allocation6 + $0x10] sm:$0xff]
    %v2511 = vld [vmem:[#allocation6 + $0x18] sm:$0xff]
    %v2512 = vld [vmem:[#allocation6 + $0x20] sm:$0xff]
    %v2513 = vld [vmem:[#allocation6 + $0x28] sm:$0xff]
    %v2514 = vld [vmem:[#allocation6 + $0x30] sm:$0xff]
    %v2515 = vld [vmem:[#allocation6 + $0x38] sm:$0xff]
    %v2516 = vld [vmem:[#allocation6 + $0x40] sm:$0xff]
    %v2517 = vld [vmem:[#allocation6 + $0x48] sm:$0xff]
    %v2518 = vld [vmem:[#allocation6 + $0x50] sm:$0xff]
    %v2519 = vld [vmem:[#allocation6 + $0x58] sm:$0xff]
    %v2520 = vld [vmem:[#allocation6 + $0x60] sm:$0xff]
    %v2521 = vld [vmem:[#allocation6 + $0x68] sm:$0xff]
    %v2522 = vld [vmem:[#allocation6 + $0x70] sm:$0xff]
    %v2523 = vld [vmem:[#allocation6 + $0x78] sm:$0xff]
    %v2524 = vld [vmem:[%s8] sm:$0x3]
    %v2526 = vlaneseq
    %v2527 = vshrl.u32 %v2526, 7
    %v2528 = vsub.s32 0, %v2527
    %v2529 = vrot.slane %v2524, %v2528
    %v2530 = vlaneseq
    %v2531 = vshrl.u32 %v2530, 7
    %v2532 = vsub.s32 1, %v2531
    %v2533 = vrot.slane %v2524, %v2532
    %v2537 = vsel %vm522, %v2500, 0
    %v2540 = vsel %vm522, %v2501, 0
    %v2543 = vsel %vm522, %v2502, 0
    %v2546 = vsel %vm522, %v2503, 0
    %v2549 = vsel %vm522, %v2504, 0
    %v2552 = vsel %vm522, %v2505, 0
    %v2555 = vsel %vm522, %v2506, 0
    %v2558 = vsel %vm522, %v2507, 0
    %2560 = vmatprep.subr.mxu0 %v2509
    %2561 = vmatpush1.msra.mxu0 %v2508
    %2562 = vmatprep.subr.mxu0 %v2511
    %2563 = vmatpush1.msra.mxu0 %v2510
    %2564 = vmatprep.subr.mxu0 %v2513
    %2565 = vmatpush1.msra.mxu0 %v2512
    %2566 = vmatprep.subr.mxu0 %v2515
    %2567 = vmatpush1.msra.mxu0 %v2514
    %2568 = vmatprep.subr.mxu0 %v2517
    %2569 = vmatpush1.msra.mxu0 %v2516
    %2570 = vmatprep.subr.mxu0 %v2519
    %2571 = vmatpush1.msra.mxu0 %v2518
    %2572 = vmatprep.subr.mxu0 %v2521
    %2573 = vmatpush1.msra.mxu0 %v2520
    %2574 = vmatprep.subr.mxu0 %v2523
    %2575 = vmatpush1.msra.mxu0 %v2522
    %2576 = vmatprep.subr.mxu0 0.0
    %2577 = vmatpush1.msra.mxu0 0.0
    %2578 = vmatprep.subr.mxu0 0.0
    %2579 = vmatpush1.msra.mxu0 0.0
    %2580 = vmatprep.subr.mxu0 0.0
    %2581 = vmatpush1.msra.mxu0 0.0
    %2582 = vmatprep.subr.mxu0 0.0
    %2583 = vmatpush1.msra.mxu0 0.0
    %2584 = vmatprep.subr.mxu0 0.0
    %2585 = vmatpush1.msra.mxu0 0.0
    %2586 = vmatprep.subr.mxu0 0.0
    %2587 = vmatpush1.msra.mxu0 0.0
    %2588 = vmatprep.subr.mxu0 0.0
    %2589 = vmatpush1.msra.mxu0 0.0
    %2590 = vmatprep.subr.mxu0 0.0
    %2591 = vmatpush1.msra.mxu0 0.0
    %2592 = vmatprep.subr.mxu0 0.0
    %2593 = vmatpush1.msra.mxu0 0.0
    %2594 = vmatprep.subr.mxu0 0.0
    %2595 = vmatpush1.msra.mxu0 0.0
    %2596 = vmatprep.subr.mxu0 0.0
    %2597 = vmatpush1.msra.mxu0 0.0
    %2598 = vmatprep.subr.mxu0 0.0
    %2599 = vmatpush1.msra.mxu0 0.0
    %2600 = vmatprep.subr.mxu0 0.0
    %2601 = vmatpush1.msra.mxu0 0.0
    %2602 = vmatprep.subr.mxu0 0.0
    %2603 = vmatpush1.msra.mxu0 0.0
    %2604 = vmatprep.subr.mxu0 0.0
    %2605 = vmatpush1.msra.mxu0 0.0
    %2606 = vmatprep.subr.mxu0 0.0
    %2607 = vmatpush1.msra.mxu0 0.0
    %2608 = vmatprep.subr.mxu0 0.0
    %2609 = vmatpush1.msra.mxu0 0.0
    %2610 = vmatprep.subr.mxu0 0.0
    %2611 = vmatpush1.msra.mxu0 0.0
    %2612 = vmatprep.subr.mxu0 0.0
    %2613 = vmatpush1.msra.mxu0 0.0
    %2614 = vmatprep.subr.mxu0 0.0
    %2615 = vmatpush1.msra.mxu0 0.0
    %2616 = vmatprep.subr.mxu0 0.0
    %2617 = vmatpush1.msra.mxu0 0.0
    %2618 = vmatprep.subr.mxu0 0.0
    %2619 = vmatpush1.msra.mxu0 0.0
    %2620 = vmatprep.subr.mxu0 0.0
    %2621 = vmatpush1.msra.mxu0 0.0
    %2622 = vmatprep.subr.mxu0 0.0
    %2623 = vmatpush1.msra.mxu0 0.0
    %2624 = vmatprep.mubr.f32.mxu0 0.0
    %2625 = vmatmul.mubr.f32.gmra.mrb[0].mxu0 %v2537
    %v2626 = vpop.f32.mrb[0].mxu0
    %v2627 = vadd.f32 %v2529, %v2626
    %v2628 = vpop.f32.mrb[0].mxu0
    %v2629 = vadd.f32 %v2533, %v2628
    %2630 = vmatprep.mubr.f32.mxu0 0.0
    %2631 = vmatmul.mubr.f32.gmra.mrb[0].mxu0 %v2540
    %v2632 = vpop.f32.mrb[0].mxu0
    %v2633 = vadd.f32 %v2529, %v2632
    %v2634 = vpop.f32.mrb[0].mxu0
    %v2635 = vadd.f32 %v2533, %v2634
    %2636 = vmatprep.mubr.f32.mxu0 0.0
    %2637 = vmatmul.mubr.f32.gmra.mrb[0].mxu0 %v2543
    %v2638 = vpop.f32.mrb[0].mxu0
    %v2639 = vadd.f32 %v2529, %v2638
    %v2640 = vpop.f32.mrb[0].mxu0
    %v2641 = vadd.f32 %v2533, %v2640
    %2642 = vmatprep.mubr.f32.mxu0 0.0
    %2643 = vmatmul.mubr.f32.gmra.mrb[0].mxu0 %v2546
    %v2644 = vpop.f32.mrb[0].mxu0
    %v2645 = vadd.f32 %v2529, %v2644
    %v2646 = vpop.f32.mrb[0].mxu0
    %v2647 = vadd.f32 %v2533, %v2646
    %2648 = vmatprep.mubr.f32.mxu0 0.0
    %2649 = vmatmul.mubr.f32.gmra.mrb[0].mxu0 %v2549
    %v2650 = vpop.f32.mrb[0].mxu0
    %v2651 = vadd.f32 %v2529, %v2650
    %v2652 = vpop.f32.mrb[0].mxu0
    %v2653 = vadd.f32 %v2533, %v2652
    %2654 = vmatprep.mubr.f32.mxu0 0.0
    %2655 = vmatmul.mubr.f32.gmra.mrb[0].mxu0 %v2552
    %v2656 = vpop.f32.mrb[0].mxu0
    %v2657 = vadd.f32 %v2529, %v2656
    %v2658 = vpop.f32.mrb[0].mxu0
    %v2659 = vadd.f32 %v2533, %v2658
    %2660 = vmatprep.mubr.f32.mxu0 0.0
    %2661 = vmatmul.mubr.f32.gmra.mrb[0].mxu0 %v2555
    %v2662 = vpop.f32.mrb[0].mxu0
    %v2663 = vadd.f32 %v2529, %v2662
    %v2664 = vpop.f32.mrb[0].mxu0
    %v2665 = vadd.f32 %v2533, %v2664
    %2666 = vmatprep.mubr.f32.mxu0 0.0
    %2667 = vmatmul.mubr.f32.gmra.mrb[0].mxu0 %v2558
    %v2668 = vpop.f32.mrb[0].mxu0
    %v2669 = vadd.f32 %v2529, %v2668
    %v2670 = vpop.f32.mrb[0].mxu0
    %v2671 = vadd.f32 %v2533, %v2670
    %2672 = vdwg.mxu0
    %v2673 = vld [vmem:[#allocation8] sm:$0xff]
    %v2674 = vld [vmem:[#allocation8 + $0x8] sm:$0xff]
    %v2675 = vld [vmem:[#allocation8 + $0x10] sm:$0xff]
    %v2676 = vld [vmem:[#allocation8 + $0x18] sm:$0xff]
    %v2677 = vld [vmem:[#allocation8 + $0x20] sm:$0xff]
    %v2678 = vld [vmem:[#allocation8 + $0x28] sm:$0xff]
    %v2679 = vld [vmem:[#allocation8 + $0x30] sm:$0xff]
    %v2680 = vld [vmem:[#allocation8 + $0x38] sm:$0xff]
    %v2681 = vld [vmem:[#allocation8 + $0x40] sm:$0xff]
    %v2682 = vld [vmem:[#allocation8 + $0x48] sm:$0xff]
    %v2683 = vld [vmem:[#allocation8 + $0x50] sm:$0xff]
    %v2684 = vld [vmem:[#allocation8 + $0x58] sm:$0xff]
    %v2685 = vld [vmem:[#allocation8 + $0x60] sm:$0xff]
    %v2686 = vld [vmem:[#allocation8 + $0x68] sm:$0xff]
    %v2687 = vld [vmem:[#allocation8 + $0x70] sm:$0xff]
    %v2688 = vld [vmem:[#allocation8 + $0x78] sm:$0xff]
    %2689 = vmatprep.subr.mxu0 %v2674
    %2690 = vmatpush1.msra.mxu0 %v2673
    %2691 = vmatprep.subr.mxu0 %v2676
    %2692 = vmatpush1.msra.mxu0 %v2675
    %2693 = vmatprep.subr.mxu0 %v2678
    %2694 = vmatpush1.msra.mxu0 %v2677
    %2695 = vmatprep.subr.mxu0 %v2680
    %2696 = vmatpush1.msra.mxu0 %v2679
    %2697 = vmatprep.subr.mxu0 %v2682
    %2698 = vmatpush1.msra.mxu0 %v2681
    %2699 = vmatprep.subr.mxu0 %v2684
    %2700 = vmatpush1.msra.mxu0 %v2683
    %2701 = vmatprep.subr.mxu0 %v2686
    %2702 = vmatpush1.msra.mxu0 %v2685
    %2703 = vmatprep.subr.mxu0 %v2688
    %2704 = vmatpush1.msra.mxu0 %v2687
    %2705 = vmatprep.subr.mxu0 0.0
    %2706 = vmatpush1.msra.mxu0 0.0
    %2707 = vmatprep.subr.mxu0 0.0
    %2708 = vmatpush1.msra.mxu0 0.0
    %2709 = vmatprep.subr.mxu0 0.0
    %2710 = vmatpush1.msra.mxu0 0.0
    %2711 = vmatprep.subr.mxu0 0.0
    %2712 = vmatpush1.msra.mxu0 0.0
    %2713 = vmatprep.subr.mxu0 0.0
    %2714 = vmatpush1.msra.mxu0 0.0
    %2715 = vmatprep.subr.mxu0 0.0
    %2716 = vmatpush1.msra.mxu0 0.0
    %2717 = vmatprep.subr.mxu0 0.0
    %2718 = vmatpush1.msra.mxu0 0.0
    %2719 = vmatprep.subr.mxu0 0.0
    %2720 = vmatpush1.msra.mxu0 0.0
    %2721 = vmatprep.subr.mxu0 0.0
    %2722 = vmatpush1.msra.mxu0 0.0
    %2723 = vmatprep.subr.mxu0 0.0
    %2724 = vmatpush1.msra.mxu0 0.0
    %2725 = vmatprep.subr.mxu0 0.0
    %2726 = vmatpush1.msra.mxu0 0.0
    %2727 = vmatprep.subr.mxu0 0.0
    %2728 = vmatpush1.msra.mxu0 0.0
    %2729 = vmatprep.subr.mxu0 0.0
    %2730 = vmatpush1.msra.mxu0 0.0
    %2731 = vmatprep.subr.mxu0 0.0
    %2732 = vmatpush1.msra.mxu0 0.0
    %2733 = vmatprep.subr.mxu0 0.0
    %2734 = vmatpush1.msra.mxu0 0.0
    %2735 = vmatprep.subr.mxu0 0.0
    %2736 = vmatpush1.msra.mxu0 0.0
    %2737 = vmatprep.subr.mxu0 0.0
    %2738 = vmatpush1.msra.mxu0 0.0
    %2739 = vmatprep.subr.mxu0 0.0
    %2740 = vmatpush1.msra.mxu0 0.0
    %2741 = vmatprep.subr.mxu0 0.0
    %2742 = vmatpush1.msra.mxu0 0.0
    %2743 = vmatprep.subr.mxu0 0.0
    %2744 = vmatpush1.msra.mxu0 0.0
    %2745 = vmatprep.subr.mxu0 0.0
    %2746 = vmatpush1.msra.mxu0 0.0
    %2747 = vmatprep.subr.mxu0 0.0
    %2748 = vmatpush1.msra.mxu0 0.0
    %2749 = vmatprep.subr.mxu0 0.0
    %2750 = vmatpush1.msra.mxu0 0.0
    %2751 = vmatprep.subr.mxu0 0.0
    %2752 = vmatpush1.msra.mxu0 0.0
    %2753 = vmatprep.mubr.f32.mxu0 0.0
    %2754 = vmatmul.mubr.f32.gmra.mrb[0].mxu0 %v2537
    %v2755 = vpop.f32.mrb[0].mxu0
    %v2756 = vadd.f32 0.0, %v2755
    %v2757 = vpop.f32.mrb[0].mxu0
    %v2758 = vadd.f32 0.0, %v2757
    %2759 = vmatprep.mubr.f32.mxu0 0.0
    %2760 = vmatmul.mubr.f32.gmra.mrb[0].mxu0 %v2540
    %v2761 = vpop.f32.mrb[0].mxu0
    %v2762 = vadd.f32 0.0, %v2761
    %v2763 = vpop.f32.mrb[0].mxu0
    %v2764 = vadd.f32 0.0, %v2763
    %2765 = vmatprep.mubr.f32.mxu0 0.0
    %2766 = vmatmul.mubr.f32.gmra.mrb[0].mxu0 %v2543
    %v2767 = vpop.f32.mrb[0].mxu0
    %v2768 = vadd.f32 0.0, %v2767
    %v2769 = vpop.f32.mrb[0].mxu0
    %v2770 = vadd.f32 0.0, %v2769
    %2771 = vmatprep.mubr.f32.mxu0 0.0
    %2772 = vmatmul.mubr.f32.gmra.mrb[0].mxu0 %v2546
    %v2773 = vpop.f32.mrb[0].mxu0
    %v2774 = vadd.f32 0.0, %v2773
    %v2775 = vpop.f32.mrb[0].mxu0
    %v2776 = vadd.f32 0.0, %v2775
    %2777 = vmatprep.mubr.f32.mxu0 0.0
    %2778 = vmatmul.mubr.f32.gmra.mrb[0].mxu0 %v2549
    %v2779 = vpop.f32.mrb[0].mxu0
    %v2780 = vadd.f32 0.0, %v2779
    %v2781 = vpop.f32.mrb[0].mxu0
    %v2782 = vadd.f32 0.0, %v2781
    %2783 = vmatprep.mubr.f32.mxu0 0.0
    %2784 = vmatmul.mubr.f32.gmra.mrb[0].mxu0 %v2552
    %v2785 = vpop.f32.mrb[0].mxu0
    %v2786 = vadd.f32 0.0, %v2785
    %v2787 = vpop.f32.mrb[0].mxu0
    %v2788 = vadd.f32 0.0, %v2787
    %2789 = vmatprep.mubr.f32.mxu0 0.0
    %2790 = vmatmul.mubr.f32.gmra.mrb[0].mxu0 %v2555
    %v2791 = vpop.f32.mrb[0].mxu0
    %v2792 = vadd.f32 0.0, %v2791
    %v2793 = vpop.f32.mrb[0].mxu0
    %v2794 = vadd.f32 0.0, %v2793
    %2795 = vmatprep.mubr.f32.mxu0 0.0
    %2796 = vmatmul.mubr.f32.gmra.mrb[0].mxu0 %v2558
    %v2797 = vpop.f32.mrb[0].mxu0
    %v2798 = vadd.f32 0.0, %v2797
    %v2799 = vpop.f32.mrb[0].mxu0
    %v2800 = vadd.f32 0.0, %v2799
    %2801 = vdwg.mxu0
    %v2802 = vadd.f32 %v2627, %v2798
    %v2803 = vadd.f32 %v2629, %v2800
    %2804 = vst [vmem:[#allocation3] sm:$0xff] %v2802
    %2805 = vst [vmem:[#allocation3 + $0x8] sm:$0xff] %v2803
    %v2806 = vadd.f32 %v2633, %v2792
    %v2807 = vadd.f32 %v2635, %v2794
    %2808 = vst [vmem:[#allocation3 + $0x10] sm:$0xff] %v2806
    %2809 = vst [vmem:[#allocation3 + $0x18] sm:$0xff] %v2807
    %v2810 = vadd.f32 %v2639, %v2786
    %v2811 = vadd.f32 %v2641, %v2788
    %2812 = vst [vmem:[#allocation3 + $0x20] sm:$0xff] %v2810
    %2813 = vst [vmem:[#allocation3 + $0x28] sm:$0xff] %v2811
    %v2814 = vadd.f32 %v2645, %v2780
    %v2815 = vadd.f32 %v2647, %v2782
    %2816 = vst [vmem:[#allocation3 + $0x30] sm:$0xff] %v2814
    %2817 = vst [vmem:[#allocation3 + $0x38] sm:$0xff] %v2815
    %v2818 = vadd.f32 %v2651, %v2774
    %v2819 = vadd.f32 %v2653, %v2776
    %2820 = vst [vmem:[#allocation3 + $0x40] sm:$0xff] %v2818
    %2821 = vst [vmem:[#allocation3 + $0x48] sm:$0xff] %v2819
    %v2822 = vadd.f32 %v2657, %v2768
    %v2823 = vadd.f32 %v2659, %v2770
    %2824 = vst [vmem:[#allocation3 + $0x50] sm:$0xff] %v2822
    %2825 = vst [vmem:[#allocation3 + $0x58] sm:$0xff] %v2823
    %v2826 = vadd.f32 %v2663, %v2762
    %v2827 = vadd.f32 %v2665, %v2764
    %2828 = vst [vmem:[#allocation3 + $0x60] sm:$0xff] %v2826
    %2829 = vst [vmem:[#allocation3 + $0x68] sm:$0xff] %v2827
    %v2830 = vadd.f32 %v2669, %v2756
    %v2831 = vadd.f32 %v2671, %v2758
    %2832 = vst [vmem:[#allocation3 + $0x70] sm:$0xff] %v2830
    %2833 = vst [vmem:[#allocation3 + $0x78] sm:$0xff] %v2831
    %v2834 = vld [vmem:[#allocation12] sm:$0xff]
    %v2835 = vld [vmem:[#allocation12 + $0x8] sm:$0xff]
    %v2836 = vld [vmem:[#allocation12 + $0x10] sm:$0xff]
    %v2837 = vld [vmem:[#allocation12 + $0x18] sm:$0xff]
    %v2838 = vld [vmem:[#allocation12 + $0x20] sm:$0xff]
    %v2839 = vld [vmem:[#allocation12 + $0x28] sm:$0xff]
    %v2840 = vld [vmem:[#allocation12 + $0x30] sm:$0xff]
    %v2841 = vld [vmem:[#allocation12 + $0x38] sm:$0xff]
    %v2842 = vld [vmem:[#allocation12 + $0x40] sm:$0xff]
    %v2843 = vld [vmem:[#allocation12 + $0x48] sm:$0xff]
    %v2844 = vld [vmem:[#allocation12 + $0x50] sm:$0xff]
    %v2845 = vld [vmem:[#allocation12 + $0x58] sm:$0xff]
    %v2846 = vld [vmem:[#allocation12 + $0x60] sm:$0xff]
    %v2847 = vld [vmem:[#allocation12 + $0x68] sm:$0xff]
    %v2848 = vld [vmem:[#allocation12 + $0x70] sm:$0xff]
    %v2849 = vld [vmem:[#allocation12 + $0x78] sm:$0xff]
    %v2850 = vld [vmem:[#allocation3] sm:$0xff]
    %v2851 = vld [vmem:[#allocation3 + $0x8] sm:$0xff]
    %2852 = vmatprep.subr.mxu0 %v2835
    %2853 = vmatpush1.msra.mxu0 %v2834
    %2854 = vmatprep.subr.mxu0 %v2837
    %2855 = vmatpush1.msra.mxu0 %v2836
    %2856 = vmatprep.subr.mxu0 %v2839
    %2857 = vmatpush1.msra.mxu0 %v2838
    %2858 = vmatprep.subr.mxu0 %v2841
    %2859 = vmatpush1.msra.mxu0 %v2840
    %2860 = vmatprep.subr.mxu0 %v2843
    %2861 = vmatpush1.msra.mxu0 %v2842
    %2862 = vmatprep.subr.mxu0 %v2845
    %2863 = vmatpush1.msra.mxu0 %v2844
    %2864 = vmatprep.subr.mxu0 %v2847
    %2865 = vmatpush1.msra.mxu0 %v2846
    %2866 = vmatprep.subr.mxu0 %v2849
    %2867 = vmatpush1.msra.mxu0 %v2848
    %2868 = vmatprep.subr.mxu0 0.0
    %2869 = vmatpush1.msra.mxu0 0.0
    %2870 = vmatprep.subr.mxu0 0.0
    %2871 = vmatpush1.msra.mxu0 0.0
    %2872 = vmatprep.subr.mxu0 0.0
    %2873 = vmatpush1.msra.mxu0 0.0
    %2874 = vmatprep.subr.mxu0 0.0
    %2875 = vmatpush1.msra.mxu0 0.0
    %2876 = vmatprep.subr.mxu0 0.0
    %2877 = vmatpush1.msra.mxu0 0.0
    %2878 = vmatprep.subr.mxu0 0.0
    %2879 = vmatpush1.msra.mxu0 0.0
    %2880 = vmatprep.subr.mxu0 0.0
    %2881 = vmatpush1.msra.mxu0 0.0
    %2882 = vmatprep.subr.mxu0 0.0
    %2883 = vmatpush1.msra.mxu0 0.0
    %2884 = vmatprep.subr.mxu0 0.0
    %2885 = vmatpush1.msra.mxu0 0.0
    %2886 = vmatprep.subr.mxu0 0.0
    %2887 = vmatpush1.msra.mxu0 0.0
    %2888 = vmatprep.subr.mxu0 0.0
    %2889 = vmatpush1.msra.mxu0 0.0
    %2890 = vmatprep.subr.mxu0 0.0
    %2891 = vmatpush1.msra.mxu0 0.0
    %2892 = vmatprep.subr.mxu0 0.0
    %2893 = vmatpush1.msra.mxu0 0.0
    %2894 = vmatprep.subr.mxu0 0.0
    %2895 = vmatpush1.msra.mxu0 0.0
    %2896 = vmatprep.subr.mxu0 0.0
    %2897 = vmatpush1.msra.mxu0 0.0
    %2898 = vmatprep.subr.mxu0 0.0
    %2899 = vmatpush1.msra.mxu0 0.0
    %2900 = vmatprep.subr.mxu0 0.0
    %2901 = vmatpush1.msra.mxu0 0.0
    %2902 = vmatprep.subr.mxu0 0.0
    %2903 = vmatpush1.msra.mxu0 0.0
    %2904 = vmatprep.subr.mxu0 0.0
    %2905 = vmatpush1.msra.mxu0 0.0
    %2906 = vmatprep.subr.mxu0 0.0
    %2907 = vmatpush1.msra.mxu0 0.0
    %2908 = vmatprep.subr.mxu0 0.0
    %2909 = vmatpush1.msra.mxu0 0.0
    %2910 = vmatprep.subr.mxu0 0.0
    %2911 = vmatpush1.msra.mxu0 0.0
    %2912 = vmatprep.subr.mxu0 0.0
    %2913 = vmatpush1.msra.mxu0 0.0
    %2914 = vmatprep.subr.mxu0 0.0
    %2915 = vmatpush1.msra.mxu0 0.0
    %2916 = vmatprep.mubr.f32.mxu0 0.0
    %2917 = vmatmul.mubr.f32.gmra.mrb[0].mxu0 %v524
    %v2918 = vpop.f32.mrb[0].mxu0
    %v2919 = vadd.f32 0.0, %v2918
    %v2920 = vpop.f32.mrb[0].mxu0
    %v2921 = vadd.f32 0.0, %v2920
    %2922 = vdwg.mxu0
    %v2923 = vadd.f32 %v2850, %v2919
    %v2924 = vadd.f32 %v2851, %v2921
    %v2925 = vtanh.pop %v2923
    %v2926 = vtanh.pop %v2924
    %v2927 = vmul.f32 %v2925, 0.5
    %v2928 = vmul.f32 %v2926, 0.5
    %v2929 = vadd.f32 %v2927, 0.5
    %v2930 = vadd.f32 %v2928, 0.5
    %v2931 = vmul.f32 %v2929, 0.0
    %2933 = vrot.lane.b32.xlu0 %v2926, 64
    %v2934 = vpop.permute.xlu0 %2933
    %v2936 = vmul.f32 %v2929, %v2934
    %2938 = vrot.lane.b32.xlu0 %v2936, 64
    %v2939 = vpop.permute.xlu0 %2938
    %v2941 = vadd.f32 %v2931, %v2939
    %v2942 = vtanh.pop %v2941
    %2944 = vrot.lane.b32.xlu0 %v2942, 64
    %v2945 = vpop.permute.xlu0 %2944
    %v2947 = vmul.f32 %v2930, %v2945
    %2948 = vst.msk [vmem:[#allocation2] sm:$0xff] %vm522, %v2947
    %v2949 = vld [vmem:[#allocation3 + $0x10] sm:$0xff]
    %v2950 = vld [vmem:[#allocation3 + $0x18] sm:$0xff]
    %v2952 = vsel %vm522, %v2947, 0
    %2954 = vmatprep.subr.mxu0 %v2835
    %2955 = vmatpush1.msra.mxu0 %v2834
    %2956 = vmatprep.subr.mxu0 %v2837
    %2957 = vmatpush1.msra.mxu0 %v2836
    %2958 = vmatprep.subr.mxu0 %v2839
    %2959 = vmatpush1.msra.mxu0 %v2838
    %2960 = vmatprep.subr.mxu0 %v2841
    %2961 = vmatpush1.msra.mxu0 %v2840
    %2962 = vmatprep.subr.mxu0 %v2843
    %2963 = vmatpush1.msra.mxu0 %v2842
    %2964 = vmatprep.subr.mxu0 %v2845
    %2965 = vmatpush1.msra.mxu0 %v2844
    %2966 = vmatprep.subr.mxu0 %v2847
    %2967 = vmatpush1.msra.mxu0 %v2846
    %2968 = vmatprep.subr.mxu0 %v2849
    %2969 = vmatpush1.msra.mxu0 %v2848
    %2970 = vmatprep.subr.mxu0 0.0
    %2971 = vmatpush1.msra.mxu0 0.0
    %2972 = vmatprep.subr.mxu0 0.0
    %2973 = vmatpush1.msra.mxu0 0.0
    %2974 = vmatprep.subr.mxu0 0.0
    %2975 = vmatpush1.msra.mxu0 0.0
    %2976 = vmatprep.subr.mxu0 0.0
    %2977 = vmatpush1.msra.mxu0 0.0
    %2978 = vmatprep.subr.mxu0 0.0
    %2979 = vmatpush1.msra.mxu0 0.0
    %2980 = vmatprep.subr.mxu0 0.0
    %2981 = vmatpush1.msra.mxu0 0.0
    %2982 = vmatprep.subr.mxu0 0.0
    %2983 = vmatpush1.msra.mxu0 0.0
    %2984 = vmatprep.subr.mxu0 0.0
    %2985 = vmatpush1.msra.mxu0 0.0
    %2986 = vmatprep.subr.mxu0 0.0
    %2987 = vmatpush1.msra.mxu0 0.0
    %2988 = vmatprep.subr.mxu0 0.0
    %2989 = vmatpush1.msra.mxu0 0.0
    %2990 = vmatprep.subr.mxu0 0.0
    %2991 = vmatpush1.msra.mxu0 0.0
    %2992 = vmatprep.subr.mxu0 0.0
    %2993 = vmatpush1.msra.mxu0 0.0
    %2994 = vmatprep.subr.mxu0 0.0
    %2995 = vmatpush1.msra.mxu0 0.0
    %2996 = vmatprep.subr.mxu0 0.0
    %2997 = vmatpush1.msra.mxu0 0.0
    %2998 = vmatprep.subr.mxu0 0.0
    %2999 = vmatpush1.msra.mxu0 0.0
    %3000 = vmatprep.subr.mxu0 0.0
    %3001 = vmatpush1.msra.mxu0 0.0
    %3002 = vmatprep.subr.mxu0 0.0
    %3003 = vmatpush1.msra.mxu0 0.0
    %3004 = vmatprep.subr.mxu0 0.0
    %3005 = vmatpush1.msra.mxu0 0.0
    %3006 = vmatprep.subr.mxu0 0.0
    %3007 = vmatpush1.msra.mxu0 0.0
    %3008 = vmatprep.subr.mxu0 0.0
    %3009 = vmatpush1.msra.mxu0 0.0
    %3010 = vmatprep.subr.mxu0 0.0
    %3011 = vmatpush1.msra.mxu0 0.0
    %3012 = vmatprep.subr.mxu0 0.0
    %3013 = vmatpush1.msra.mxu0 0.0
    %3014 = vmatprep.subr.mxu0 0.0
    %3015 = vmatpush1.msra.mxu0 0.0
    %3016 = vmatprep.subr.mxu0 0.0
    %3017 = vmatpush1.msra.mxu0 0.0
    %3018 = vmatprep.mubr.f32.mxu0 0.0
    %3019 = vmatmul.mubr.f32.gmra.mrb[0].mxu0 %v2952
    %v3020 = vpop.f32.mrb[0].mxu0
    %v3021 = vadd.f32 0.0, %v3020
    %v3022 = vpop.f32.mrb[0].mxu0
    %v3023 = vadd.f32 0.0, %v3022
    %3024 = vdwg.mxu0
    %v3025 = vadd.f32 %v2949, %v3021
    %v3026 = vadd.f32 %v2950, %v3023
    %v3027 = vtanh.pop %v3025
    %v3028 = vtanh.pop %v3026
    %v3029 = vmul.f32 %v3027, 0.5
    %v3030 = vmul.f32 %v3028, 0.5
    %v3031 = vadd.f32 %v3029, 0.5
    %v3032 = vadd.f32 %v3030, 0.5
    %v3033 = vmul.f32 %v3031, %v2941
    %3035 = vrot.lane.b32.xlu0 %v3028, 64
    %v3036 = vpop.permute.xlu0 %3035
    %v3038 = vmul.f32 %v3031, %v3036
    %3040 = vrot.lane.b32.xlu0 %v3038, 64
    %v3041 = vpop.permute.xlu0 %3040
    %v3043 = vadd.f32 %v3033, %v3041
    %v3044 = vtanh.pop %v3043
    %3046 = vrot.lane.b32.xlu0 %v3044, 64
    %v3047 = vpop.permute.xlu0 %3046
    %v3049 = vmul.f32 %v3032, %v3047
    %3050 = vst.msk [vmem:[#allocation2 + $0x8] sm:$0xff] %vm522, %v3049
    %v3051 = vld [vmem:[#allocation3 + $0x20] sm:$0xff]
    %v3052 = vld [vmem:[#allocation3 + $0x28] sm:$0xff]
    %v3054 = vsel %vm522, %v3049, 0
    %3056 = vmatprep.subr.mxu0 %v2835
    %3057 = vmatpush1.msra.mxu0 %v2834
    %3058 = vmatprep.subr.mxu0 %v2837
    %3059 = vmatpush1.msra.mxu0 %v2836
    %3060 = vmatprep.subr.mxu0 %v2839
    %3061 = vmatpush1.msra.mxu0 %v2838
    %3062 = vmatprep.subr.mxu0 %v2841
    %3063 = vmatpush1.msra.mxu0 %v2840
    %3064 = vmatprep.subr.mxu0 %v2843
    %3065 = vmatpush1.msra.mxu0 %v2842
    %3066 = vmatprep.subr.mxu0 %v2845
    %3067 = vmatpush1.msra.mxu0 %v2844
    %3068 = vmatprep.subr.mxu0 %v2847
    %3069 = vmatpush1.msra.mxu0 %v2846
    %3070 = vmatprep.subr.mxu0 %v2849
    %3071 = vmatpush1.msra.mxu0 %v2848
    %3072 = vmatprep.subr.mxu0 0.0
    %3073 = vmatpush1.msra.mxu0 0.0
    %3074 = vmatprep.subr.mxu0 0.0
    %3075 = vmatpush1.msra.mxu0 0.0
    %3076 = vmatprep.subr.mxu0 0.0
    %3077 = vmatpush1.msra.mxu0 0.0
    %3078 = vmatprep.subr.mxu0 0.0
    %3079 = vmatpush1.msra.mxu0 0.0
    %3080 = vmatprep.subr.mxu0 0.0
    %3081 = vmatpush1.msra.mxu0 0.0
    %3082 = vmatprep.subr.mxu0 0.0
    %3083 = vmatpush1.msra.mxu0 0.0
    %3084 = vmatprep.subr.mxu0 0.0
    %3085 = vmatpush1.msra.mxu0 0.0
    %3086 = vmatprep.subr.mxu0 0.0
    %3087 = vmatpush1.msra.mxu0 0.0
    %3088 = vmatprep.subr.mxu0 0.0
    %3089 = vmatpush1.msra.mxu0 0.0
    %3090 = vmatprep.subr.mxu0 0.0
    %3091 = vmatpush1.msra.mxu0 0.0
    %3092 = vmatprep.subr.mxu0 0.0
    %3093 = vmatpush1.msra.mxu0 0.0
    %3094 = vmatprep.subr.mxu0 0.0
    %3095 = vmatpush1.msra.mxu0 0.0
    %3096 = vmatprep.subr.mxu0 0.0
    %3097 = vmatpush1.msra.mxu0 0.0
    %3098 = vmatprep.subr.mxu0 0.0
    %3099 = vmatpush1.msra.mxu0 0.0
    %3100 = vmatprep.subr.mxu0 0.0
    %3101 = vmatpush1.msra.mxu0 0.0
    %3102 = vmatprep.subr.mxu0 0.0
    %3103 = vmatpush1.msra.mxu0 0.0
    %3104 = vmatprep.subr.mxu0 0.0
    %3105 = vmatpush1.msra.mxu0 0.0
    %3106 = vmatprep.subr.mxu0 0.0
    %3107 = vmatpush1.msra.mxu0 0.0
    %3108 = vmatprep.subr.mxu0 0.0
    %3109 = vmatpush1.msra.mxu0 0.0
    %3110 = vmatprep.subr.mxu0 0.0
    %3111 = vmatpush1.msra.mxu0 0.0
    %3112 = vmatprep.subr.mxu0 0.0
    %3113 = vmatpush1.msra.mxu0 0.0
    %3114 = vmatprep.subr.mxu0 0.0
    %3115 = vmatpush1.msra.mxu0 0.0
    %3116 = vmatprep.subr.mxu0 0.0
    %3117 = vmatpush1.msra.mxu0 0.0
    %3118 = vmatprep.subr.mxu0 0.0
    %3119 = vmatpush1.msra.mxu0 0.0
    %3120 = vmatprep.mubr.f32.mxu0 0.0
    %3121 = vmatmul.mubr.f32.gmra.mrb[0].mxu0 %v3054
    %v3122 = vpop.f32.mrb[0].mxu0
    %v3123 = vadd.f32 0.0, %v3122
    %v3124 = vpop.f32.mrb[0].mxu0
    %v3125 = vadd.f32 0.0, %v3124
    %3126 = vdwg.mxu0
    %v3127 = vadd.f32 %v3051, %v3123
    %v3128 = vadd.f32 %v3052, %v3125
    %v3129 = vtanh.pop %v3127
    %v3130 = vtanh.pop %v3128
    %v3131 = vmul.f32 %v3129, 0.5
    %v3132 = vmul.f32 %v3130, 0.5
    %v3133 = vadd.f32 %v3131, 0.5
    %v3134 = vadd.f32 %v3132, 0.5
    %v3135 = vmul.f32 %v3133, %v3043
    %3137 = vrot.lane.b32.xlu0 %v3130, 64
    %v3138 = vpop.permute.xlu0 %3137
    %v3140 = vmul.f32 %v3133, %v3138
    %3142 = vrot.lane.b32.xlu0 %v3140, 64
    %v3143 = vpop.permute.xlu0 %3142
    %v3145 = vadd.f32 %v3135, %v3143
    %v3146 = vtanh.pop %v3145
    %3148 = vrot.lane.b32.xlu0 %v3146, 64
    %v3149 = vpop.permute.xlu0 %3148
    %v3151 = vmul.f32 %v3134, %v3149
    %3152 = vst.msk [vmem:[#allocation2 + $0x10] sm:$0xff] %vm522, %v3151
    %v3153 = vld [vmem:[#allocation3 + $0x30] sm:$0xff]
    %v3154 = vld [vmem:[#allocation3 + $0x38] sm:$0xff]
    %v3156 = vsel %vm522, %v3151, 0
    %3158 = vmatprep.subr.mxu0 %v2835
    %3159 = vmatpush1.msra.mxu0 %v2834
    %3160 = vmatprep.subr.mxu0 %v2837
    %3161 = vmatpush1.msra.mxu0 %v2836
    %3162 = vmatprep.subr.mxu0 %v2839
    %3163 = vmatpush1.msra.mxu0 %v2838
    %3164 = vmatprep.subr.mxu0 %v2841
    %3165 = vmatpush1.msra.mxu0 %v2840
    %3166 = vmatprep.subr.mxu0 %v2843
    %3167 = vmatpush1.msra.mxu0 %v2842
    %3168 = vmatprep.subr.mxu0 %v2845
    %3169 = vmatpush1.msra.mxu0 %v2844
    %3170 = vmatprep.subr.mxu0 %v2847
    %3171 = vmatpush1.msra.mxu0 %v2846
    %3172 = vmatprep.subr.mxu0 %v2849
    %3173 = vmatpush1.msra.mxu0 %v2848
    %3174 = vmatprep.subr.mxu0 0.0
    %3175 = vmatpush1.msra.mxu0 0.0
    %3176 = vmatprep.subr.mxu0 0.0
    %3177 = vmatpush1.msra.mxu0 0.0
    %3178 = vmatprep.subr.mxu0 0.0
    %3179 = vmatpush1.msra.mxu0 0.0
    %3180 = vmatprep.subr.mxu0 0.0
    %3181 = vmatpush1.msra.mxu0 0.0
    %3182 = vmatprep.subr.mxu0 0.0
    %3183 = vmatpush1.msra.mxu0 0.0
    %3184 = vmatprep.subr.mxu0 0.0
    %3185 = vmatpush1.msra.mxu0 0.0
    %3186 = vmatprep.subr.mxu0 0.0
    %3187 = vmatpush1.msra.mxu0 0.0
    %3188 = vmatprep.subr.mxu0 0.0
    %3189 = vmatpush1.msra.mxu0 0.0
    %3190 = vmatprep.subr.mxu0 0.0
    %3191 = vmatpush1.msra.mxu0 0.0
    %3192 = vmatprep.subr.mxu0 0.0
    %3193 = vmatpush1.msra.mxu0 0.0
    %3194 = vmatprep.subr.mxu0 0.0
    %3195 = vmatpush1.msra.mxu0 0.0
    %3196 = vmatprep.subr.mxu0 0.0
    %3197 = vmatpush1.msra.mxu0 0.0
    %3198 = vmatprep.subr.mxu0 0.0
    %3199 = vmatpush1.msra.mxu0 0.0
    %3200 = vmatprep.subr.mxu0 0.0
    %3201 = vmatpush1.msra.mxu0 0.0
    %3202 = vmatprep.subr.mxu0 0.0
    %3203 = vmatpush1.msra.mxu0 0.0
    %3204 = vmatprep.subr.mxu0 0.0
    %3205 = vmatpush1.msra.mxu0 0.0
    %3206 = vmatprep.subr.mxu0 0.0
    %3207 = vmatpush1.msra.mxu0 0.0
    %3208 = vmatprep.subr.mxu0 0.0
    %3209 = vmatpush1.msra.mxu0 0.0
    %3210 = vmatprep.subr.mxu0 0.0
    %3211 = vmatpush1.msra.mxu0 0.0
    %3212 = vmatprep.subr.mxu0 0.0
    %3213 = vmatpush1.msra.mxu0 0.0
    %3214 = vmatprep.subr.mxu0 0.0
    %3215 = vmatpush1.msra.mxu0 0.0
    %3216 = vmatprep.subr.mxu0 0.0
    %3217 = vmatpush1.msra.mxu0 0.0
    %3218 = vmatprep.subr.mxu0 0.0
    %3219 = vmatpush1.msra.mxu0 0.0
    %3220 = vmatprep.subr.mxu0 0.0
    %3221 = vmatpush1.msra.mxu0 0.0
    %3222 = vmatprep.mubr.f32.mxu0 0.0
    %3223 = vmatmul.mubr.f32.gmra.mrb[0].mxu0 %v3156
    %v3224 = vpop.f32.mrb[0].mxu0
    %v3225 = vadd.f32 0.0, %v3224
    %v3226 = vpop.f32.mrb[0].mxu0
    %v3227 = vadd.f32 0.0, %v3226
    %3228 = vdwg.mxu0
    %v3229 = vadd.f32 %v3153, %v3225
    %v3230 = vadd.f32 %v3154, %v3227
    %v3231 = vtanh.pop %v3229
    %v3232 = vtanh.pop %v3230
    %v3233 = vmul.f32 %v3231, 0.5
    %v3234 = vmul.f32 %v3232, 0.5
    %v3235 = vadd.f32 %v3233, 0.5
    %v3236 = vadd.f32 %v3234, 0.5
    %v3237 = vmul.f32 %v3235, %v3145
    %3239 = vrot.lane.b32.xlu0 %v3232, 64
    %v3240 = vpop.permute.xlu0 %3239
    %v3242 = vmul.f32 %v3235, %v3240
    %3244 = vrot.lane.b32.xlu0 %v3242, 64
    %v3245 = vpop.permute.xlu0 %3244
    %v3247 = vadd.f32 %v3237, %v3245
    %v3248 = vtanh.pop %v3247
    %3250 = vrot.lane.b32.xlu0 %v3248, 64
    %v3251 = vpop.permute.xlu0 %3250
    %v3253 = vmul.f32 %v3236, %v3251
    %3254 = vst.msk [vmem:[#allocation2 + $0x18] sm:$0xff] %vm522, %v3253
    %v3255 = vld [vmem:[#allocation3 + $0x40] sm:$0xff]
    %v3256 = vld [vmem:[#allocation3 + $0x48] sm:$0xff]
    %v3258 = vsel %vm522, %v3253, 0
    %3260 = vmatprep.subr.mxu0 %v2835
    %3261 = vmatpush1.msra.mxu0 %v2834
    %3262 = vmatprep.subr.mxu0 %v2837
    %3263 = vmatpush1.msra.mxu0 %v2836
    %3264 = vmatprep.subr.mxu0 %v2839
    %3265 = vmatpush1.msra.mxu0 %v2838
    %3266 = vmatprep.subr.mxu0 %v2841
    %3267 = vmatpush1.msra.mxu0 %v2840
    %3268 = vmatprep.subr.mxu0 %v2843
    %3269 = vmatpush1.msra.mxu0 %v2842
    %3270 = vmatprep.subr.mxu0 %v2845
    %3271 = vmatpush1.msra.mxu0 %v2844
    %3272 = vmatprep.subr.mxu0 %v2847
    %3273 = vmatpush1.msra.mxu0 %v2846
    %3274 = vmatprep.subr.mxu0 %v2849
    %3275 = vmatpush1.msra.mxu0 %v2848
    %3276 = vmatprep.subr.mxu0 0.0
    %3277 = vmatpush1.msra.mxu0 0.0
    %3278 = vmatprep.subr.mxu0 0.0
    %3279 = vmatpush1.msra.mxu0 0.0
    %3280 = vmatprep.subr.mxu0 0.0
    %3281 = vmatpush1.msra.mxu0 0.0
    %3282 = vmatprep.subr.mxu0 0.0
    %3283 = vmatpush1.msra.mxu0 0.0
    %3284 = vmatprep.subr.mxu0 0.0
    %3285 = vmatpush1.msra.mxu0 0.0
    %3286 = vmatprep.subr.mxu0 0.0
    %3287 = vmatpush1.msra.mxu0 0.0
    %3288 = vmatprep.subr.mxu0 0.0
    %3289 = vmatpush1.msra.mxu0 0.0
    %3290 = vmatprep.subr.mxu0 0.0
    %3291 = vmatpush1.msra.mxu0 0.0
    %3292 = vmatprep.subr.mxu0 0.0
    %3293 = vmatpush1.msra.mxu0 0.0
    %3294 = vmatprep.subr.mxu0 0.0
    %3295 = vmatpush1.msra.mxu0 0.0
    %3296 = vmatprep.subr.mxu0 0.0
    %3297 = vmatpush1.msra.mxu0 0.0
    %3298 = vmatprep.subr.mxu0 0.0
    %3299 = vmatpush1.msra.mxu0 0.0
    %3300 = vmatprep.subr.mxu0 0.0
    %3301 = vmatpush1.msra.mxu0 0.0
    %3302 = vmatprep.subr.mxu0 0.0
    %3303 = vmatpush1.msra.mxu0 0.0
    %3304 = vmatprep.subr.mxu0 0.0
    %3305 = vmatpush1.msra.mxu0 0.0
    %3306 = vmatprep.subr.mxu0 0.0
    %3307 = vmatpush1.msra.mxu0 0.0
    %3308 = vmatprep.subr.mxu0 0.0
    %3309 = vmatpush1.msra.mxu0 0.0
    %3310 = vmatprep.subr.mxu0 0.0
    %3311 = vmatpush1.msra.mxu0 0.0
    %3312 = vmatprep.subr.mxu0 0.0
    %3313 = vmatpush1.msra.mxu0 0.0
    %3314 = vmatprep.subr.mxu0 0.0
    %3315 = vmatpush1.msra.mxu0 0.0
    %3316 = vmatprep.subr.mxu0 0.0
    %3317 = vmatpush1.msra.mxu0 0.0
    %3318 = vmatprep.subr.mxu0 0.0
    %3319 = vmatpush1.msra.mxu0 0.0
    %3320 = vmatprep.subr.mxu0 0.0
    %3321 = vmatpush1.msra.mxu0 0.0
    %3322 = vmatprep.subr.mxu0 0.0
    %3323 = vmatpush1.msra.mxu0 0.0
    %3324 = vmatprep.mubr.f32.mxu0 0.0
    %3325 = vmatmul.mubr.f32.gmra.mrb[0].mxu0 %v3258
    %v3326 = vpop.f32.mrb[0].mxu0
    %v3327 = vadd.f32 0.0, %v3326
    %v3328 = vpop.f32.mrb[0].mxu0
    %v3329 = vadd.f32 0.0, %v3328
    %3330 = vdwg.mxu0
    %v3331 = vadd.f32 %v3255, %v3327
    %v3332 = vadd.f32 %v3256, %v3329
    %v3333 = vtanh.pop %v3331
    %v3334 = vtanh.pop %v3332
    %v3335 = vmul.f32 %v3333, 0.5
    %v3336 = vmul.f32 %v3334, 0.5
    %v3337 = vadd.f32 %v3335, 0.5
    %v3338 = vadd.f32 %v3336, 0.5
    %v3339 = vmul.f32 %v3337, %v3247
    %3341 = vrot.lane.b32.xlu0 %v3334, 64
    %v3342 = vpop.permute.xlu0 %3341
    %v3344 = vmul.f32 %v3337, %v3342
    %3346 = vrot.lane.b32.xlu0 %v3344, 64
    %v3347 = vpop.permute.xlu0 %3346
    %v3349 = vadd.f32 %v3339, %v3347
    %v3350 = vtanh.pop %v3349
    %3352 = vrot.lane.b32.xlu0 %v3350, 64
    %v3353 = vpop.permute.xlu0 %3352
    %v3355 = vmul.f32 %v3338, %v3353
    %3356 = vst.msk [vmem:[#allocation2 + $0x20] sm:$0xff] %vm522, %v3355
    %v3357 = vld [vmem:[#allocation3 + $0x50] sm:$0xff]
    %v3358 = vld [vmem:[#allocation3 + $0x58] sm:$0xff]
    %v3360 = vsel %vm522, %v3355, 0
    %3362 = vmatprep.subr.mxu0 %v2835
    %3363 = vmatpush1.msra.mxu0 %v2834
    %3364 = vmatprep.subr.mxu0 %v2837
    %3365 = vmatpush1.msra.mxu0 %v2836
    %3366 = vmatprep.subr.mxu0 %v2839
    %3367 = vmatpush1.msra.mxu0 %v2838
    %3368 = vmatprep.subr.mxu0 %v2841
    %3369 = vmatpush1.msra.mxu0 %v2840
    %3370 = vmatprep.subr.mxu0 %v2843
    %3371 = vmatpush1.msra.mxu0 %v2842
    %3372 = vmatprep.subr.mxu0 %v2845
    %3373 = vmatpush1.msra.mxu0 %v2844
    %3374 = vmatprep.subr.mxu0 %v2847
    %3375 = vmatpush1.msra.mxu0 %v2846
    %3376 = vmatprep.subr.mxu0 %v2849
    %3377 = vmatpush1.msra.mxu0 %v2848
    %3378 = vmatprep.subr.mxu0 0.0
    %3379 = vmatpush1.msra.mxu0 0.0
    %3380 = vmatprep.subr.mxu0 0.0
    %3381 = vmatpush1.msra.mxu0 0.0
    %3382 = vmatprep.subr.mxu0 0.0
    %3383 = vmatpush1.msra.mxu0 0.0
    %3384 = vmatprep.subr.mxu0 0.0
    %3385 = vmatpush1.msra.mxu0 0.0
    %3386 = vmatprep.subr.mxu0 0.0
    %3387 = vmatpush1.msra.mxu0 0.0
    %3388 = vmatprep.subr.mxu0 0.0
    %3389 = vmatpush1.msra.mxu0 0.0
    %3390 = vmatprep.subr.mxu0 0.0
    %3391 = vmatpush1.msra.mxu0 0.0
    %3392 = vmatprep.subr.mxu0 0.0
    %3393 = vmatpush1.msra.mxu0 0.0
    %3394 = vmatprep.subr.mxu0 0.0
    %3395 = vmatpush1.msra.mxu0 0.0
    %3396 = vmatprep.subr.mxu0 0.0
    %3397 = vmatpush1.msra.mxu0 0.0
    %3398 = vmatprep.subr.mxu0 0.0
    %3399 = vmatpush1.msra.mxu0 0.0
    %3400 = vmatprep.subr.mxu0 0.0
    %3401 = vmatpush1.msra.mxu0 0.0
    %3402 = vmatprep.subr.mxu0 0.0
    %3403 = vmatpush1.msra.mxu0 0.0
    %3404 = vmatprep.subr.mxu0 0.0
    %3405 = vmatpush1.msra.mxu0 0.0
    %3406 = vmatprep.subr.mxu0 0.0
    %3407 = vmatpush1.msra.mxu0 0.0
    %3408 = vmatprep.subr.mxu0 0.0
    %3409 = vmatpush1.msra.mxu0 0.0
    %3410 = vmatprep.subr.mxu0 0.0
    %3411 = vmatpush1.msra.mxu0 0.0
    %3412 = vmatprep.subr.mxu0 0.0
    %3413 = vmatpush1.msra.mxu0 0.0
    %3414 = vmatprep.subr.mxu0 0.0
    %3415 = vmatpush1.msra.mxu0 0.0
    %3416 = vmatprep.subr.mxu0 0.0
    %3417 = vmatpush1.msra.mxu0 0.0
    %3418 = vmatprep.subr.mxu0 0.0
    %3419 = vmatpush1.msra.mxu0 0.0
    %3420 = vmatprep.subr.mxu0 0.0
    %3421 = vmatpush1.msra.mxu0 0.0
    %3422 = vmatprep.subr.mxu0 0.0
    %3423 = vmatpush1.msra.mxu0 0.0
    %3424 = vmatprep.subr.mxu0 0.0
    %3425 = vmatpush1.msra.mxu0 0.0
    %3426 = vmatprep.mubr.f32.mxu0 0.0
    %3427 = vmatmul.mubr.f32.gmra.mrb[0].mxu0 %v3360
    %v3428 = vpop.f32.mrb[0].mxu0
    %v3429 = vadd.f32 0.0, %v3428
    %v3430 = vpop.f32.mrb[0].mxu0
    %v3431 = vadd.f32 0.0, %v3430
    %3432 = vdwg.mxu0
    %v3433 = vadd.f32 %v3357, %v3429
    %v3434 = vadd.f32 %v3358, %v3431
    %v3435 = vtanh.pop %v3433
    %v3436 = vtanh.pop %v3434
    %v3437 = vmul.f32 %v3435, 0.5
    %v3438 = vmul.f32 %v3436, 0.5
    %v3439 = vadd.f32 %v3437, 0.5
    %v3440 = vadd.f32 %v3438, 0.5
    %v3441 = vmul.f32 %v3439, %v3349
    %3443 = vrot.lane.b32.xlu0 %v3436, 64
    %v3444 = vpop.permute.xlu0 %3443
    %v3446 = vmul.f32 %v3439, %v3444
    %3448 = vrot.lane.b32.xlu0 %v3446, 64
    %v3449 = vpop.permute.xlu0 %3448
    %v3451 = vadd.f32 %v3441, %v3449
    %v3452 = vtanh.pop %v3451
    %3454 = vrot.lane.b32.xlu0 %v3452, 64
    %v3455 = vpop.permute.xlu0 %3454
    %v3457 = vmul.f32 %v3440, %v3455
    %3458 = vst.msk [vmem:[#allocation2 + $0x28] sm:$0xff] %vm522, %v3457
    %v3459 = vld [vmem:[#allocation3 + $0x60] sm:$0xff]
    %v3460 = vld [vmem:[#allocation3 + $0x68] sm:$0xff]
    %v3462 = vsel %vm522, %v3457, 0
    %3464 = vmatprep.subr.mxu0 %v2835
    %3465 = vmatpush1.msra.mxu0 %v2834
    %3466 = vmatprep.subr.mxu0 %v2837
    %3467 = vmatpush1.msra.mxu0 %v2836
    %3468 = vmatprep.subr.mxu0 %v2839
    %3469 = vmatpush1.msra.mxu0 %v2838
    %3470 = vmatprep.subr.mxu0 %v2841
    %3471 = vmatpush1.msra.mxu0 %v2840
    %3472 = vmatprep.subr.mxu0 %v2843
    %3473 = vmatpush1.msra.mxu0 %v2842
    %3474 = vmatprep.subr.mxu0 %v2845
    %3475 = vmatpush1.msra.mxu0 %v2844
    %3476 = vmatprep.subr.mxu0 %v2847
    %3477 = vmatpush1.msra.mxu0 %v2846
    %3478 = vmatprep.subr.mxu0 %v2849
    %3479 = vmatpush1.msra.mxu0 %v2848
    %3480 = vmatprep.subr.mxu0 0.0
    %3481 = vmatpush1.msra.mxu0 0.0
    %3482 = vmatprep.subr.mxu0 0.0
    %3483 = vmatpush1.msra.mxu0 0.0
    %3484 = vmatprep.subr.mxu0 0.0
    %3485 = vmatpush1.msra.mxu0 0.0
    %3486 = vmatprep.subr.mxu0 0.0
    %3487 = vmatpush1.msra.mxu0 0.0
    %3488 = vmatprep.subr.mxu0 0.0
    %3489 = vmatpush1.msra.mxu0 0.0
    %3490 = vmatprep.subr.mxu0 0.0
    %3491 = vmatpush1.msra.mxu0 0.0
    %3492 = vmatprep.subr.mxu0 0.0
    %3493 = vmatpush1.msra.mxu0 0.0
    %3494 = vmatprep.subr.mxu0 0.0
    %3495 = vmatpush1.msra.mxu0 0.0
    %3496 = vmatprep.subr.mxu0 0.0
    %3497 = vmatpush1.msra.mxu0 0.0
    %3498 = vmatprep.subr.mxu0 0.0
    %3499 = vmatpush1.msra.mxu0 0.0
    %3500 = vmatprep.subr.mxu0 0.0
    %3501 = vmatpush1.msra.mxu0 0.0
    %3502 = vmatprep.subr.mxu0 0.0
    %3503 = vmatpush1.msra.mxu0 0.0
    %3504 = vmatprep.subr.mxu0 0.0
    %3505 = vmatpush1.msra.mxu0 0.0
    %3506 = vmatprep.subr.mxu0 0.0
    %3507 = vmatpush1.msra.mxu0 0.0
    %3508 = vmatprep.subr.mxu0 0.0
    %3509 = vmatpush1.msra.mxu0 0.0
    %3510 = vmatprep.subr.mxu0 0.0
    %3511 = vmatpush1.msra.mxu0 0.0
    %3512 = vmatprep.subr.mxu0 0.0
    %3513 = vmatpush1.msra.mxu0 0.0
    %3514 = vmatprep.subr.mxu0 0.0
    %3515 = vmatpush1.msra.mxu0 0.0
    %3516 = vmatprep.subr.mxu0 0.0
    %3517 = vmatpush1.msra.mxu0 0.0
    %3518 = vmatprep.subr.mxu0 0.0
    %3519 = vmatpush1.msra.mxu0 0.0
    %3520 = vmatprep.subr.mxu0 0.0
    %3521 = vmatpush1.msra.mxu0 0.0
    %3522 = vmatprep.subr.mxu0 0.0
    %3523 = vmatpush1.msra.mxu0 0.0
    %3524 = vmatprep.subr.mxu0 0.0
    %3525 = vmatpush1.msra.mxu0 0.0
    %3526 = vmatprep.subr.mxu0 0.0
    %3527 = vmatpush1.msra.mxu0 0.0
    %3528 = vmatprep.mubr.f32.mxu0 0.0
    %3529 = vmatmul.mubr.f32.gmra.mrb[0].mxu0 %v3462
    %v3530 = vpop.f32.mrb[0].mxu0
    %v3531 = vadd.f32 0.0, %v3530
    %v3532 = vpop.f32.mrb[0].mxu0
    %v3533 = vadd.f32 0.0, %v3532
    %3534 = vdwg.mxu0
    %v3535 = vadd.f32 %v3459, %v3531
    %v3536 = vadd.f32 %v3460, %v3533
    %v3537 = vtanh.pop %v3535
    %v3538 = vtanh.pop %v3536
    %v3539 = vmul.f32 %v3537, 0.5
    %v3540 = vmul.f32 %v3538, 0.5
    %v3541 = vadd.f32 %v3539, 0.5
    %v3542 = vadd.f32 %v3540, 0.5
    %v3543 = vmul.f32 %v3541, %v3451
    %3545 = vrot.lane.b32.xlu0 %v3538, 64
    %v3546 = vpop.permute.xlu0 %3545
    %v3548 = vmul.f32 %v3541, %v3546
    %3550 = vrot.lane.b32.xlu0 %v3548, 64
    %v3551 = vpop.permute.xlu0 %3550
    %v3553 = vadd.f32 %v3543, %v3551
    %v3554 = vtanh.pop %v3553
    %3556 = vrot.lane.b32.xlu0 %v3554, 64
    %v3557 = vpop.permute.xlu0 %3556
    %v3559 = vmul.f32 %v3542, %v3557
    %3560 = vst.msk [vmem:[#allocation2 + $0x30] sm:$0xff] %vm522, %v3559
    %v3561 = vld [vmem:[#allocation3 + $0x70] sm:$0xff]
    %v3562 = vld [vmem:[#allocation3 + $0x78] sm:$0xff]
    %v3564 = vsel %vm522, %v3559, 0
    %3566 = vmatprep.subr.mxu0 %v2835
    %3567 = vmatpush1.msra.mxu0 %v2834
    %3568 = vmatprep.subr.mxu0 %v2837
    %3569 = vmatpush1.msra.mxu0 %v2836
    %3570 = vmatprep.subr.mxu0 %v2839
    %3571 = vmatpush1.msra.mxu0 %v2838
    %3572 = vmatprep.subr.mxu0 %v2841
    %3573 = vmatpush1.msra.mxu0 %v2840
    %3574 = vmatprep.subr.mxu0 %v2843
    %3575 = vmatpush1.msra.mxu0 %v2842
    %3576 = vmatprep.subr.mxu0 %v2845
    %3577 = vmatpush1.msra.mxu0 %v2844
    %3578 = vmatprep.subr.mxu0 %v2847
    %3579 = vmatpush1.msra.mxu0 %v2846
    %3580 = vmatprep.subr.mxu0 %v2849
    %3581 = vmatpush1.msra.mxu0 %v2848
    %3582 = vmatprep.subr.mxu0 0.0
    %3583 = vmatpush1.msra.mxu0 0.0
    %3584 = vmatprep.subr.mxu0 0.0
    %3585 = vmatpush1.msra.mxu0 0.0
    %3586 = vmatprep.subr.mxu0 0.0
    %3587 = vmatpush1.msra.mxu0 0.0
    %3588 = vmatprep.subr.mxu0 0.0
    %3589 = vmatpush1.msra.mxu0 0.0
    %3590 = vmatprep.subr.mxu0 0.0
    %3591 = vmatpush1.msra.mxu0 0.0
    %3592 = vmatprep.subr.mxu0 0.0
    %3593 = vmatpush1.msra.mxu0 0.0
    %3594 = vmatprep.subr.mxu0 0.0
    %3595 = vmatpush1.msra.mxu0 0.0
    %3596 = vmatprep.subr.mxu0 0.0
    %3597 = vmatpush1.msra.mxu0 0.0
    %3598 = vmatprep.subr.mxu0 0.0
    %3599 = vmatpush1.msra.mxu0 0.0
    %3600 = vmatprep.subr.mxu0 0.0
    %3601 = vmatpush1.msra.mxu0 0.0
    %3602 = vmatprep.subr.mxu0 0.0
    %3603 = vmatpush1.msra.mxu0 0.0
    %3604 = vmatprep.subr.mxu0 0.0
    %3605 = vmatpush1.msra.mxu0 0.0
    %3606 = vmatprep.subr.mxu0 0.0
    %3607 = vmatpush1.msra.mxu0 0.0
    %3608 = vmatprep.subr.mxu0 0.0
    %3609 = vmatpush1.msra.mxu0 0.0
    %3610 = vmatprep.subr.mxu0 0.0
    %3611 = vmatpush1.msra.mxu0 0.0
    %3612 = vmatprep.subr.mxu0 0.0
    %3613 = vmatpush1.msra.mxu0 0.0
    %3614 = vmatprep.subr.mxu0 0.0
    %3615 = vmatpush1.msra.mxu0 0.0
    %3616 = vmatprep.subr.mxu0 0.0
    %3617 = vmatpush1.msra.mxu0 0.0
    %3618 = vmatprep.subr.mxu0 0.0
    %3619 = vmatpush1.msra.mxu0 0.0
    %3620 = vmatprep.subr.mxu0 0.0
    %3621 = vmatpush1.msra.mxu0 0.0
    %3622 = vmatprep.subr.mxu0 0.0
    %3623 = vmatpush1.msra.mxu0 0.0
    %3624 = vmatprep.subr.mxu0 0.0
    %3625 = vmatpush1.msra.mxu0 0.0
    %3626 = vmatprep.subr.mxu0 0.0
    %3627 = vmatpush1.msra.mxu0 0.0
    %3628 = vmatprep.subr.mxu0 0.0
    %3629 = vmatpush1.msra.mxu0 0.0
    %3630 = vmatprep.mubr.f32.mxu0 0.0
    %3631 = vmatmul.mubr.f32.gmra.mrb[0].mxu0 %v3564
    %v3632 = vpop.f32.mrb[0].mxu0
    %v3633 = vadd.f32 0.0, %v3632
    %v3634 = vpop.f32.mrb[0].mxu0
    %v3635 = vadd.f32 0.0, %v3634
    %3636 = vdwg.mxu0
    %v3637 = vadd.f32 %v3561, %v3633
    %v3638 = vadd.f32 %v3562, %v3635
    %v3639 = vtanh.pop %v3637
    %v3640 = vtanh.pop %v3638
    %v3641 = vmul.f32 %v3639, 0.5
    %v3642 = vmul.f32 %v3640, 0.5
    %v3643 = vadd.f32 %v3641, 0.5
    %v3644 = vadd.f32 %v3642, 0.5
    %v3645 = vmul.f32 %v3643, %v3553
    %3647 = vrot.lane.b32.xlu0 %v3640, 64
    %v3648 = vpop.permute.xlu0 %3647
    %v3650 = vmul.f32 %v3643, %v3648
    %3652 = vrot.lane.b32.xlu0 %v3650, 64
    %v3653 = vpop.permute.xlu0 %3652
    %v3655 = vadd.f32 %v3645, %v3653
    %v3656 = vtanh.pop %v3655
    %3658 = vrot.lane.b32.xlu0 %v3656, 64
    %v3659 = vpop.permute.xlu0 %3658
    %v3661 = vmul.f32 %v3644, %v3659
    %3662 = vst.msk [vmem:[#allocation2 + $0x38] sm:$0xff] %vm522, %v3661
    %v3663 = vld [vmem:[#allocation2] sm:$0xff]
    %v3664 = vld [vmem:[#allocation2 + $0x8] sm:$0xff]
    %v3665 = vld [vmem:[#allocation2 + $0x10] sm:$0xff]
    %v3666 = vld [vmem:[#allocation2 + $0x18] sm:$0xff]
    %v3667 = vld [vmem:[#allocation2 + $0x20] sm:$0xff]
    %v3668 = vld [vmem:[#allocation2 + $0x28] sm:$0xff]
    %v3669 = vld [vmem:[#allocation2 + $0x30] sm:$0xff]
    %v3670 = vld [vmem:[#allocation2 + $0x38] sm:$0xff]
    %v3671 = vld [vmem:[#allocation14] sm:$0xff]
    %v3672 = vld [vmem:[#allocation14 + $0x8] sm:$0xff]
    %v3673 = vld [vmem:[#allocation14 + $0x10] sm:$0xff]
    %v3674 = vld [vmem:[#allocation14 + $0x18] sm:$0xff]
    %v3675 = vld [vmem:[%s14] sm:$0x1]
    %v3677 = vlaneseq
    %v3678 = vshrl.u32 %v3677, 7
    %v3679 = vsub.s32 0, %v3678
    %v3680 = vrot.slane %v3675, %v3679
    %vm3682 = vcmask 261120
    %v3684 = vsel %vm3682, %v3663, 0
    %v3687 = vsel %vm3682, %v3664, 0
    %v3690 = vsel %vm3682, %v3665, 0
    %v3693 = vsel %vm3682, %v3666, 0
    %v3696 = vsel %vm3682, %v3667, 0
    %v3699 = vsel %vm3682, %v3668, 0
    %v3702 = vsel %vm3682, %v3669, 0
    %v3705 = vsel %vm3682, %v3670, 0
    %3707 = vmatprep.subr.mxu0 0.0
    %3708 = vmatpush1.msra.mxu0 %v3671
    %3709 = vmatprep.subr.mxu0 0.0
    %3710 = vmatpush1.msra.mxu0 %v3672
    %3711 = vmatprep.subr.mxu0 0.0
    %3712 = vmatpush1.msra.mxu0 %v3673
    %3713 = vmatprep.subr.mxu0 0.0
    %3714 = vmatpush1.msra.mxu0 %v3674
    %3715 = vmatprep.subr.mxu0 0.0
    %3716 = vmatpush1.msra.mxu0 0.0
    %3717 = vmatprep.subr.mxu0 0.0
    %3718 = vmatpush1.msra.mxu0 0.0
    %3719 = vmatprep.subr.mxu0 0.0
    %3720 = vmatpush1.msra.mxu0 0.0
    %3721 = vmatprep.subr.mxu0 0.0
    %3722 = vmatpush1.msra.mxu0 0.0
    %3723 = vmatprep.subr.mxu0 0.0
    %3724 = vmatpush1.msra.mxu0 0.0
    %3725 = vmatprep.subr.mxu0 0.0
    %3726 = vmatpush1.msra.mxu0 0.0
    %3727 = vmatprep.subr.mxu0 0.0
    %3728 = vmatpush1.msra.mxu0 0.0
    %3729 = vmatprep.subr.mxu0 0.0
    %3730 = vmatpush1.msra.mxu0 0.0
    %3731 = vmatprep.subr.mxu0 0.0
    %3732 = vmatpush1.msra.mxu0 0.0
    %3733 = vmatprep.subr.mxu0 0.0
    %3734 = vmatpush1.msra.mxu0 0.0
    %3735 = vmatprep.subr.mxu0 0.0
    %3736 = vmatpush1.msra.mxu0 0.0
    %3737 = vmatprep.subr.mxu0 0.0
    %3738 = vmatpush1.msra.mxu0 0.0
    %3739 = vmatprep.subr.mxu0 0.0
    %3740 = vmatpush1.msra.mxu0 0.0
    %3741 = vmatprep.subr.mxu0 0.0
    %3742 = vmatpush1.msra.mxu0 0.0
    %3743 = vmatprep.subr.mxu0 0.0
    %3744 = vmatpush1.msra.mxu0 0.0
    %3745 = vmatprep.subr.mxu0 0.0
    %3746 = vmatpush1.msra.mxu0 0.0
    %3747 = vmatprep.subr.mxu0 0.0
    %3748 = vmatpush1.msra.mxu0 0.0
    %3749 = vmatprep.subr.mxu0 0.0
    %3750 = vmatpush1.msra.mxu0 0.0
    %3751 = vmatprep.subr.mxu0 0.0
    %3752 = vmatpush1.msra.mxu0 0.0
    %3753 = vmatprep.subr.mxu0 0.0
    %3754 = vmatpush1.msra.mxu0 0.0
    %3755 = vmatprep.subr.mxu0 0.0
    %3756 = vmatpush1.msra.mxu0 0.0
    %3757 = vmatprep.subr.mxu0 0.0
    %3758 = vmatpush1.msra.mxu0 0.0
    %3759 = vmatprep.subr.mxu0 0.0
    %3760 = vmatpush1.msra.mxu0 0.0
    %3761 = vmatprep.subr.mxu0 0.0
    %3762 = vmatpush1.msra.mxu0 0.0
    %3763 = vmatprep.subr.mxu0 0.0
    %3764 = vmatpush1.msra.mxu0 0.0
    %3765 = vmatprep.subr.mxu0 0.0
    %3766 = vmatpush1.msra.mxu0 0.0
    %3767 = vmatprep.subr.mxu0 0.0
    %3768 = vmatpush1.msra.mxu0 0.0
    %3769 = vmatprep.subr.mxu0 0.0
    %3770 = vmatpush1.msra.mxu0 0.0
    %3771 = vmatprep.mubr.f32.mxu0 0.0
    %3772 = vmatmul.mubr.f32.gmra.mrb[0].mxu0 %v3684
    %v3773 = vpop.f32.mrb[0].mxu0
    %v3774 = vadd.f32 %v3680, %v3773
    %v3775 = vpop.f32.mrb[0].mxu0
    %3776 = vmatprep.mubr.f32.mxu0 0.0
    %3777 = vmatmul.mubr.f32.gmra.mrb[0].mxu0 %v3687
    %v3778 = vpop.f32.mrb[0].mxu0
    %v3779 = vadd.f32 %v3680, %v3778
    %v3780 = vpop.f32.mrb[0].mxu0
    %3781 = vmatprep.mubr.f32.mxu0 0.0
    %3782 = vmatmul.mubr.f32.gmra.mrb[0].mxu0 %v3690
    %v3783 = vpop.f32.mrb[0].mxu0
    %v3784 = vadd.f32 %v3680, %v3783
    %v3785 = vpop.f32.mrb[0].mxu0
    %3786 = vmatprep.mubr.f32.mxu0 0.0
    %3787 = vmatmul.mubr.f32.gmra.mrb[0].mxu0 %v3693
    %v3788 = vpop.f32.mrb[0].mxu0
    %v3789 = vadd.f32 %v3680, %v3788
    %v3790 = vpop.f32.mrb[0].mxu0
    %3791 = vmatprep.mubr.f32.mxu0 0.0
    %3792 = vmatmul.mubr.f32.gmra.mrb[0].mxu0 %v3696
    %v3793 = vpop.f32.mrb[0].mxu0
    %v3794 = vadd.f32 %v3680, %v3793
    %v3795 = vpop.f32.mrb[0].mxu0
    %3796 = vmatprep.mubr.f32.mxu0 0.0
    %3797 = vmatmul.mubr.f32.gmra.mrb[0].mxu0 %v3699
    %v3798 = vpop.f32.mrb[0].mxu0
    %v3799 = vadd.f32 %v3680, %v3798
    %v3800 = vpop.f32.mrb[0].mxu0
    %3801 = vmatprep.mubr.f32.mxu0 0.0
    %3802 = vmatmul.mubr.f32.gmra.mrb[0].mxu0 %v3702
    %v3803 = vpop.f32.mrb[0].mxu0
    %v3804 = vadd.f32 %v3680, %v3803
    %v3805 = vpop.f32.mrb[0].mxu0
    %3806 = vmatprep.mubr.f32.mxu0 0.0
    %3807 = vmatmul.mubr.f32.gmra.mrb[0].mxu0 %v3705
    %v3808 = vpop.f32.mrb[0].mxu0
    %v3809 = vadd.f32 %v3680, %v3808
    %v3810 = vpop.f32.mrb[0].mxu0
    %3811 = vdwg.mxu0
    %v3812 = vld [vmem:[#allocation15] sm:$0xff]
    %v3813 = vld [vmem:[#allocation15 + $0x8] sm:$0xff]
    %v3814 = vld [vmem:[#allocation15 + $0x10] sm:$0xff]
    %v3815 = vld [vmem:[#allocation15 + $0x18] sm:$0xff]
    %3816 = vrot.lane.b32.xlu0 %v3663, 96
    %v3817 = vpop.permute.xlu0 %3816
    %3818 = vrot.lane.b32.xlu0 %v3664, 96
    %v3819 = vpop.permute.xlu0 %3818
    %3820 = vrot.lane.b32.xlu0 %v3665, 96
    %v3821 = vpop.permute.xlu0 %3820
    %3822 = vrot.lane.b32.xlu0 %v3666, 96
    %v3823 = vpop.permute.xlu0 %3822
    %3824 = vrot.lane.b32.xlu0 %v3667, 96
    %v3825 = vpop.permute.xlu0 %3824
    %3826 = vrot.lane.b32.xlu0 %v3668, 96
    %v3827 = vpop.permute.xlu0 %3826
    %3828 = vrot.lane.b32.xlu0 %v3669, 96
    %v3829 = vpop.permute.xlu0 %3828
    %3830 = vrot.lane.b32.xlu0 %v3670, 96
    %v3831 = vpop.permute.xlu0 %3830
    %v3832 = vsel %vm3682, %v3817, 0
    %v3834 = vsel %vm3682, %v3819, 0
    %v3836 = vsel %vm3682, %v3821, 0
    %v3838 = vsel %vm3682, %v3823, 0
    %v3840 = vsel %vm3682, %v3825, 0
    %v3842 = vsel %vm3682, %v3827, 0
    %v3844 = vsel %vm3682, %v3829, 0
    %v3846 = vsel %vm3682, %v3831, 0
    %3848 = vmatprep.subr.mxu0 0.0
    %3849 = vmatpush1.msra.mxu0 %v3812
    %3850 = vmatprep.subr.mxu0 0.0
    %3851 = vmatpush1.msra.mxu0 %v3813
    %3852 = vmatprep.subr.mxu0 0.0
    %3853 = vmatpush1.msra.mxu0 %v3814
    %3854 = vmatprep.subr.mxu0 0.0
    %3855 = vmatpush1.msra.mxu0 %v3815
    %3856 = vmatprep.subr.mxu0 0.0
    %3857 = vmatpush1.msra.mxu0 0.0
    %3858 = vmatprep.subr.mxu0 0.0
    %3859 = vmatpush1.msra.mxu0 0.0
    %3860 = vmatprep.subr.mxu0 0.0
    %3861 = vmatpush1.msra.mxu0 0.0
    %3862 = vmatprep.subr.mxu0 0.0
    %3863 = vmatpush1.msra.mxu0 0.0
    %3864 = vmatprep.subr.mxu0 0.0
    %3865 = vmatpush1.msra.mxu0 0.0
    %3866 = vmatprep.subr.mxu0 0.0
    %3867 = vmatpush1.msra.mxu0 0.0
    %3868 = vmatprep.subr.mxu0 0.0
    %3869 = vmatpush1.msra.mxu0 0.0
    %3870 = vmatprep.subr.mxu0 0.0
    %3871 = vmatpush1.msra.mxu0 0.0
    %3872 = vmatprep.subr.mxu0 0.0
    %3873 = vmatpush1.msra.mxu0 0.0
    %3874 = vmatprep.subr.mxu0 0.0
    %3875 = vmatpush1.msra.mxu0 0.0
    %3876 = vmatprep.subr.mxu0 0.0
    %3877 = vmatpush1.msra.mxu0 0.0
    %3878 = vmatprep.subr.mxu0 0.0
    %3879 = vmatpush1.msra.mxu0 0.0
    %3880 = vmatprep.subr.mxu0 0.0
    %3881 = vmatpush1.msra.mxu0 0.0
    %3882 = vmatprep.subr.mxu0 0.0
    %3883 = vmatpush1.msra.mxu0 0.0
    %3884 = vmatprep.subr.mxu0 0.0
    %3885 = vmatpush1.msra.mxu0 0.0
    %3886 = vmatprep.subr.mxu0 0.0
    %3887 = vmatpush1.msra.mxu0 0.0
    %3888 = vmatprep.subr.mxu0 0.0
    %3889 = vmatpush1.msra.mxu0 0.0
    %3890 = vmatprep.subr.mxu0 0.0
    %3891 = vmatpush1.msra.mxu0 0.0
    %3892 = vmatprep.subr.mxu0 0.0
    %3893 = vmatpush1.msra.mxu0 0.0
    %3894 = vmatprep.subr.mxu0 0.0
    %3895 = vmatpush1.msra.mxu0 0.0
    %3896 = vmatprep.subr.mxu0 0.0
    %3897 = vmatpush1.msra.mxu0 0.0
    %3898 = vmatprep.subr.mxu0 0.0
    %3899 = vmatpush1.msra.mxu0 0.0
    %3900 = vmatprep.subr.mxu0 0.0
    %3901 = vmatpush1.msra.mxu0 0.0
    %3902 = vmatprep.subr.mxu0 0.0
    %3903 = vmatpush1.msra.mxu0 0.0
    %3904 = vmatprep.subr.mxu0 0.0
    %3905 = vmatpush1.msra.mxu0 0.0
    %3906 = vmatprep.subr.mxu0 0.0
    %3907 = vmatpush1.msra.mxu0 0.0
    %3908 = vmatprep.subr.mxu0 0.0
    %3909 = vmatpush1.msra.mxu0 0.0
    %3910 = vmatprep.subr.mxu0 0.0
    %3911 = vmatpush1.msra.mxu0 0.0
    %3912 = vmatprep.mubr.f32.mxu0 0.0
    %3913 = vmatmul.mubr.f32.gmra.mrb[0].mxu0 %v3832
    %v3914 = vpop.f32.mrb[0].mxu0
    %v3915 = vadd.f32 0.0, %v3914
    %v3916 = vpop.f32.mrb[0].mxu0
    %3917 = vmatprep.mubr.f32.mxu0 0.0
    %3918 = vmatmul.mubr.f32.gmra.mrb[0].mxu0 %v3834
    %v3919 = vpop.f32.mrb[0].mxu0
    %v3920 = vadd.f32 0.0, %v3919
    %v3921 = vpop.f32.mrb[0].mxu0
    %3922 = vmatprep.mubr.f32.mxu0 0.0
    %3923 = vmatmul.mubr.f32.gmra.mrb[0].mxu0 %v3836
    %v3924 = vpop.f32.mrb[0].mxu0
    %v3925 = vadd.f32 0.0, %v3924
    %v3926 = vpop.f32.mrb[0].mxu0
    %3927 = vmatprep.mubr.f32.mxu0 0.0
    %3928 = vmatmul.mubr.f32.gmra.mrb[0].mxu0 %v3838
    %v3929 = vpop.f32.mrb[0].mxu0
    %v3930 = vadd.f32 0.0, %v3929
    %v3931 = vpop.f32.mrb[0].mxu0
    %3932 = vmatprep.mubr.f32.mxu0 0.0
    %3933 = vmatmul.mubr.f32.gmra.mrb[0].mxu0 %v3840
    %v3934 = vpop.f32.mrb[0].mxu0
    %v3935 = vadd.f32 0.0, %v3934
    %v3936 = vpop.f32.mrb[0].mxu0
    %3937 = vmatprep.mubr.f32.mxu0 0.0
    %3938 = vmatmul.mubr.f32.gmra.mrb[0].mxu0 %v3842
    %v3939 = vpop.f32.mrb[0].mxu0
    %v3940 = vadd.f32 0.0, %v3939
    %v3941 = vpop.f32.mrb[0].mxu0
    %3942 = vmatprep.mubr.f32.mxu0 0.0
    %3943 = vmatmul.mubr.f32.gmra.mrb[0].mxu0 %v3844
    %v3944 = vpop.f32.mrb[0].mxu0
    %v3945 = vadd.f32 0.0, %v3944
    %v3946 = vpop.f32.mrb[0].mxu0
    %3947 = vmatprep.mubr.f32.mxu0 0.0
    %3948 = vmatmul.mubr.f32.gmra.mrb[0].mxu0 %v3846
    %v3949 = vpop.f32.mrb[0].mxu0
    %v3950 = vadd.f32 0.0, %v3949
    %v3951 = vpop.f32.mrb[0].mxu0
    %3952 = vdwg.mxu0
    %v3953 = vadd.f32 %v3774, %v3950
    %3954 = vst [vmem:[%s15] sm:$0xff] %v3953
    %v3955 = vadd.f32 %v3779, %v3945
    %3956 = vst [vmem:[%s15 + $0x8] sm:$0xff] %v3955
    %v3957 = vadd.f32 %v3784, %v3940
    %3958 = vst [vmem:[%s15 + $0x10] sm:$0xff] %v3957
    %v3959 = vadd.f32 %v3789, %v3935
    %3960 = vst [vmem:[%s15 + $0x18] sm:$0xff] %v3959
    %v3961 = vadd.f32 %v3794, %v3930
    %3962 = vst [vmem:[%s15 + $0x20] sm:$0xff] %v3961
    %v3963 = vadd.f32 %v3799, %v3925
    %3964 = vst [vmem:[%s15 + $0x28] sm:$0xff] %v3963
    %v3965 = vadd.f32 %v3804, %v3920
    %3966 = vst [vmem:[%s15 + $0x30] sm:$0xff] %v3965
    %v3967 = vadd.f32 %v3809, %v3915
    %3968 = vst [vmem:[%s15 + $0x38] sm:$0xff] %v3967
    // Predicated region
    $region94: #{forward.1} parent=1 // pred_check
      _
    $region95: #{forward.1} parent=1 // pred_check_branch
      %3970 = sbr.rel (0) target = $region97
    $region96: #{forward.1} parent=1 // pred_region
      _
    $region97: #{forward.1} parent=1 // pred_fallthru
      _
    // Predicated region
    $region98: #{forward.1} parent=1 // pred_check
      _
    $region99: #{forward.1} parent=1 // pred_check_branch
      %3972 = sbr.rel (0) target = $region101
    $region100: #{forward.1} parent=1 // pred_region
      _
    $region101: #{forward.1} parent=1 // pred_fallthru
      _
    %3973 = vsyncpa [#allocation5], 1
    %3974 = vsyncpa [#allocation7], 1
    %3975 = vsyncpa [#allocation10], 1
    %3976 = vsyncpa [#allocation13], 1
    %3977 = vsyncpa [#allocation16], 1

</llo_original>
